<compile_context>
chip_gen: v5e
topology: v5e:2x2
jax: 0.10.0
libtpu: 0.0.40
codegen_flags: <defaults>
</compile_context>

<pallas_src>
import jax
import jax.numpy as jnp
from jax.experimental import pallas as pl
from jax.experimental.pallas import tpu as pltpu

_LANE = 128
_NEG = -1e30  # padding bias for fake logit columns


def _ceil_to(x, m):
    return ((x + m - 1) // m) * m


def _vmem_limit_bytes():
    """~75% of this generation's physical VMEM (v7x: 64 MiB/TC, v5e/v6e: 128 MiB)."""
    try:
        cap = int(pltpu.get_tpu_info().vmem_capacity_bytes)
        return min(cap * 3 // 4, 100 * 1024 * 1024)
    except Exception:
        return 48 * 1024 * 1024  # safe on every generation


def _row_tile(m, max_rows):
    """Sublane-aligned row tile <= max_rows that (when possible) yields >=2 grid
    steps so the 'parallel' axis shards across v7x's two TensorCores."""
    t = min(max_rows, _ceil_to(pl.cdiv(m, 2), 8))
    return m if t >= m else t


# ----------------------------------------------------------------------------
# Kernels 1/2: fused conv(matmul) + bias + ReLU + 2x2 max-pool
# ----------------------------------------------------------------------------
def _conv_relu_pool_kernel(cols_ref, w_ref, b_ref, o_ref):
    # cols_ref: (4, TM, K) bf16 -- im2col patches, one row-block per pool position
    # w_ref: (K, Op) bf16   b_ref: (1, Op) f32   o_ref: (TM, Op) bf16
    w = w_ref[...]
    bias = b_ref[...]
    out = None
    for p in range(4):  # unrolled: 4 MXU dots + VPU maximums; pool stays in-register
        y = jnp.dot(cols_ref[p], w, preferred_element_type=jnp.float32)
        y = jnp.maximum(y + bias, 0.0)                 # bias + ReLU in f32
        out = y if out is None else jnp.maximum(out, y)
    o_ref[...] = out.astype(o_ref.dtype)


def _im2col_pooled(x, k):
    """x: (B,H,W,C) NHWC -> (4, B*Hp*Wp, k*k*C), patches grouped by 2x2 pool position."""
    B, H, W, C = x.shape
    Ho, Wo = H - k + 1, W - k + 1
    Hp, Wp = Ho // 2, Wo // 2
    taps = [x[:, di:di + Ho, dj:dj + Wo, :] for di in range(k) for dj in range(k)]
    p = jnp.stack(taps, axis=3)                      # (B, Ho, Wo, k*k, C)
    p = p[:, :2 * Hp, :2 * Wp]                       # floor-truncate odd sizes (PyTorch pool)
    p = p.reshape(B, Hp, 2, Wp, 2, k * k * C)
    p = p.transpose(2, 4, 0, 1, 3, 5)                # (2, 2, B, Hp, Wp, K)
    return p.reshape(4, B * Hp * Wp, k * k * C), Hp, Wp


def conv_relu_pool(x, w, b, *, max_rows=1024, pad_k=False):
    """maxpool2x2(relu(conv(x, w) + b)) for NHWC x; returns (B, Hp, Wp, Op) bf16
    with Op = O rounded up to 128 lanes (padded channels are exactly 0)."""
    B, H, W, C = x.shape
    O, C2, k, _ = w.shape
    assert C == C2
    cols, Hp, Wp = _im2col_pooled(x.astype(jnp.bfloat16), k)       # bf16 im2col glue
    M, K = cols.shape[1], cols.shape[2]
    Kp = _ceil_to(K, _LANE) if pad_k else K                        # conv1 keeps true K=25
    Op = _ceil_to(O, _LANE)
    if Kp != K:
        cols = jnp.pad(cols, ((0, 0), (0, 0), (0, Kp - K)))
    # Patch order is (di, dj, c); flatten the (O, C, k, k) weight accordingly.
    w2 = w.transpose(2, 3, 1, 0).reshape(K, O)
    w2 = jnp.pad(w2, ((0, Kp - K), (0, Op - O))).astype(jnp.bfloat16)
    b2 = jnp.pad(b.reshape(1, O), ((0, 0), (0, Op - O))).astype(jnp.float32)

    tm = _row_tile(M, max_rows)
    grid = (pl.cdiv(M, tm),)
    out = pl.pallas_call(
        _conv_relu_pool_kernel,
        out_shape=jax.ShapeDtypeStruct((M, Op), jnp.bfloat16),
        grid=grid,
        in_specs=[
            pl.BlockSpec((4, tm, Kp), lambda i: (0, i, 0)),
            pl.BlockSpec((Kp, Op), lambda i: (0, 0)),
            pl.BlockSpec((1, Op), lambda i: (0, 0)),
        ],
        out_specs=pl.BlockSpec((tm, Op), lambda i: (i, 0)),
        compiler_params=pltpu.CompilerParams(
            dimension_semantics=("parallel",),
            vmem_limit_bytes=_vmem_limit_bytes(),
        ),
        cost_estimate=pl.CostEstimate(
            flops=2 * 4 * M * K * O,                               # true (unpadded) dims
            transcendentals=0,
            bytes_accessed=2 * (4 * M * Kp + Kp * Op + M * Op) + 4 * Op,
        ),
    )(cols, w2, b2)
    return out.reshape(B, Hp, Wp, Op)


# ----------------------------------------------------------------------------
# Kernel 3: fused MLP tail  (fc1 + ReLU) -> (fc2@fc3 merged) -> log_softmax
# ----------------------------------------------------------------------------
def _mlp_tail_kernel(x_ref, w1_ref, b1_ref, w23_ref, b23_ref, o_ref):
    h = jnp.dot(x_ref[...], w1_ref[...], preferred_element_type=jnp.float32)
    h = jnp.maximum(h + b1_ref[...], 0.0)                          # fc1 + ReLU (f32)
    z = jnp.dot(h.astype(w23_ref.dtype), w23_ref[...],
                preferred_element_type=jnp.float32) + b23_ref[...]
    m = jnp.max(z, axis=-1, keepdims=True)                         # log_softmax epilogue (f32)
    zc = z - m
    lse = jnp.log(jnp.sum(jnp.exp(zc), axis=-1, keepdims=True))
    o_ref[...] = (zc - lse).astype(o_ref.dtype)


def mlp_tail_logsoftmax(x, w1, b1, w23, b23, *, n_classes, max_rows=512):
    B, K1 = x.shape
    H1 = w1.shape[1]
    Np = w23.shape[1]
    tb = _row_tile(B, max_rows)
    grid = (pl.cdiv(B, tb),)
    return pl.pallas_call(
        _mlp_tail_kernel,
        out_shape=jax.ShapeDtypeStruct((B, Np), jnp.float32),
        grid=grid,
        in_specs=[
            pl.BlockSpec((tb, K1), lambda i: (i, 0)),
            pl.BlockSpec((K1, H1), lambda i: (0, 0)),
            pl.BlockSpec((1, H1), lambda i: (0, 0)),
            pl.BlockSpec((H1, Np), lambda i: (0, 0)),
            pl.BlockSpec((1, Np), lambda i: (0, 0)),
        ],
        out_specs=pl.BlockSpec((tb, Np), lambda i: (i, 0)),
        compiler_params=pltpu.CompilerParams(
            dimension_semantics=("parallel",),
            vmem_limit_bytes=_vmem_limit_bytes(),
        ),
        cost_estimate=pl.CostEstimate(
            flops=2 * B * (K1 * H1 + H1 * n_classes),              # true class count
            transcendentals=B * (Np + 1),
            bytes_accessed=2 * (B * K1 + K1 * H1 + H1 * Np) + 4 * (H1 + Np + B * Np),
        ),
    )(x, w1, b1, w23, b23)


# ----------------------------------------------------------------------------
# Parameters (deterministic synthetic init, same layout as the PyTorch module)
# ----------------------------------------------------------------------------
def init_params(key):
    ks = jax.random.split(key, 10)

    def w_init(k, shape, fan_in):
        return (jax.random.normal(k, shape, jnp.float32) / jnp.sqrt(fan_in)).astype(jnp.float32)

    return {
        "conv1_w": w_init(ks[0], (20, 1, 5, 5), 1 * 5 * 5),
        "conv1_b": w_init(ks[1], (20,), 1 * 5 * 5),
        "conv2_w": w_init(ks[2], (50, 20, 5, 5), 20 * 5 * 5),
        "conv2_b": w_init(ks[3], (50,), 20 * 5 * 5),
        "fc1_w": w_init(ks[4], (4 * 4 * 50, 512), 4 * 4 * 50),  # SparseLinear(800, 512) as dense
        "fc1_b": w_init(ks[5], (512,), 4 * 4 * 50),
        "fc2_w": w_init(ks[6], (512, 16), 512),                  # SparseLinear(512, 16) as dense
        "fc2_b": w_init(ks[7], (16,), 512),
        "fc3_w": w_init(ks[8], (16, 10), 16),
        "fc3_b": w_init(ks[9], (10,), 16),
    }


# ----------------------------------------------------------------------------
# Forward pass (mirrors SparseNet.forward)
# ----------------------------------------------------------------------------
def sparsenet_forward(params, x):
    B = x.shape[0]
    x = jnp.transpose(x, (0, 2, 3, 1)).astype(jnp.bfloat16)              # NCHW -> NHWC bf16

    y = conv_relu_pool(x, params["conv1_w"], params["conv1_b"], pad_k=False)   # (B,12,12,128)
    y = y[..., :params["conv1_w"].shape[0]]                                    # (B,12,12,20)
    y = conv_relu_pool(y, params["conv2_w"], params["conv2_b"], pad_k=True)    # (B,4,4,128); c>=50 are 0
    _, Hp, Wp, Cp = y.shape
    feat = y.reshape(B, Hp * Wp * Cp)                                          # (B,2048) bf16, order (h,w,c_pad)

    # Fold PyTorch's x.view(-1, 800) (c, h, w) flatten order into fc1's weight and
    # zero-pad rows for the padded channels -> no activation transpose/slice needed.
    C2 = params["conv2_w"].shape[0]                                      # 50
    w1 = params["fc1_w"].reshape(C2, Hp, Wp, -1).transpose(1, 2, 0, 3)   # (Hp, Wp, C2, 512)
    w1 = jnp.pad(w1, ((0, 0), (0, 0), (0, Cp - C2), (0, 0))).reshape(Hp * Wp * Cp, -1)
    w1 = w1.astype(jnp.bfloat16)
    b1 = params["fc1_b"].reshape(1, -1).astype(jnp.float32)

    # Collapse fc2 -> fc3 (no nonlinearity between them) into one matmul; pad the
    # class dim to 128 lanes with a huge-negative bias so log_softmax ignores it.
    w23 = params["fc2_w"] @ params["fc3_w"]                              # (512, 10)
    b23 = params["fc2_b"] @ params["fc3_w"] + params["fc3_b"]            # (10,)
    n_cls = w23.shape[1]
    Np = _ceil_to(n_cls, _LANE)
    w23 = jnp.pad(w23, ((0, 0), (0, Np - n_cls))).astype(jnp.bfloat16)
    b23 = jnp.concatenate(
        [b23.astype(jnp.float32), jnp.full((Np - n_cls,), _NEG, jnp.float32)]
    ).reshape(1, Np)

    out = mlp_tail_logsoftmax(feat, w1, b1, w23, b23, n_classes=n_cls)   # (B, 128) f32
    return out[:, :n_cls]                                                # (B, 10)


if __name__ == "__main__":
    key = jax.random.PRNGKey(0)
    pkey, xkey = jax.random.split(key)
    params = init_params(pkey)

    # Input shape implied by the module: 28x28 single-channel images (fc1 expects 4*4*50).
    x = jax.random.normal(xkey, (2, 1, 28, 28), jnp.float32)

    out = jax.jit(sparsenet_forward)(params, x)
    out = jax.block_until_ready(out)

    assert out.shape == (2, 10)
    # log_softmax rows must (approximately) sum to 1 in prob space.
    assert jnp.allclose(jnp.sum(jnp.exp(out), axis=1), 1.0, atol=1e-4)

    print("KERNEL_OK")
</pallas_src>

<mosaic_0001>
module attributes {stable_mosaic.version = 11 : i64} {
  func.func @_conv_relu_pool_kernel(%arg0: i32, %arg1: memref<4x144x25xbf16, #tpu.memory_space<vmem>>, %arg2: memref<25x128xbf16, #tpu.memory_space<vmem>>, %arg3: memref<1x128xf32, #tpu.memory_space<vmem>>, %arg4: memref<144x128xbf16, #tpu.memory_space<vmem>>) attributes {dimension_semantics = [#tpu.dimension_semantics<parallel>], iteration_bounds = array<i64: 2>, scalar_prefetch = 0 : i64, scratch_operands = 0 : i64, tpu.core_type = #tpu.core_type<tc>, window_params = [{transform_indices = @transform_0, window_bounds = array<i64: 4, 144, 25>}, {pipeline_mode = #tpu.pipeline_mode<synchronous>, transform_indices = @transform_1, window_bounds = array<i64: 25, 128>}, {pipeline_mode = #tpu.pipeline_mode<synchronous>, transform_indices = @transform_2, window_bounds = array<i64: 1, 128>}, {transform_indices = @transform_3, window_bounds = array<i64: 144, 128>}]} {
    %c0 = arith.constant 0 : index
    %c0_0 = arith.constant 0 : index
    %0 = vector.load %arg2[%c0, %c0_0] : memref<25x128xbf16, #tpu.memory_space<vmem>>, vector<25x128xbf16>
    %c0_1 = arith.constant 0 : index
    %c0_2 = arith.constant 0 : index
    %1 = vector.load %arg3[%c0_1, %c0_2] : memref<1x128xf32, #tpu.memory_space<vmem>>, vector<1x128xf32>
    %c0_3 = arith.constant 0 : index
    %c0_4 = arith.constant 0 : index
    %c0_5 = arith.constant 0 : index
    %2 = vector.load %arg1[%c0_3, %c0_4, %c0_5] : memref<4x144x25xbf16, #tpu.memory_space<vmem>>, vector<1x144x25xbf16>
    %3 = vector.shape_cast %2 : vector<1x144x25xbf16> to vector<144x25xbf16>
    %cst = arith.constant dense<0.000000e+00> : vector<144x128xf32>
    %4 = tpu.matmul %3, %0, %cst {dimension_numbers = #tpu.dot_dimension_numbers<[1], [0], [0], [1], [0, 0, 1, 1], [], []>} : vector<144x25xbf16>, vector<25x128xbf16>, vector<144x128xf32> -> vector<144x128xf32>
    %5 = vector.broadcast %1 : vector<1x128xf32> to vector<144x128xf32>
    %6 = arith.addf %4, %5 : vector<144x128xf32>
    %cst_6 = arith.constant 0.000000e+00 : f32
    %7 = vector.broadcast %cst_6 : f32 to vector<144x128xf32>
    %8 = arith.maximumf %6, %7 : vector<144x128xf32>
    %c1 = arith.constant 1 : index
    %c0_7 = arith.constant 0 : index
    %c0_8 = arith.constant 0 : index
    %9 = vector.load %arg1[%c1, %c0_7, %c0_8] : memref<4x144x25xbf16, #tpu.memory_space<vmem>>, vector<1x144x25xbf16>
    %10 = vector.shape_cast %9 : vector<1x144x25xbf16> to vector<144x25xbf16>
    %cst_9 = arith.constant dense<0.000000e+00> : vector<144x128xf32>
    %11 = tpu.matmul %10, %0, %cst_9 {dimension_numbers = #tpu.dot_dimension_numbers<[1], [0], [0], [1], [0, 0, 1, 1], [], []>} : vector<144x25xbf16>, vector<25x128xbf16>, vector<144x128xf32> -> vector<144x128xf32>
    %12 = vector.broadcast %1 : vector<1x128xf32> to vector<144x128xf32>
    %13 = arith.addf %11, %12 : vector<144x128xf32>
    %cst_10 = arith.constant 0.000000e+00 : f32
    %14 = vector.broadcast %cst_10 : f32 to vector<144x128xf32>
    %15 = arith.maximumf %13, %14 : vector<144x128xf32>
    %16 = arith.maximumf %8, %15 : vector<144x128xf32>
    %c2 = arith.constant 2 : index
    %c0_11 = arith.constant 0 : index
    %c0_12 = arith.constant 0 : index
    %17 = vector.load %arg1[%c2, %c0_11, %c0_12] : memref<4x144x25xbf16, #tpu.memory_space<vmem>>, vector<1x144x25xbf16>
    %18 = vector.shape_cast %17 : vector<1x144x25xbf16> to vector<144x25xbf16>
    %cst_13 = arith.constant dense<0.000000e+00> : vector<144x128xf32>
    %19 = tpu.matmul %18, %0, %cst_13 {dimension_numbers = #tpu.dot_dimension_numbers<[1], [0], [0], [1], [0, 0, 1, 1], [], []>} : vector<144x25xbf16>, vector<25x128xbf16>, vector<144x128xf32> -> vector<144x128xf32>
    %20 = vector.broadcast %1 : vector<1x128xf32> to vector<144x128xf32>
    %21 = arith.addf %19, %20 : vector<144x128xf32>
    %cst_14 = arith.constant 0.000000e+00 : f32
    %22 = vector.broadcast %cst_14 : f32 to vector<144x128xf32>
    %23 = arith.maximumf %21, %22 : vector<144x128xf32>
    %24 = arith.maximumf %16, %23 : vector<144x128xf32>
    %c3 = arith.constant 3 : index
    %c0_15 = arith.constant 0 : index
    %c0_16 = arith.constant 0 : index
    %25 = vector.load %arg1[%c3, %c0_15, %c0_16] : memref<4x144x25xbf16, #tpu.memory_space<vmem>>, vector<1x144x25xbf16>
    %26 = vector.shape_cast %25 : vector<1x144x25xbf16> to vector<144x25xbf16>
    %cst_17 = arith.constant dense<0.000000e+00> : vector<144x128xf32>
    %27 = tpu.matmul %26, %0, %cst_17 {dimension_numbers = #tpu.dot_dimension_numbers<[1], [0], [0], [1], [0, 0, 1, 1], [], []>} : vector<144x25xbf16>, vector<25x128xbf16>, vector<144x128xf32> -> vector<144x128xf32>
    %28 = vector.broadcast %1 : vector<1x128xf32> to vector<144x128xf32>
    %29 = arith.addf %27, %28 : vector<144x128xf32>
    %cst_18 = arith.constant 0.000000e+00 : f32
    %30 = vector.broadcast %cst_18 : f32 to vector<144x128xf32>
    %31 = arith.maximumf %29, %30 : vector<144x128xf32>
    %32 = arith.maximumf %24, %31 : vector<144x128xf32>
    %33 = arith.truncf %32 : vector<144x128xf32> to vector<144x128xbf16>
    %c0_19 = arith.constant 0 : index
    %c0_20 = arith.constant 0 : index
    %34 = vector.load %arg4[%c0_19, %c0_20] : memref<144x128xbf16, #tpu.memory_space<vmem>>, vector<144x128xbf16>
    tpu.vector_store %arg4[%c0_19, %c0_20], %33 {strides = array<i32>} : memref<144x128xbf16, #tpu.memory_space<vmem>>, vector<144x128xbf16>,
    return
  }
  func.func @transform_0(%arg0: i32) -> (i32, i32, i32) {
    %c0_i32 = arith.constant 0 : i32
    %c0_i32_0 = arith.constant 0 : i32
    %c0_i32_1 = arith.constant 0 : i32
    return %c0_i32, %arg0, %c0_i32_0 : i32, i32, i32
  }
  func.func @transform_1(%arg0: i32) -> (i32, i32) {
    %c0_i32 = arith.constant 0 : i32
    %c0_i32_0 = arith.constant 0 : i32
    %c0_i32_1 = arith.constant 0 : i32
    return %c0_i32, %c0_i32_0 : i32, i32
  }
  func.func @transform_2(%arg0: i32) -> (i32, i32) {
    %c0_i32 = arith.constant 0 : i32
    %c0_i32_0 = arith.constant 0 : i32
    %c0_i32_1 = arith.constant 0 : i32
    return %c0_i32, %c0_i32_0 : i32, i32
  }
  func.func @transform_3(%arg0: i32) -> (i32, i32) {
    %c0_i32 = arith.constant 0 : i32
    %c0_i32_0 = arith.constant 0 : i32
    return %arg0, %c0_i32 : i32, i32
  }
}

module attributes {stable_mosaic.version = 11 : i64} {
  func.func @_conv_relu_pool_kernel(%arg0: i32, %arg1: memref<4x16x512xbf16, #tpu.memory_space<vmem>>, %arg2: memref<512x128xbf16, #tpu.memory_space<vmem>>, %arg3: memref<1x128xf32, #tpu.memory_space<vmem>>, %arg4: memref<16x128xbf16, #tpu.memory_space<vmem>>) attributes {dimension_semantics = [#tpu.dimension_semantics<parallel>], iteration_bounds = array<i64: 2>, scalar_prefetch = 0 : i64, scratch_operands = 0 : i64, tpu.core_type = #tpu.core_type<tc>, window_params = [{transform_indices = @transform_0, window_bounds = array<i64: 4, 16, 512>}, {pipeline_mode = #tpu.pipeline_mode<synchronous>, transform_indices = @transform_1, window_bounds = array<i64: 512, 128>}, {pipeline_mode = #tpu.pipeline_mode<synchronous>, transform_indices = @transform_2, window_bounds = array<i64: 1, 128>}, {transform_indices = @transform_3, window_bounds = array<i64: 16, 128>}]} {
    %c0 = arith.constant 0 : index
    %c0_0 = arith.constant 0 : index
    %0 = vector.load %arg2[%c0, %c0_0] : memref<512x128xbf16, #tpu.memory_space<vmem>>, vector<512x128xbf16>
    %c0_1 = arith.constant 0 : index
    %c0_2 = arith.constant 0 : index
    %1 = vector.load %arg3[%c0_1, %c0_2] : memref<1x128xf32, #tpu.memory_space<vmem>>, vector<1x128xf32>
    %c0_3 = arith.constant 0 : index
    %c0_4 = arith.constant 0 : index
    %c0_5 = arith.constant 0 : index
    %2 = vector.load %arg1[%c0_3, %c0_4, %c0_5] : memref<4x16x512xbf16, #tpu.memory_space<vmem>>, vector<1x16x512xbf16>
    %3 = vector.shape_cast %2 : vector<1x16x512xbf16> to vector<16x512xbf16>
    %cst = arith.constant dense<0.000000e+00> : vector<16x128xf32>
    %4 = tpu.matmul %3, %0, %cst {dimension_numbers = #tpu.dot_dimension_numbers<[1], [0], [0], [1], [0, 0, 1, 1], [], []>} : vector<16x512xbf16>, vector<512x128xbf16>, vector<16x128xf32> -> vector<16x128xf32>
    %5 = vector.broadcast %1 : vector<1x128xf32> to vector<16x128xf32>
    %6 = arith.addf %4, %5 : vector<16x128xf32>
    %cst_6 = arith.constant 0.000000e+00 : f32
    %7 = vector.broadcast %cst_6 : f32 to vector<16x128xf32>
    %8 = arith.maximumf %6, %7 : vector<16x128xf32>
    %c1 = arith.constant 1 : index
    %c0_7 = arith.constant 0 : index
    %c0_8 = arith.constant 0 : index
    %9 = vector.load %arg1[%c1, %c0_7, %c0_8] : memref<4x16x512xbf16, #tpu.memory_space<vmem>>, vector<1x16x512xbf16>
    %10 = vector.shape_cast %9 : vector<1x16x512xbf16> to vector<16x512xbf16>
    %cst_9 = arith.constant dense<0.000000e+00> : vector<16x128xf32>
    %11 = tpu.matmul %10, %0, %cst_9 {dimension_numbers = #tpu.dot_dimension_numbers<[1], [0], [0], [1], [0, 0, 1, 1], [], []>} : vector<16x512xbf16>, vector<512x128xbf16>, vector<16x128xf32> -> vector<16x128xf32>
    %12 = vector.broadcast %1 : vector<1x128xf32> to vector<16x128xf32>
    %13 = arith.addf %11, %12 : vector<16x128xf32>
    %cst_10 = arith.constant 0.000000e+00 : f32
    %14 = vector.broadcast %cst_10 : f32 to vector<16x128xf32>
    %15 = arith.maximumf %13, %14 : vector<16x128xf32>
    %16 = arith.maximumf %8, %15 : vector<16x128xf32>
    %c2 = arith.constant 2 : index
    %c0_11 = arith.constant 0 : index
    %c0_12 = arith.constant 0 : index
    %17 = vector.load %arg1[%c2, %c0_11, %c0_12] : memref<4x16x512xbf16, #tpu.memory_space<vmem>>, vector<1x16x512xbf16>
    %18 = vector.shape_cast %17 : vector<1x16x512xbf16> to vector<16x512xbf16>
    %cst_13 = arith.constant dense<0.000000e+00> : vector<16x128xf32>
    %19 = tpu.matmul %18, %0, %cst_13 {dimension_numbers = #tpu.dot_dimension_numbers<[1], [0], [0], [1], [0, 0, 1, 1], [], []>} : vector<16x512xbf16>, vector<512x128xbf16>, vector<16x128xf32> -> vector<16x128xf32>
    %20 = vector.broadcast %1 : vector<1x128xf32> to vector<16x128xf32>
    %21 = arith.addf %19, %20 : vector<16x128xf32>
    %cst_14 = arith.constant 0.000000e+00 : f32
    %22 = vector.broadcast %cst_14 : f32 to vector<16x128xf32>
    %23 = arith.maximumf %21, %22 : vector<16x128xf32>
    %24 = arith.maximumf %16, %23 : vector<16x128xf32>
    %c3 = arith.constant 3 : index
    %c0_15 = arith.constant 0 : index
    %c0_16 = arith.constant 0 : index
    %25 = vector.load %arg1[%c3, %c0_15, %c0_16] : memref<4x16x512xbf16, #tpu.memory_space<vmem>>, vector<1x16x512xbf16>
    %26 = vector.shape_cast %25 : vector<1x16x512xbf16> to vector<16x512xbf16>
    %cst_17 = arith.constant dense<0.000000e+00> : vector<16x128xf32>
    %27 = tpu.matmul %26, %0, %cst_17 {dimension_numbers = #tpu.dot_dimension_numbers<[1], [0], [0], [1], [0, 0, 1, 1], [], []>} : vector<16x512xbf16>, vector<512x128xbf16>, vector<16x128xf32> -> vector<16x128xf32>
    %28 = vector.broadcast %1 : vector<1x128xf32> to vector<16x128xf32>
    %29 = arith.addf %27, %28 : vector<16x128xf32>
    %cst_18 = arith.constant 0.000000e+00 : f32
    %30 = vector.broadcast %cst_18 : f32 to vector<16x128xf32>
    %31 = arith.maximumf %29, %30 : vector<16x128xf32>
    %32 = arith.maximumf %24, %31 : vector<16x128xf32>
    %33 = arith.truncf %32 : vector<16x128xf32> to vector<16x128xbf16>
    %c0_19 = arith.constant 0 : index
    %c0_20 = arith.constant 0 : index
    %34 = vector.load %arg4[%c0_19, %c0_20] : memref<16x128xbf16, #tpu.memory_space<vmem>>, vector<16x128xbf16>
    tpu.vector_store %arg4[%c0_19, %c0_20], %33 {strides = array<i32>} : memref<16x128xbf16, #tpu.memory_space<vmem>>, vector<16x128xbf16>,
    return
  }
  func.func @transform_0(%arg0: i32) -> (i32, i32, i32) {
    %c0_i32 = arith.constant 0 : i32
    %c0_i32_0 = arith.constant 0 : i32
    %c0_i32_1 = arith.constant 0 : i32
    return %c0_i32, %arg0, %c0_i32_0 : i32, i32, i32
  }
  func.func @transform_1(%arg0: i32) -> (i32, i32) {
    %c0_i32 = arith.constant 0 : i32
    %c0_i32_0 = arith.constant 0 : i32
    %c0_i32_1 = arith.constant 0 : i32
    return %c0_i32, %c0_i32_0 : i32, i32
  }
  func.func @transform_2(%arg0: i32) -> (i32, i32) {
    %c0_i32 = arith.constant 0 : i32
    %c0_i32_0 = arith.constant 0 : i32
    %c0_i32_1 = arith.constant 0 : i32
    return %c0_i32, %c0_i32_0 : i32, i32
  }
  func.func @transform_3(%arg0: i32) -> (i32, i32) {
    %c0_i32 = arith.constant 0 : i32
    %c0_i32_0 = arith.constant 0 : i32
    return %arg0, %c0_i32 : i32, i32
  }
}

module attributes {stable_mosaic.version = 11 : i64} {
  func.func @_mlp_tail_kernel(%arg0: i32, %arg1: memref<2x2048xbf16, #tpu.memory_space<vmem>>, %arg2: memref<2048x512xbf16, #tpu.memory_space<vmem>>, %arg3: memref<1x512xf32, #tpu.memory_space<vmem>>, %arg4: memref<512x128xbf16, #tpu.memory_space<vmem>>, %arg5: memref<1x128xf32, #tpu.memory_space<vmem>>, %arg6: memref<2x128xf32, #tpu.memory_space<vmem>>) attributes {dimension_semantics = [#tpu.dimension_semantics<parallel>], iteration_bounds = array<i64: 1>, scalar_prefetch = 0 : i64, scratch_operands = 0 : i64, tpu.core_type = #tpu.core_type<tc>, window_params = [{transform_indices = @transform_0, window_bounds = array<i64: 2, 2048>}, {pipeline_mode = #tpu.pipeline_mode<synchronous>, transform_indices = @transform_1, window_bounds = array<i64: 2048, 512>}, {pipeline_mode = #tpu.pipeline_mode<synchronous>, transform_indices = @transform_2, window_bounds = array<i64: 1, 512>}, {pipeline_mode = #tpu.pipeline_mode<synchronous>, transform_indices = @transform_3, window_bounds = array<i64: 512, 128>}, {pipeline_mode = #tpu.pipeline_mode<synchronous>, transform_indices = @transform_4, window_bounds = array<i64: 1, 128>}, {transform_indices = @transform_5, window_bounds = array<i64: 2, 128>}]} {
    %c0 = arith.constant 0 : index
    %c0_0 = arith.constant 0 : index
    %0 = vector.load %arg1[%c0, %c0_0] : memref<2x2048xbf16, #tpu.memory_space<vmem>>, vector<2x2048xbf16>
    %c0_1 = arith.constant 0 : index
    %c0_2 = arith.constant 0 : index
    %1 = vector.load %arg2[%c0_1, %c0_2] : memref<2048x512xbf16, #tpu.memory_space<vmem>>, vector<2048x512xbf16>
    %cst = arith.constant dense<0.000000e+00> : vector<2x512xf32>
    %2 = tpu.matmul %0, %1, %cst {dimension_numbers = #tpu.dot_dimension_numbers<[1], [0], [0], [1], [0, 0, 1, 1], [], []>} : vector<2x2048xbf16>, vector<2048x512xbf16>, vector<2x512xf32> -> vector<2x512xf32>
    %c0_3 = arith.constant 0 : index
    %c0_4 = arith.constant 0 : index
    %3 = vector.load %arg3[%c0_3, %c0_4] : memref<1x512xf32, #tpu.memory_space<vmem>>, vector<1x512xf32>
    %4 = vector.broadcast %3 : vector<1x512xf32> to vector<2x512xf32>
    %5 = arith.addf %2, %4 : vector<2x512xf32>
    %cst_5 = arith.constant 0.000000e+00 : f32
    %6 = vector.broadcast %cst_5 : f32 to vector<2x512xf32>
    %7 = arith.maximumf %5, %6 : vector<2x512xf32>
    %8 = arith.truncf %7 : vector<2x512xf32> to vector<2x512xbf16>
    %c0_6 = arith.constant 0 : index
    %c0_7 = arith.constant 0 : index
    %9 = vector.load %arg4[%c0_6, %c0_7] : memref<512x128xbf16, #tpu.memory_space<vmem>>, vector<512x128xbf16>
    %cst_8 = arith.constant dense<0.000000e+00> : vector<2x128xf32>
    %10 = tpu.matmul %8, %9, %cst_8 {dimension_numbers = #tpu.dot_dimension_numbers<[1], [0], [0], [1], [0, 0, 1, 1], [], []>} : vector<2x512xbf16>, vector<512x128xbf16>, vector<2x128xf32> -> vector<2x128xf32>
    %c0_9 = arith.constant 0 : index
    %c0_10 = arith.constant 0 : index
    %11 = vector.load %arg5[%c0_9, %c0_10] : memref<1x128xf32, #tpu.memory_space<vmem>>, vector<1x128xf32>
    %12 = vector.broadcast %11 : vector<1x128xf32> to vector<2x128xf32>
    %13 = arith.addf %10, %12 : vector<2x128xf32>
    %cst_11 = arith.constant dense<0xFF800000> : vector<2xf32>
    %14 = vector.multi_reduction <maximumf>, %13, %cst_11 [1] : vector<2x128xf32> to vector<2xf32>
    %15 = vector.shape_cast %14 : vector<2xf32> to vector<2x1xf32>
    %16 = vector.broadcast %15 : vector<2x1xf32> to vector<2x128xf32>
    %17 = arith.subf %13, %16 : vector<2x128xf32>
    %18 = math.exp %17 : vector<2x128xf32>
    %cst_12 = arith.constant dense<0.000000e+00> : vector<2xf32>
    %19 = vector.multi_reduction <add>, %18, %cst_12 [1] : vector<2x128xf32> to vector<2xf32>
    %20 = vector.shape_cast %19 : vector<2xf32> to vector<2x1xf32>
    %21 = math.log %20 : vector<2x1xf32>
    %22 = vector.broadcast %21 : vector<2x1xf32> to vector<2x128xf32>
    %23 = arith.subf %17, %22 : vector<2x128xf32>
    %c0_13 = arith.constant 0 : index
    %c0_14 = arith.constant 0 : index
    %24 = vector.load %arg6[%c0_13, %c0_14] : memref<2x128xf32, #tpu.memory_space<vmem>>, vector<2x128xf32>
    tpu.vector_store %arg6[%c0_13, %c0_14], %23 {strides = array<i32>} : memref<2x128xf32, #tpu.memory_space<vmem>>, vector<2x128xf32>,
    return
  }
  func.func @transform_0(%arg0: i32) -> (i32, i32) {
    %c0_i32 = arith.constant 0 : i32
    %c0_i32_0 = arith.constant 0 : i32
    return %arg0, %c0_i32 : i32, i32
  }
  func.func @transform_1(%arg0: i32) -> (i32, i32) {
    %c0_i32 = arith.constant 0 : i32
    %c0_i32_0 = arith.constant 0 : i32
    %c0_i32_1 = arith.constant 0 : i32
    return %c0_i32, %c0_i32_0 : i32, i32
  }
  func.func @transform_2(%arg0: i32) -> (i32, i32) {
    %c0_i32 = arith.constant 0 : i32
    %c0_i32_0 = arith.constant 0 : i32
    %c0_i32_1 = arith.constant 0 : i32
    return %c0_i32, %c0_i32_0 : i32, i32
  }
  func.func @transform_3(%arg0: i32) -> (i32, i32) {
    %c0_i32 = arith.constant 0 : i32
    %c0_i32_0 = arith.constant 0 : i32
    %c0_i32_1 = arith.constant 0 : i32
    return %c0_i32, %c0_i32_0 : i32, i32
  }
  func.func @transform_4(%arg0: i32) -> (i32, i32) {
    %c0_i32 = arith.constant 0 : i32
    %c0_i32_0 = arith.constant 0 : i32
    %c0_i32_1 = arith.constant 0 : i32
    return %c0_i32, %c0_i32_0 : i32, i32
  }
  func.func @transform_5(%arg0: i32) -> (i32, i32) {
    %c0_i32 = arith.constant 0 : i32
    %c0_i32_0 = arith.constant 0 : i32
    return %arg0, %c0_i32 : i32, i32
  }
}

</mosaic_0001>

<llo_original>
// kernel: sparsenet_forward.3
$region0: #{sparsenet_forward.3}
  #allocation0 [shape = 'u32[]', space=smem, size = 0x4, offset = 0x4, fixed_abs, tag = 'smem constant byte address 0x4 - core index']
  #allocation1 [shape = 'u32[72,128]{1,0:T(1,128)}', space=vmem, size = 0x9000, scoped, tag = 'internal scratch']
  %s0 = inlined_call_operand.vmem [shape: bf16[4,288,25], index: 0, kind: input, shape index: {}]
  %s1 = inlined_call_operand.vmem [shape: bf16[25,128], index: 1, kind: input, shape index: {}]
  %s2 = inlined_call_operand.vmem [shape: f32[1,128], index: 2, kind: input, shape index: {}]
  %s3 = inlined_call_operand.vmem [shape: bf16[288,128], index: 3, kind: output, shape index: {}]
  %s4 = sld [smem:[#allocation0]]
  $region86: #{sparsenet_forward.3} parent=0
    _
  %s6 = ssub.s32 1, %s4
  %s7 = scalar_select 0, %s6, %s4
  $region1: #{sparsenet_forward.3} parent=0
    #allocation2 [shape = 'u8[294912]{0}', space=vmem, size = 0x48000, scoped, tag = 'input window, operand 0']
    loop: start=0, step=1, limit=4
    $region2: #{sparsenet_forward.3} parent=1 // loop_pre_header
      _
    $region3: #{sparsenet_forward.3} parent=1 // loop_header
      %s9 = sphi 0, %s13
      %p10 = scmp.ge.s32.totalorder %s9, 4
      %s19 = sphi 0, %s21
      %s22 = sphi 0, %s19
      %s23 = sphi 0, %s22
      %s39 = sphi 0, %s23
      %s43 = sphi 0, %s43
      %s45 = sphi 0, %s43
      %s46 = sphi 0, %s45
      %s60 = sphi 0, %s46
      %s64 = sphi 0, %s64
      %s66 = sphi 0, %s64
      %s67 = sphi 0, %s66
      %s81 = sphi 0, %s67
      %s87 = sphi 0, %s89
      %s90 = sphi 0, %s87
      %s91 = sphi 0, %s90
      %s107 = sphi 0, %s91
    $region4: #{sparsenet_forward.3} parent=1 // loop_header_branch
      %12 = sbr.rel (%p10) target = $region8
    $region5: #{sparsenet_forward.3} parent=1 // loop_body
      %s14 = ssub.s32 %s9, 1
      %s15 = ssub.s32 %s9, 2
      %s16 = sadd.s32 %s9, 1
      %s17 = ssub.s32 %s9, %s16
      %p18 = scmp.eq.s32.totalorder %s17, 0
      %s20 = sadd.s32 %s19, 1
      %s21 = scalar_select %p18, %s19, %s20
      %p24 = pneg %p18
      %p25 = scmp.eq.s32.totalorder %s9, 1
      %p26 = por %p24, %p25
      %p27 = scmp.ne.s32.totalorder %s19, %s22
      %p28 = scmp.eq.s32.totalorder %s9, 0
      %p29 = por %p27, %p28
      %p30 = scmp.ne.s32.totalorder %s19, %s22
      %p31 = scmp.eq.s32.totalorder %s14, 1
      %p32 = por %p30, %p31
      %p33 = scmp.ne.s32.totalorder %s22, %s23
      %p34 = scmp.eq.s32.totalorder %s14, 0
      %p35 = por %p33, %p34
      %p36 = scmp.ne.s32.totalorder %s22, %s23
      %p37 = scmp.eq.s32.totalorder %s15, 1
      %p38 = por %p36, %p37
      %p40 = scmp.ne.s32.totalorder %s23, %s39
      %p41 = scmp.eq.s32.totalorder %s15, 0
      %p42 = por %p40, %p41
      %s44 = sadd.s32 %s43, 1
      %p47 = scmp.eq.s32.totalorder %s9, 1
      %p48 = scmp.ne.s32.totalorder %s43, %s45
      %p49 = scmp.eq.s32.totalorder %s9, 0
      %p50 = por %p48, %p49
      %p51 = scmp.ne.s32.totalorder %s43, %s45
      %p52 = scmp.eq.s32.totalorder %s14, 1
      %p53 = por %p51, %p52
      %p54 = scmp.ne.s32.totalorder %s45, %s46
      %p55 = scmp.eq.s32.totalorder %s14, 0
      %p56 = por %p54, %p55
      %p57 = scmp.ne.s32.totalorder %s45, %s46
      %p58 = scmp.eq.s32.totalorder %s15, 1
      %p59 = por %p57, %p58
      %p61 = scmp.ne.s32.totalorder %s46, %s60
      %p62 = scmp.eq.s32.totalorder %s15, 0
      %p63 = por %p61, %p62
      %s65 = sadd.s32 %s64, 1
      %p68 = scmp.eq.s32.totalorder %s9, 1
      %p69 = scmp.ne.s32.totalorder %s64, %s66
      %p70 = scmp.eq.s32.totalorder %s9, 0
      %p71 = por %p69, %p70
      %p72 = scmp.ne.s32.totalorder %s64, %s66
      %p73 = scmp.eq.s32.totalorder %s14, 1
      %p74 = por %p72, %p73
      %p75 = scmp.ne.s32.totalorder %s66, %s67
      %p76 = scmp.eq.s32.totalorder %s14, 0
      %p77 = por %p75, %p76
      %p78 = scmp.ne.s32.totalorder %s66, %s67
      %p79 = scmp.eq.s32.totalorder %s15, 1
      %p80 = por %p78, %p79
      %p82 = scmp.ne.s32.totalorder %s67, %s81
      %p83 = scmp.eq.s32.totalorder %s15, 0
      %p84 = por %p82, %p83
      %s85 = ssub.s32 %s9, %s16
      %p86 = scmp.eq.s32.totalorder %s85, 0
      %s88 = sadd.s32 %s87, 1
      %s89 = scalar_select %p86, %s87, %s88
      %p92 = pneg %p86
      %p93 = scmp.eq.s32.totalorder %s9, 1
      %p94 = por %p92, %p93
      %p95 = scmp.ne.s32.totalorder %s87, %s90
      %p96 = scmp.eq.s32.totalorder %s9, 0
      %p97 = por %p95, %p96
      %p98 = scmp.ne.s32.totalorder %s87, %s90
      %p99 = scmp.eq.s32.totalorder %s14, 1
      %p100 = por %p98, %p99
      %p101 = scmp.ne.s32.totalorder %s90, %s91
      %p102 = scmp.eq.s32.totalorder %s14, 0
      %p103 = por %p101, %p102
      %p104 = scmp.ne.s32.totalorder %s90, %s91
      %p105 = scmp.eq.s32.totalorder %s15, 1
      %p106 = por %p104, %p105
      %p108 = scmp.ne.s32.totalorder %s91, %s107
      %p109 = scmp.eq.s32.totalorder %s15, 0
      %p110 = por %p108, %p109
      %p111 = scmp.le.s32.totalorder 1, %s9
      %p112 = scmp.lt.s32.totalorder %s9, 3
      %p113 = pnand %p111, %p112
      %p114 = pneg %p113
      // Predicated region
      $region9: #{sparsenet_forward.3} parent=5 // pred_check
        _
      $region10: #{sparsenet_forward.3} parent=5 // pred_check_branch
        %116 = sbr.rel (%p113) target = $region12
      $region11: #{sparsenet_forward.3} parent=5 // pred_region
        %s117 = ssub.s32 %s9, 1
        // Predicated region
        $region13: #{sparsenet_forward.3} parent=11 // pred_check
          %p118 = pneg %p56
        $region14: #{sparsenet_forward.3} parent=11 // pred_check_branch
          %120 = sbr.rel (%p118) target = $region16
        $region15: #{sparsenet_forward.3} parent=11 // pred_region
          _
        $region16: #{sparsenet_forward.3} parent=11 // pred_fallthru
          _
        // Predicated region
        $region17: #{sparsenet_forward.3} parent=11 // pred_check
          %p121 = pneg %p77
        $region18: #{sparsenet_forward.3} parent=11 // pred_check_branch
          %123 = sbr.rel (%p121) target = $region20
        $region19: #{sparsenet_forward.3} parent=11 // pred_region
          _
        $region20: #{sparsenet_forward.3} parent=11 // pred_fallthru
          _
      $region12: #{sparsenet_forward.3} parent=5 // pred_fallthru
        _
      %p124 = scmp.lt.s32.totalorder %s9, 2
      // Predicated region
      $region21: #{sparsenet_forward.3} parent=5 // pred_check
        %p125 = pneg %p124
      $region22: #{sparsenet_forward.3} parent=5 // pred_check_branch
        %127 = sbr.rel (%p125) target = $region24
      $region23: #{sparsenet_forward.3} parent=5 // pred_region
        // Predicated region
        $region25: #{sparsenet_forward.3} parent=23 // pred_check
          %p128 = pneg %p29
        $region26: #{sparsenet_forward.3} parent=23 // pred_check_branch
          %130 = sbr.rel (%p128) target = $region28
        $region27: #{sparsenet_forward.3} parent=23 // pred_region
          %s131 = sand.u32 %s19, 1
          %s132 = sand.u32 %s19, 1
          %s133 = smul.addr %s132, 288
          %s134 = scalar_lea.vmem [#allocation2], %s133
          %s135 = smul.u32 18, %s9
          %s136 = smul.addr %s135, 4
          %s137 = scalar_lea.vmem %s0, %s136
          // Predicated region
          $region29: #{sparsenet_forward.3} parent=27 // pred_check
            _
          $region30: #{sparsenet_forward.3} parent=27 // pred_check_branch
            %139 = sbr.rel (0) target = $region32
          $region31: #{sparsenet_forward.3} parent=27 // pred_region
            // Predicated region
            $region33: #{sparsenet_forward.3} parent=31 // pred_check
              _
            $region34: #{sparsenet_forward.3} parent=31 // pred_check_branch
              %141 = sbr.rel target = $region36
            $region35: #{sparsenet_forward.3} parent=31 // pred_region
              // Predicated region
              $region48: #{sparsenet_forward.3} parent=35 // pred_check
                _
              $region49: #{sparsenet_forward.3} parent=35 // pred_check_branch
                %299 = sbr.rel (0) target = $region51
              $region50: #{sparsenet_forward.3} parent=35 // pred_region
                loop: start=0, step=1, limit=1
                $region52: #{sparsenet_forward.3} parent=50 // loop_pre_header
                  _
                $region53: #{sparsenet_forward.3} parent=50 // loop_header
                  %s301 = sphi 0, %s305
                  %p302 = scmp.ge.s32.totalorder %s301, 1
                  %s306 = sphi %s137, %s137
                  %s307 = sphi %s134, %s134
                $region54: #{sparsenet_forward.3} parent=50 // loop_header_branch
                  %304 = sbr.rel (%p302) target = $region58
                $region55: #{sparsenet_forward.3} parent=50 // loop_body
                  _
                $region56: #{sparsenet_forward.3} parent=50 // loop_footer
                  %s305 = sadd.s32 1, %s301
                $region57: #{sparsenet_forward.3} parent=50 // loop_footer_branch
                  %300 = sbr.rel target = $region53
                $region58: #{sparsenet_forward.3} parent=50 // loop_exit
                  _
                %s309 = ssub.s32 16, 1
                loop: start=0, step=1, limit=1
                $region59: #{sparsenet_forward.3} parent=50 // loop_pre_header
                  _
                $region60: #{sparsenet_forward.3} parent=50 // loop_header
                  %s311 = sphi 0, %s315
                  %p312 = scmp.ge.s32.totalorder %s311, 1
                  %s316 = sphi %s137, %s137
                  %s317 = sphi %s134, %s134
                $region61: #{sparsenet_forward.3} parent=50 // loop_header_branch
                  %314 = sbr.rel (%p312) target = $region65
                $region62: #{sparsenet_forward.3} parent=50 // loop_body
                  %v318 = vld [vmem:[%s316] sm:%s309]
                  %319 = vst [vmem:[%s317] sm:%s309] %v318
                  %v320 = vld [vmem:[%s316 + $0x4] sm:%s309]
                  %321 = vst [vmem:[%s317 + $0x4] sm:%s309] %v320
                  %v322 = vld [vmem:[%s316 + $0x8] sm:%s309]
                  %323 = vst [vmem:[%s317 + $0x8] sm:%s309] %v322
                  %v324 = vld [vmem:[%s316 + $0xc] sm:%s309]
                  %325 = vst [vmem:[%s317 + $0xc] sm:%s309] %v324
                  %v326 = vld [vmem:[%s316 + $0x10] sm:%s309]
                  %327 = vst [vmem:[%s317 + $0x10] sm:%s309] %v326
                  %v328 = vld [vmem:[%s316 + $0x14] sm:%s309]
                  %329 = vst [vmem:[%s317 + $0x14] sm:%s309] %v328
                  %v330 = vld [vmem:[%s316 + $0x18] sm:%s309]
                  %331 = vst [vmem:[%s317 + $0x18] sm:%s309] %v330
                  %v332 = vld [vmem:[%s316 + $0x1c] sm:%s309]
                  %333 = vst [vmem:[%s317 + $0x1c] sm:%s309] %v332
                  %v334 = vld [vmem:[%s316 + $0x20] sm:%s309]
                  %335 = vst [vmem:[%s317 + $0x20] sm:%s309] %v334
                  %v336 = vld [vmem:[%s316 + $0x24] sm:%s309]
                  %337 = vst [vmem:[%s317 + $0x24] sm:%s309] %v336
                  %v338 = vld [vmem:[%s316 + $0x28] sm:%s309]
                  %339 = vst [vmem:[%s317 + $0x28] sm:%s309] %v338
                  %v340 = vld [vmem:[%s316 + $0x2c] sm:%s309]
                  %341 = vst [vmem:[%s317 + $0x2c] sm:%s309] %v340
                  %v342 = vld [vmem:[%s316 + $0x30] sm:%s309]
                  %343 = vst [vmem:[%s317 + $0x30] sm:%s309] %v342
                  %v344 = vld [vmem:[%s316 + $0x34] sm:%s309]
                  %345 = vst [vmem:[%s317 + $0x34] sm:%s309] %v344
                  %v346 = vld [vmem:[%s316 + $0x38] sm:%s309]
                  %347 = vst [vmem:[%s317 + $0x38] sm:%s309] %v346
                  %v348 = vld [vmem:[%s316 + $0x3c] sm:%s309]
                  %349 = vst [vmem:[%s317 + $0x3c] sm:%s309] %v348
                  %v350 = vld [vmem:[%s316 + $0x40] sm:%s309]
                  %351 = vst [vmem:[%s317 + $0x40] sm:%s309] %v350
                  %v352 = vld [vmem:[%s316 + $0x44] sm:%s309]
                  %353 = vst [vmem:[%s317 + $0x44] sm:%s309] %v352
                  %v354 = vld [vmem:[%s316 + $0x90] sm:%s309]
                  %355 = vst [vmem:[%s317 + $0x48] sm:%s309] %v354
                  %v356 = vld [vmem:[%s316 + $0x94] sm:%s309]
                  %357 = vst [vmem:[%s317 + $0x4c] sm:%s309] %v356
                  %v358 = vld [vmem:[%s316 + $0x98] sm:%s309]
                  %359 = vst [vmem:[%s317 + $0x50] sm:%s309] %v358
                  %v360 = vld [vmem:[%s316 + $0x9c] sm:%s309]
                  %361 = vst [vmem:[%s317 + $0x54] sm:%s309] %v360
                  %v362 = vld [vmem:[%s316 + $0xa0] sm:%s309]
                  %363 = vst [vmem:[%s317 + $0x58] sm:%s309] %v362
                  %v364 = vld [vmem:[%s316 + $0xa4] sm:%s309]
                  %365 = vst [vmem:[%s317 + $0x5c] sm:%s309] %v364
                  %v366 = vld [vmem:[%s316 + $0xa8] sm:%s309]
                  %367 = vst [vmem:[%s317 + $0x60] sm:%s309] %v366
                  %v368 = vld [vmem:[%s316 + $0xac] sm:%s309]
                  %369 = vst [vmem:[%s317 + $0x64] sm:%s309] %v368
                  %v370 = vld [vmem:[%s316 + $0xb0] sm:%s309]
                  %371 = vst [vmem:[%s317 + $0x68] sm:%s309] %v370
                  %v372 = vld [vmem:[%s316 + $0xb4] sm:%s309]
                  %373 = vst [vmem:[%s317 + $0x6c] sm:%s309] %v372
                  %v374 = vld [vmem:[%s316 + $0xb8] sm:%s309]
                  %375 = vst [vmem:[%s317 + $0x70] sm:%s309] %v374
                  %v376 = vld [vmem:[%s316 + $0xbc] sm:%s309]
                  %377 = vst [vmem:[%s317 + $0x74] sm:%s309] %v376
                  %v378 = vld [vmem:[%s316 + $0xc0] sm:%s309]
                  %379 = vst [vmem:[%s317 + $0x78] sm:%s309] %v378
                  %v380 = vld [vmem:[%s316 + $0xc4] sm:%s309]
                  %381 = vst [vmem:[%s317 + $0x7c] sm:%s309] %v380
                  %v382 = vld [vmem:[%s316 + $0xc8] sm:%s309]
                  %383 = vst [vmem:[%s317 + $0x80] sm:%s309] %v382
                  %v384 = vld [vmem:[%s316 + $0xcc] sm:%s309]
                  %385 = vst [vmem:[%s317 + $0x84] sm:%s309] %v384
                  %v386 = vld [vmem:[%s316 + $0xd0] sm:%s309]
                  %387 = vst [vmem:[%s317 + $0x88] sm:%s309] %v386
                  %v388 = vld [vmem:[%s316 + $0xd4] sm:%s309]
                  %389 = vst [vmem:[%s317 + $0x8c] sm:%s309] %v388
                  %v390 = vld [vmem:[%s316 + $0x120] sm:%s309]
                  %391 = vst [vmem:[%s317 + $0x90] sm:%s309] %v390
                  %v392 = vld [vmem:[%s316 + $0x124] sm:%s309]
                  %393 = vst [vmem:[%s317 + $0x94] sm:%s309] %v392
                  %v394 = vld [vmem:[%s316 + $0x128] sm:%s309]
                  %395 = vst [vmem:[%s317 + $0x98] sm:%s309] %v394
                  %v396 = vld [vmem:[%s316 + $0x12c] sm:%s309]
                  %397 = vst [vmem:[%s317 + $0x9c] sm:%s309] %v396
                  %v398 = vld [vmem:[%s316 + $0x130] sm:%s309]
                  %399 = vst [vmem:[%s317 + $0xa0] sm:%s309] %v398
                  %v400 = vld [vmem:[%s316 + $0x134] sm:%s309]
                  %401 = vst [vmem:[%s317 + $0xa4] sm:%s309] %v400
                  %v402 = vld [vmem:[%s316 + $0x138] sm:%s309]
                  %403 = vst [vmem:[%s317 + $0xa8] sm:%s309] %v402
                  %v404 = vld [vmem:[%s316 + $0x13c] sm:%s309]
                  %405 = vst [vmem:[%s317 + $0xac] sm:%s309] %v404
                  %v406 = vld [vmem:[%s316 + $0x140] sm:%s309]
                  %407 = vst [vmem:[%s317 + $0xb0] sm:%s309] %v406
                  %v408 = vld [vmem:[%s316 + $0x144] sm:%s309]
                  %409 = vst [vmem:[%s317 + $0xb4] sm:%s309] %v408
                  %v410 = vld [vmem:[%s316 + $0x148] sm:%s309]
                  %411 = vst [vmem:[%s317 + $0xb8] sm:%s309] %v410
                  %v412 = vld [vmem:[%s316 + $0x14c] sm:%s309]
                  %413 = vst [vmem:[%s317 + $0xbc] sm:%s309] %v412
                  %v414 = vld [vmem:[%s316 + $0x150] sm:%s309]
                  %415 = vst [vmem:[%s317 + $0xc0] sm:%s309] %v414
                  %v416 = vld [vmem:[%s316 + $0x154] sm:%s309]
                  %417 = vst [vmem:[%s317 + $0xc4] sm:%s309] %v416
                  %v418 = vld [vmem:[%s316 + $0x158] sm:%s309]
                  %419 = vst [vmem:[%s317 + $0xc8] sm:%s309] %v418
                  %v420 = vld [vmem:[%s316 + $0x15c] sm:%s309]
                  %421 = vst [vmem:[%s317 + $0xcc] sm:%s309] %v420
                  %v422 = vld [vmem:[%s316 + $0x160] sm:%s309]
                  %423 = vst [vmem:[%s317 + $0xd0] sm:%s309] %v422
                  %v424 = vld [vmem:[%s316 + $0x164] sm:%s309]
                  %425 = vst [vmem:[%s317 + $0xd4] sm:%s309] %v424
                  %v426 = vld [vmem:[%s316 + $0x1b0] sm:%s309]
                  %427 = vst [vmem:[%s317 + $0xd8] sm:%s309] %v426
                  %v428 = vld [vmem:[%s316 + $0x1b4] sm:%s309]
                  %429 = vst [vmem:[%s317 + $0xdc] sm:%s309] %v428
                  %v430 = vld [vmem:[%s316 + $0x1b8] sm:%s309]
                  %431 = vst [vmem:[%s317 + $0xe0] sm:%s309] %v430
                  %v432 = vld [vmem:[%s316 + $0x1bc] sm:%s309]
                  %433 = vst [vmem:[%s317 + $0xe4] sm:%s309] %v432
                  %v434 = vld [vmem:[%s316 + $0x1c0] sm:%s309]
                  %435 = vst [vmem:[%s317 + $0xe8] sm:%s309] %v434
                  %v436 = vld [vmem:[%s316 + $0x1c4] sm:%s309]
                  %437 = vst [vmem:[%s317 + $0xec] sm:%s309] %v436
                  %v438 = vld [vmem:[%s316 + $0x1c8] sm:%s309]
                  %439 = vst [vmem:[%s317 + $0xf0] sm:%s309] %v438
                  %v440 = vld [vmem:[%s316 + $0x1cc] sm:%s309]
                  %441 = vst [vmem:[%s317 + $0xf4] sm:%s309] %v440
                  %v442 = vld [vmem:[%s316 + $0x1d0] sm:%s309]
                  %443 = vst [vmem:[%s317 + $0xf8] sm:%s309] %v442
                  %v444 = vld [vmem:[%s316 + $0x1d4] sm:%s309]
                  %445 = vst [vmem:[%s317 + $0xfc] sm:%s309] %v444
                  %v446 = vld [vmem:[%s316 + $0x1d8] sm:%s309]
                  %447 = vst [vmem:[%s317 + $0x100] sm:%s309] %v446
                  %v448 = vld [vmem:[%s316 + $0x1dc] sm:%s309]
                  %449 = vst [vmem:[%s317 + $0x104] sm:%s309] %v448
                  %v450 = vld [vmem:[%s316 + $0x1e0] sm:%s309]
                  %451 = vst [vmem:[%s317 + $0x108] sm:%s309] %v450
                  %v452 = vld [vmem:[%s316 + $0x1e4] sm:%s309]
                  %453 = vst [vmem:[%s317 + $0x10c] sm:%s309] %v452
                  %v454 = vld [vmem:[%s316 + $0x1e8] sm:%s309]
                  %455 = vst [vmem:[%s317 + $0x110] sm:%s309] %v454
                  %v456 = vld [vmem:[%s316 + $0x1ec] sm:%s309]
                  %457 = vst [vmem:[%s317 + $0x114] sm:%s309] %v456
                  %v458 = vld [vmem:[%s316 + $0x1f0] sm:%s309]
                  %459 = vst [vmem:[%s317 + $0x118] sm:%s309] %v458
                  %v460 = vld [vmem:[%s316 + $0x1f4] sm:%s309]
                  %461 = vst [vmem:[%s317 + $0x11c] sm:%s309] %v460
                $region63: #{sparsenet_forward.3} parent=50 // loop_footer
                  %s315 = sadd.s32 1, %s311
                $region64: #{sparsenet_forward.3} parent=50 // loop_footer_branch
                  %310 = sbr.rel target = $region60
                $region65: #{sparsenet_forward.3} parent=50 // loop_exit
                  _
              $region51: #{sparsenet_forward.3} parent=35 // pred_fallthru
                _
            $region36: #{sparsenet_forward.3} parent=31 // pred_fallthru
              _
            // Predicated region
            $region37: #{sparsenet_forward.3} parent=31 // pred_check
              _
            $region38: #{sparsenet_forward.3} parent=31 // pred_check_branch
              %143 = sbr.rel (0) target = $region40
            $region39: #{sparsenet_forward.3} parent=31 // pred_region
              %s145 = ssub.s32 16, 1
              loop: start=0, step=1, limit=1
              $region41: #{sparsenet_forward.3} parent=39 // loop_pre_header
                _
              $region42: #{sparsenet_forward.3} parent=39 // loop_header
                %s147 = sphi 0, %s151
                %p148 = scmp.ge.s32.totalorder %s147, 1
                %s152 = sphi %s137, %s137
                %s153 = sphi %s134, %s134
              $region43: #{sparsenet_forward.3} parent=39 // loop_header_branch
                %150 = sbr.rel (%p148) target = $region47
              $region44: #{sparsenet_forward.3} parent=39 // loop_body
                %v154 = vld [vmem:[%s152] sm:%s145]
                %155 = vst [vmem:[%s153] sm:%s145] %v154
                %v156 = vld [vmem:[%s152 + $0x4] sm:%s145]
                %157 = vst [vmem:[%s153 + $0x4] sm:%s145] %v156
                %v158 = vld [vmem:[%s152 + $0x8] sm:%s145]
                %159 = vst [vmem:[%s153 + $0x8] sm:%s145] %v158
                %v160 = vld [vmem:[%s152 + $0xc] sm:%s145]
                %161 = vst [vmem:[%s153 + $0xc] sm:%s145] %v160
                %v162 = vld [vmem:[%s152 + $0x10] sm:%s145]
                %163 = vst [vmem:[%s153 + $0x10] sm:%s145] %v162
                %v164 = vld [vmem:[%s152 + $0x14] sm:%s145]
                %165 = vst [vmem:[%s153 + $0x14] sm:%s145] %v164
                %v166 = vld [vmem:[%s152 + $0x18] sm:%s145]
                %167 = vst [vmem:[%s153 + $0x18] sm:%s145] %v166
                %v168 = vld [vmem:[%s152 + $0x1c] sm:%s145]
                %169 = vst [vmem:[%s153 + $0x1c] sm:%s145] %v168
                %v170 = vld [vmem:[%s152 + $0x20] sm:%s145]
                %171 = vst [vmem:[%s153 + $0x20] sm:%s145] %v170
                %v172 = vld [vmem:[%s152 + $0x24] sm:%s145]
                %173 = vst [vmem:[%s153 + $0x24] sm:%s145] %v172
                %v174 = vld [vmem:[%s152 + $0x28] sm:%s145]
                %175 = vst [vmem:[%s153 + $0x28] sm:%s145] %v174
                %v176 = vld [vmem:[%s152 + $0x2c] sm:%s145]
                %177 = vst [vmem:[%s153 + $0x2c] sm:%s145] %v176
                %v178 = vld [vmem:[%s152 + $0x30] sm:%s145]
                %179 = vst [vmem:[%s153 + $0x30] sm:%s145] %v178
                %v180 = vld [vmem:[%s152 + $0x34] sm:%s145]
                %181 = vst [vmem:[%s153 + $0x34] sm:%s145] %v180
                %v182 = vld [vmem:[%s152 + $0x38] sm:%s145]
                %183 = vst [vmem:[%s153 + $0x38] sm:%s145] %v182
                %v184 = vld [vmem:[%s152 + $0x3c] sm:%s145]
                %185 = vst [vmem:[%s153 + $0x3c] sm:%s145] %v184
                %v186 = vld [vmem:[%s152 + $0x40] sm:%s145]
                %187 = vst [vmem:[%s153 + $0x40] sm:%s145] %v186
                %v188 = vld [vmem:[%s152 + $0x44] sm:%s145]
                %189 = vst [vmem:[%s153 + $0x44] sm:%s145] %v188
                %v190 = vld [vmem:[%s152 + $0x90] sm:%s145]
                %191 = vst [vmem:[%s153 + $0x48] sm:%s145] %v190
                %v192 = vld [vmem:[%s152 + $0x94] sm:%s145]
                %193 = vst [vmem:[%s153 + $0x4c] sm:%s145] %v192
                %v194 = vld [vmem:[%s152 + $0x98] sm:%s145]
                %195 = vst [vmem:[%s153 + $0x50] sm:%s145] %v194
                %v196 = vld [vmem:[%s152 + $0x9c] sm:%s145]
                %197 = vst [vmem:[%s153 + $0x54] sm:%s145] %v196
                %v198 = vld [vmem:[%s152 + $0xa0] sm:%s145]
                %199 = vst [vmem:[%s153 + $0x58] sm:%s145] %v198
                %v200 = vld [vmem:[%s152 + $0xa4] sm:%s145]
                %201 = vst [vmem:[%s153 + $0x5c] sm:%s145] %v200
                %v202 = vld [vmem:[%s152 + $0xa8] sm:%s145]
                %203 = vst [vmem:[%s153 + $0x60] sm:%s145] %v202
                %v204 = vld [vmem:[%s152 + $0xac] sm:%s145]
                %205 = vst [vmem:[%s153 + $0x64] sm:%s145] %v204
                %v206 = vld [vmem:[%s152 + $0xb0] sm:%s145]
                %207 = vst [vmem:[%s153 + $0x68] sm:%s145] %v206
                %v208 = vld [vmem:[%s152 + $0xb4] sm:%s145]
                %209 = vst [vmem:[%s153 + $0x6c] sm:%s145] %v208
                %v210 = vld [vmem:[%s152 + $0xb8] sm:%s145]
                %211 = vst [vmem:[%s153 + $0x70] sm:%s145] %v210
                %v212 = vld [vmem:[%s152 + $0xbc] sm:%s145]
                %213 = vst [vmem:[%s153 + $0x74] sm:%s145] %v212
                %v214 = vld [vmem:[%s152 + $0xc0] sm:%s145]
                %215 = vst [vmem:[%s153 + $0x78] sm:%s145] %v214
                %v216 = vld [vmem:[%s152 + $0xc4] sm:%s145]
                %217 = vst [vmem:[%s153 + $0x7c] sm:%s145] %v216
                %v218 = vld [vmem:[%s152 + $0xc8] sm:%s145]
                %219 = vst [vmem:[%s153 + $0x80] sm:%s145] %v218
                %v220 = vld [vmem:[%s152 + $0xcc] sm:%s145]
                %221 = vst [vmem:[%s153 + $0x84] sm:%s145] %v220
                %v222 = vld [vmem:[%s152 + $0xd0] sm:%s145]
                %223 = vst [vmem:[%s153 + $0x88] sm:%s145] %v222
                %v224 = vld [vmem:[%s152 + $0xd4] sm:%s145]
                %225 = vst [vmem:[%s153 + $0x8c] sm:%s145] %v224
                %v226 = vld [vmem:[%s152 + $0x120] sm:%s145]
                %227 = vst [vmem:[%s153 + $0x90] sm:%s145] %v226
                %v228 = vld [vmem:[%s152 + $0x124] sm:%s145]
                %229 = vst [vmem:[%s153 + $0x94] sm:%s145] %v228
                %v230 = vld [vmem:[%s152 + $0x128] sm:%s145]
                %231 = vst [vmem:[%s153 + $0x98] sm:%s145] %v230
                %v232 = vld [vmem:[%s152 + $0x12c] sm:%s145]
                %233 = vst [vmem:[%s153 + $0x9c] sm:%s145] %v232
                %v234 = vld [vmem:[%s152 + $0x130] sm:%s145]
                %235 = vst [vmem:[%s153 + $0xa0] sm:%s145] %v234
                %v236 = vld [vmem:[%s152 + $0x134] sm:%s145]
                %237 = vst [vmem:[%s153 + $0xa4] sm:%s145] %v236
                %v238 = vld [vmem:[%s152 + $0x138] sm:%s145]
                %239 = vst [vmem:[%s153 + $0xa8] sm:%s145] %v238
                %v240 = vld [vmem:[%s152 + $0x13c] sm:%s145]
                %241 = vst [vmem:[%s153 + $0xac] sm:%s145] %v240
                %v242 = vld [vmem:[%s152 + $0x140] sm:%s145]
                %243 = vst [vmem:[%s153 + $0xb0] sm:%s145] %v242
                %v244 = vld [vmem:[%s152 + $0x144] sm:%s145]
                %245 = vst [vmem:[%s153 + $0xb4] sm:%s145] %v244
                %v246 = vld [vmem:[%s152 + $0x148] sm:%s145]
                %247 = vst [vmem:[%s153 + $0xb8] sm:%s145] %v246
                %v248 = vld [vmem:[%s152 + $0x14c] sm:%s145]
                %249 = vst [vmem:[%s153 + $0xbc] sm:%s145] %v248
                %v250 = vld [vmem:[%s152 + $0x150] sm:%s145]
                %251 = vst [vmem:[%s153 + $0xc0] sm:%s145] %v250
                %v252 = vld [vmem:[%s152 + $0x154] sm:%s145]
                %253 = vst [vmem:[%s153 + $0xc4] sm:%s145] %v252
                %v254 = vld [vmem:[%s152 + $0x158] sm:%s145]
                %255 = vst [vmem:[%s153 + $0xc8] sm:%s145] %v254
                %v256 = vld [vmem:[%s152 + $0x15c] sm:%s145]
                %257 = vst [vmem:[%s153 + $0xcc] sm:%s145] %v256
                %v258 = vld [vmem:[%s152 + $0x160] sm:%s145]
                %259 = vst [vmem:[%s153 + $0xd0] sm:%s145] %v258
                %v260 = vld [vmem:[%s152 + $0x164] sm:%s145]
                %261 = vst [vmem:[%s153 + $0xd4] sm:%s145] %v260
                %v262 = vld [vmem:[%s152 + $0x1b0] sm:%s145]
                %263 = vst [vmem:[%s153 + $0xd8] sm:%s145] %v262
                %v264 = vld [vmem:[%s152 + $0x1b4] sm:%s145]
                %265 = vst [vmem:[%s153 + $0xdc] sm:%s145] %v264
                %v266 = vld [vmem:[%s152 + $0x1b8] sm:%s145]
                %267 = vst [vmem:[%s153 + $0xe0] sm:%s145] %v266
                %v268 = vld [vmem:[%s152 + $0x1bc] sm:%s145]
                %269 = vst [vmem:[%s153 + $0xe4] sm:%s145] %v268
                %v270 = vld [vmem:[%s152 + $0x1c0] sm:%s145]
                %271 = vst [vmem:[%s153 + $0xe8] sm:%s145] %v270
                %v272 = vld [vmem:[%s152 + $0x1c4] sm:%s145]
                %273 = vst [vmem:[%s153 + $0xec] sm:%s145] %v272
                %v274 = vld [vmem:[%s152 + $0x1c8] sm:%s145]
                %275 = vst [vmem:[%s153 + $0xf0] sm:%s145] %v274
                %v276 = vld [vmem:[%s152 + $0x1cc] sm:%s145]
                %277 = vst [vmem:[%s153 + $0xf4] sm:%s145] %v276
                %v278 = vld [vmem:[%s152 + $0x1d0] sm:%s145]
                %279 = vst [vmem:[%s153 + $0xf8] sm:%s145] %v278
                %v280 = vld [vmem:[%s152 + $0x1d4] sm:%s145]
                %281 = vst [vmem:[%s153 + $0xfc] sm:%s145] %v280
                %v282 = vld [vmem:[%s152 + $0x1d8] sm:%s145]
                %283 = vst [vmem:[%s153 + $0x100] sm:%s145] %v282
                %v284 = vld [vmem:[%s152 + $0x1dc] sm:%s145]
                %285 = vst [vmem:[%s153 + $0x104] sm:%s145] %v284
                %v286 = vld [vmem:[%s152 + $0x1e0] sm:%s145]
                %287 = vst [vmem:[%s153 + $0x108] sm:%s145] %v286
                %v288 = vld [vmem:[%s152 + $0x1e4] sm:%s145]
                %289 = vst [vmem:[%s153 + $0x10c] sm:%s145] %v288
                %v290 = vld [vmem:[%s152 + $0x1e8] sm:%s145]
                %291 = vst [vmem:[%s153 + $0x110] sm:%s145] %v290
                %v292 = vld [vmem:[%s152 + $0x1ec] sm:%s145]
                %293 = vst [vmem:[%s153 + $0x114] sm:%s145] %v292
                %v294 = vld [vmem:[%s152 + $0x1f0] sm:%s145]
                %295 = vst [vmem:[%s153 + $0x118] sm:%s145] %v294
                %v296 = vld [vmem:[%s152 + $0x1f4] sm:%s145]
                %297 = vst [vmem:[%s153 + $0x11c] sm:%s145] %v296
              $region45: #{sparsenet_forward.3} parent=39 // loop_footer
                %s151 = sadd.s32 1, %s147
              $region46: #{sparsenet_forward.3} parent=39 // loop_footer_branch
                %146 = sbr.rel target = $region42
              $region47: #{sparsenet_forward.3} parent=39 // loop_exit
                _
            $region40: #{sparsenet_forward.3} parent=31 // pred_fallthru
              _
          $region32: #{sparsenet_forward.3} parent=27 // pred_fallthru
            _
          %462 = vnop
        $region28: #{sparsenet_forward.3} parent=23 // pred_fallthru
          _
      $region24: #{sparsenet_forward.3} parent=5 // pred_fallthru
        _
      %p463 = scmp.le.s32.totalorder 1, %s9
      %p464 = scmp.lt.s32.totalorder %s9, 3
      %p465 = pnand %p463, %p464
      %p466 = pneg %p465
      // Predicated region
      $region66: #{sparsenet_forward.3} parent=5 // pred_check
        _
      $region67: #{sparsenet_forward.3} parent=5 // pred_check_branch
        %468 = sbr.rel (%p465) target = $region69
      $region68: #{sparsenet_forward.3} parent=5 // pred_region
        %s469 = ssub.s32 %s9, 1
        %s470 = sand.u32 %s22, 1
        %s471 = sand.u32 %s22, 1
        %s472 = smul.addr %s471, 288
        %s473 = scalar_lea.vmem [#allocation2], %s472
        // Predicated region
        $region70: #{sparsenet_forward.3} parent=68 // pred_check
          %p474 = pneg %p35
        $region71: #{sparsenet_forward.3} parent=68 // pred_check_branch
          %476 = sbr.rel (%p474) target = $region73
        $region72: #{sparsenet_forward.3} parent=68 // pred_region
          _
        $region73: #{sparsenet_forward.3} parent=68 // pred_fallthru
          _
        %s477 = sand.u32 %s22, 1
        %s478 = sand.u32 %s22, 1
        %s479 = smul.addr %s478, 288
        %s480 = scalar_lea.vmem [#allocation2], %s479
        %p481 = pneg %p35
        %p482 = pneg %p32
        %p483 = pneg %p56
        %p484 = pneg %p53
        %p485 = pneg %p77
        %p486 = pneg %p74
        %p487 = pneg %p103
        %p488 = pneg %p100
        %s489 = smul.u32 18, %s14
        %p490 = scmp.lt.s32.totalorder %s489, 35
        %s491 = scalar_select %p490, %s489, 35
        %s492 = smul.addr %s491, 4
        %s493 = scalar_lea.vmem %s3, %s492
        %s494 = smul.u32 18, %s14
        %s495 = smul.u32 18, %s14
        %p496 = scmp.lt.s32.totalorder %s495, 35
        %s497 = scalar_select %p496, %s495, 35
        %s498 = smul.addr %s497, 4
        %s499 = scalar_lea.vmem %s3, %s498
        %s500 = smul.u32 18, %s14
        %v502 = vld [vmem:[%s1] sm:$0xf]
        %v503 = vld [vmem:[%s1 + $0x4] sm:$0xf]
        %v504 = vld [vmem:[%s1 + $0x8] sm:$0xf]
        %v505 = vld [vmem:[%s1 + $0xc] sm:$0x1]
        %v506 = vld [vmem:[%s2] sm:$0x1]
        %v507 = vld [vmem:[%s473] sm:$0xf]
        %v508 = vld [vmem:[%s473 + $0x4] sm:$0xf]
        %v509 = vld [vmem:[%s473 + $0x8] sm:$0xf]
        %v510 = vld [vmem:[%s473 + $0xc] sm:$0xf]
        %v511 = vld [vmem:[%s473 + $0x10] sm:$0xf]
        %v512 = vld [vmem:[%s473 + $0x14] sm:$0xf]
        %v513 = vld [vmem:[%s473 + $0x18] sm:$0xf]
        %v514 = vld [vmem:[%s473 + $0x1c] sm:$0xf]
        %v515 = vld [vmem:[%s473 + $0x20] sm:$0xf]
        %v516 = vld [vmem:[%s473 + $0x24] sm:$0xf]
        %v517 = vld [vmem:[%s473 + $0x28] sm:$0xf]
        %v518 = vld [vmem:[%s473 + $0x2c] sm:$0xf]
        %v519 = vld [vmem:[%s473 + $0x30] sm:$0xf]
        %v520 = vld [vmem:[%s473 + $0x34] sm:$0xf]
        %v521 = vld [vmem:[%s473 + $0x38] sm:$0xf]
        %v522 = vld [vmem:[%s473 + $0x3c] sm:$0xf]
        %v523 = vld [vmem:[%s473 + $0x40] sm:$0xf]
        %v524 = vld [vmem:[%s473 + $0x44] sm:$0xf]
        %v526 = vperm.slane %v506, 0
        %v546 = vunpack.c.l.b16 %v507
        %v547 = vunpack.c.l.b16 %v508
        %v548 = vunpack.c.l.b16 %v509
        %v549 = vunpack.c.l.b16 %v510
        %v550 = vunpack.c.l.b16 %v511
        %v551 = vunpack.c.l.b16 %v512
        %v552 = vunpack.c.l.b16 %v513
        %v553 = vunpack.c.l.b16 %v514
        %v554 = vunpack.c.l.b16 %v515
        %v555 = vunpack.c.l.b16 %v516
        %v556 = vunpack.c.l.b16 %v517
        %v557 = vunpack.c.l.b16 %v518
        %v558 = vunpack.c.l.b16 %v519
        %v559 = vunpack.c.l.b16 %v520
        %v560 = vunpack.c.l.b16 %v521
        %v561 = vunpack.c.l.b16 %v522
        %v562 = vunpack.c.l.b16 %v523
        %v563 = vunpack.c.l.b16 %v524
        %v564 = vpack.c.b16 %v547, %v546
        %v565 = vpack.c.b16 %v549, %v548
        %v566 = vpack.c.b16 %v551, %v550
        %v567 = vpack.c.b16 %v553, %v552
        %v568 = vpack.c.b16 %v555, %v554
        %v569 = vpack.c.b16 %v557, %v556
        %v570 = vpack.c.b16 %v559, %v558
        %v571 = vpack.c.b16 %v561, %v560
        %v572 = vpack.c.b16 %v563, %v562
        %v577 = vunpack.c.l.b16 %v502
        %v578 = vunpack.c.l.b16 %v503
        %v579 = vunpack.c.l.b16 %v504
        %v580 = vunpack.c.l.b16 %v505
        %v581 = vpack.c.b16 %v578, %v577
        %v582 = vpack.c.b16 %v580, %v579
        %vm584 = vcmask 203776
        %v586 = vsel %vm584, %v564, 0
        %v589 = vsel %vm584, %v565, 0
        %v592 = vsel %vm584, %v566, 0
        %v595 = vsel %vm584, %v567, 0
        %v598 = vsel %vm584, %v568, 0
        %v601 = vsel %vm584, %v569, 0
        %v604 = vsel %vm584, %v570, 0
        %v607 = vsel %vm584, %v571, 0
        %v610 = vsel %vm584, %v572, 0
        %vm612 = vcmask 1043456
        %vm613 = vcmask 1044480
        %v614 = vsel %vm612, 4294967295, 65535
        %v615 = vsel %vm613, %v614, 0
        %v617 = vand.u32 %v582, %v615
        %619 = vmatpush.bf16.msra.mxu0 0
        %620 = vmatpush.bf16.msra.mxu0 0
        %621 = vmatpush.bf16.msra.mxu0 0
        %622 = vmatpush.bf16.msra.mxu0 0
        %623 = vmatpush.bf16.msra.mxu0 0
        %624 = vmatpush.bf16.msra.mxu0 0
        %625 = vmatpush.bf16.msra.mxu0 %v617
        %626 = vmatpush.bf16.msra.mxu0 %v581
        %627 = vmatmul.bf16.gmra.mxu0 %v586
        %v628 = vpop.f32.mrf.mxu0
        %v629 = vadd.f32 %v526, %v628
        %v630 = vpop.f32.mrf.mxu0
        %v631 = vadd.f32 %v526, %v630
        %632 = vmatmul.bf16.gmra.mxu0 %v589
        %v633 = vpop.f32.mrf.mxu0
        %v634 = vadd.f32 %v526, %v633
        %v635 = vpop.f32.mrf.mxu0
        %v636 = vadd.f32 %v526, %v635
        %637 = vmatmul.bf16.gmra.mxu0 %v592
        %v638 = vpop.f32.mrf.mxu0
        %v639 = vadd.f32 %v526, %v638
        %v640 = vpop.f32.mrf.mxu0
        %v641 = vadd.f32 %v526, %v640
        %642 = vmatmul.bf16.gmra.mxu0 %v595
        %v643 = vpop.f32.mrf.mxu0
        %v644 = vadd.f32 %v526, %v643
        %v645 = vpop.f32.mrf.mxu0
        %v646 = vadd.f32 %v526, %v645
        %647 = vmatmul.bf16.gmra.mxu0 %v598
        %v648 = vpop.f32.mrf.mxu0
        %v649 = vadd.f32 %v526, %v648
        %v650 = vpop.f32.mrf.mxu0
        %v651 = vadd.f32 %v526, %v650
        %652 = vmatmul.bf16.gmra.mxu0 %v601
        %v653 = vpop.f32.mrf.mxu0
        %v654 = vadd.f32 %v526, %v653
        %v655 = vpop.f32.mrf.mxu0
        %v656 = vadd.f32 %v526, %v655
        %657 = vmatmul.bf16.gmra.mxu0 %v604
        %v658 = vpop.f32.mrf.mxu0
        %v659 = vadd.f32 %v526, %v658
        %v660 = vpop.f32.mrf.mxu0
        %v661 = vadd.f32 %v526, %v660
        %662 = vmatmul.bf16.gmra.mxu0 %v607
        %v663 = vpop.f32.mrf.mxu0
        %v664 = vadd.f32 %v526, %v663
        %v665 = vpop.f32.mrf.mxu0
        %v666 = vadd.f32 %v526, %v665
        %667 = vmatmul.bf16.gmra.mxu0 %v610
        %v668 = vpop.f32.mrf.mxu0
        %v669 = vadd.f32 %v526, %v668
        %v670 = vpop.f32.mrf.mxu0
        %v671 = vadd.f32 %v526, %v670
        %672 = vdwg.mxu0
        %v673 = vmax.f32 %v629, 0.0
        %v674 = vmax.f32 %v631, 0.0
        %v675 = vmax.f32 %v634, 0.0
        %v676 = vmax.f32 %v636, 0.0
        %v677 = vmax.f32 %v639, 0.0
        %v678 = vmax.f32 %v641, 0.0
        %v679 = vmax.f32 %v644, 0.0
        %v680 = vmax.f32 %v646, 0.0
        %v681 = vmax.f32 %v649, 0.0
        %v682 = vmax.f32 %v651, 0.0
        %v683 = vmax.f32 %v654, 0.0
        %v684 = vmax.f32 %v656, 0.0
        %v685 = vmax.f32 %v659, 0.0
        %v686 = vmax.f32 %v661, 0.0
        %v687 = vmax.f32 %v664, 0.0
        %v688 = vmax.f32 %v666, 0.0
        %v689 = vmax.f32 %v669, 0.0
        %v690 = vmax.f32 %v671, 0.0
        %s691 = scalar_lea.vmem %s473, 72 [#allocation2]
        %v692 = vld [vmem:[%s691] sm:$0xf]
        %v693 = vld [vmem:[%s691 + $0x4] sm:$0xf]
        %v694 = vld [vmem:[%s691 + $0x8] sm:$0xf]
        %v695 = vld [vmem:[%s691 + $0xc] sm:$0xf]
        %v696 = vld [vmem:[%s691 + $0x10] sm:$0xf]
        %v697 = vld [vmem:[%s691 + $0x14] sm:$0xf]
        %v698 = vld [vmem:[%s691 + $0x18] sm:$0xf]
        %v699 = vld [vmem:[%s691 + $0x1c] sm:$0xf]
        %v700 = vld [vmem:[%s691 + $0x20] sm:$0xf]
        %v701 = vld [vmem:[%s691 + $0x24] sm:$0xf]
        %v702 = vld [vmem:[%s691 + $0x28] sm:$0xf]
        %v703 = vld [vmem:[%s691 + $0x2c] sm:$0xf]
        %v704 = vld [vmem:[%s691 + $0x30] sm:$0xf]
        %v705 = vld [vmem:[%s691 + $0x34] sm:$0xf]
        %v706 = vld [vmem:[%s691 + $0x38] sm:$0xf]
        %v707 = vld [vmem:[%s691 + $0x3c] sm:$0xf]
        %v708 = vld [vmem:[%s691 + $0x40] sm:$0xf]
        %v709 = vld [vmem:[%s691 + $0x44] sm:$0xf]
        %v728 = vunpack.c.l.b16 %v692
        %v729 = vunpack.c.l.b16 %v693
        %v730 = vunpack.c.l.b16 %v694
        %v731 = vunpack.c.l.b16 %v695
        %v732 = vunpack.c.l.b16 %v696
        %v733 = vunpack.c.l.b16 %v697
        %v734 = vunpack.c.l.b16 %v698
        %v735 = vunpack.c.l.b16 %v699
        %v736 = vunpack.c.l.b16 %v700
        %v737 = vunpack.c.l.b16 %v701
        %v738 = vunpack.c.l.b16 %v702
        %v739 = vunpack.c.l.b16 %v703
        %v740 = vunpack.c.l.b16 %v704
        %v741 = vunpack.c.l.b16 %v705
        %v742 = vunpack.c.l.b16 %v706
        %v743 = vunpack.c.l.b16 %v707
        %v744 = vunpack.c.l.b16 %v708
        %v745 = vunpack.c.l.b16 %v709
        %v746 = vpack.c.b16 %v729, %v728
        %v747 = vpack.c.b16 %v731, %v730
        %v748 = vpack.c.b16 %v733, %v732
        %v749 = vpack.c.b16 %v735, %v734
        %v750 = vpack.c.b16 %v737, %v736
        %v751 = vpack.c.b16 %v739, %v738
        %v752 = vpack.c.b16 %v741, %v740
        %v753 = vpack.c.b16 %v743, %v742
        %v754 = vpack.c.b16 %v745, %v744
        %v756 = vsel %vm584, %v746, 0
        %v759 = vsel %vm584, %v747, 0
        %v762 = vsel %vm584, %v748, 0
        %v765 = vsel %vm584, %v749, 0
        %v768 = vsel %vm584, %v750, 0
        %v771 = vsel %vm584, %v751, 0
        %v774 = vsel %vm584, %v752, 0
        %v777 = vsel %vm584, %v753, 0
        %v780 = vsel %vm584, %v754, 0
        %782 = vmatpush.bf16.msra.mxu0 0
        %783 = vmatpush.bf16.msra.mxu0 0
        %784 = vmatpush.bf16.msra.mxu0 0
        %785 = vmatpush.bf16.msra.mxu0 0
        %786 = vmatpush.bf16.msra.mxu0 0
        %787 = vmatpush.bf16.msra.mxu0 0
        %788 = vmatpush.bf16.msra.mxu0 %v617
        %789 = vmatpush.bf16.msra.mxu0 %v581
        %790 = vmatmul.bf16.gmra.mxu0 %v756
        %v791 = vpop.f32.mrf.mxu0
        %v792 = vadd.f32 %v526, %v791
        %v793 = vpop.f32.mrf.mxu0
        %v794 = vadd.f32 %v526, %v793
        %795 = vmatmul.bf16.gmra.mxu0 %v759
        %v796 = vpop.f32.mrf.mxu0
        %v797 = vadd.f32 %v526, %v796
        %v798 = vpop.f32.mrf.mxu0
        %v799 = vadd.f32 %v526, %v798
        %800 = vmatmul.bf16.gmra.mxu0 %v762
        %v801 = vpop.f32.mrf.mxu0
        %v802 = vadd.f32 %v526, %v801
        %v803 = vpop.f32.mrf.mxu0
        %v804 = vadd.f32 %v526, %v803
        %805 = vmatmul.bf16.gmra.mxu0 %v765
        %v806 = vpop.f32.mrf.mxu0
        %v807 = vadd.f32 %v526, %v806
        %v808 = vpop.f32.mrf.mxu0
        %v809 = vadd.f32 %v526, %v808
        %810 = vmatmul.bf16.gmra.mxu0 %v768
        %v811 = vpop.f32.mrf.mxu0
        %v812 = vadd.f32 %v526, %v811
        %v813 = vpop.f32.mrf.mxu0
        %v814 = vadd.f32 %v526, %v813
        %815 = vmatmul.bf16.gmra.mxu0 %v771
        %v816 = vpop.f32.mrf.mxu0
        %v817 = vadd.f32 %v526, %v816
        %v818 = vpop.f32.mrf.mxu0
        %v819 = vadd.f32 %v526, %v818
        %820 = vmatmul.bf16.gmra.mxu0 %v774
        %v821 = vpop.f32.mrf.mxu0
        %v822 = vadd.f32 %v526, %v821
        %v823 = vpop.f32.mrf.mxu0
        %v824 = vadd.f32 %v526, %v823
        %825 = vmatmul.bf16.gmra.mxu0 %v777
        %v826 = vpop.f32.mrf.mxu0
        %v827 = vadd.f32 %v526, %v826
        %v828 = vpop.f32.mrf.mxu0
        %v829 = vadd.f32 %v526, %v828
        %830 = vmatmul.bf16.gmra.mxu0 %v780
        %v831 = vpop.f32.mrf.mxu0
        %v832 = vadd.f32 %v526, %v831
        %v833 = vpop.f32.mrf.mxu0
        %v834 = vadd.f32 %v526, %v833
        %835 = vdwg.mxu0
        %v836 = vmax.f32 %v792, 0.0
        %v837 = vmax.f32 %v794, 0.0
        %v838 = vmax.f32 %v797, 0.0
        %v839 = vmax.f32 %v799, 0.0
        %v840 = vmax.f32 %v802, 0.0
        %v841 = vmax.f32 %v804, 0.0
        %v842 = vmax.f32 %v807, 0.0
        %v843 = vmax.f32 %v809, 0.0
        %v844 = vmax.f32 %v812, 0.0
        %v845 = vmax.f32 %v814, 0.0
        %v846 = vmax.f32 %v817, 0.0
        %v847 = vmax.f32 %v819, 0.0
        %v848 = vmax.f32 %v822, 0.0
        %v849 = vmax.f32 %v824, 0.0
        %v850 = vmax.f32 %v827, 0.0
        %v851 = vmax.f32 %v829, 0.0
        %v852 = vmax.f32 %v832, 0.0
        %v853 = vmax.f32 %v834, 0.0
        %v854 = vmax.f32 %v673, %v836
        %v855 = vmax.f32 %v674, %v837
        %v856 = vmax.f32 %v675, %v838
        %v857 = vmax.f32 %v676, %v839
        %v858 = vmax.f32 %v677, %v840
        %v859 = vmax.f32 %v678, %v841
        %v860 = vmax.f32 %v679, %v842
        %v861 = vmax.f32 %v680, %v843
        %v862 = vmax.f32 %v681, %v844
        %v863 = vmax.f32 %v682, %v845
        %v864 = vmax.f32 %v683, %v846
        %v865 = vmax.f32 %v684, %v847
        %v866 = vmax.f32 %v685, %v848
        %v867 = vmax.f32 %v686, %v849
        %v868 = vmax.f32 %v687, %v850
        %v869 = vmax.f32 %v688, %v851
        %v870 = vmax.f32 %v689, %v852
        %v871 = vmax.f32 %v690, %v853
        %s872 = scalar_lea.vmem %s473, 144 [#allocation2]
        %v873 = vld [vmem:[%s872] sm:$0xf]
        %v874 = vld [vmem:[%s872 + $0x4] sm:$0xf]
        %v875 = vld [vmem:[%s872 + $0x8] sm:$0xf]
        %v876 = vld [vmem:[%s872 + $0xc] sm:$0xf]
        %v877 = vld [vmem:[%s872 + $0x10] sm:$0xf]
        %v878 = vld [vmem:[%s872 + $0x14] sm:$0xf]
        %v879 = vld [vmem:[%s872 + $0x18] sm:$0xf]
        %v880 = vld [vmem:[%s872 + $0x1c] sm:$0xf]
        %v881 = vld [vmem:[%s872 + $0x20] sm:$0xf]
        %v882 = vld [vmem:[%s872 + $0x24] sm:$0xf]
        %v883 = vld [vmem:[%s872 + $0x28] sm:$0xf]
        %v884 = vld [vmem:[%s872 + $0x2c] sm:$0xf]
        %v885 = vld [vmem:[%s872 + $0x30] sm:$0xf]
        %v886 = vld [vmem:[%s872 + $0x34] sm:$0xf]
        %v887 = vld [vmem:[%s872 + $0x38] sm:$0xf]
        %v888 = vld [vmem:[%s872 + $0x3c] sm:$0xf]
        %v889 = vld [vmem:[%s872 + $0x40] sm:$0xf]
        %v890 = vld [vmem:[%s872 + $0x44] sm:$0xf]
        %v909 = vunpack.c.l.b16 %v873
        %v910 = vunpack.c.l.b16 %v874
        %v911 = vunpack.c.l.b16 %v875
        %v912 = vunpack.c.l.b16 %v876
        %v913 = vunpack.c.l.b16 %v877
        %v914 = vunpack.c.l.b16 %v878
        %v915 = vunpack.c.l.b16 %v879
        %v916 = vunpack.c.l.b16 %v880
        %v917 = vunpack.c.l.b16 %v881
        %v918 = vunpack.c.l.b16 %v882
        %v919 = vunpack.c.l.b16 %v883
        %v920 = vunpack.c.l.b16 %v884
        %v921 = vunpack.c.l.b16 %v885
        %v922 = vunpack.c.l.b16 %v886
        %v923 = vunpack.c.l.b16 %v887
        %v924 = vunpack.c.l.b16 %v888
        %v925 = vunpack.c.l.b16 %v889
        %v926 = vunpack.c.l.b16 %v890
        %v927 = vpack.c.b16 %v910, %v909
        %v928 = vpack.c.b16 %v912, %v911
        %v929 = vpack.c.b16 %v914, %v913
        %v930 = vpack.c.b16 %v916, %v915
        %v931 = vpack.c.b16 %v918, %v917
        %v932 = vpack.c.b16 %v920, %v919
        %v933 = vpack.c.b16 %v922, %v921
        %v934 = vpack.c.b16 %v924, %v923
        %v935 = vpack.c.b16 %v926, %v925
        %v937 = vsel %vm584, %v927, 0
        %v940 = vsel %vm584, %v928, 0
        %v943 = vsel %vm584, %v929, 0
        %v946 = vsel %vm584, %v930, 0
        %v949 = vsel %vm584, %v931, 0
        %v952 = vsel %vm584, %v932, 0
        %v955 = vsel %vm584, %v933, 0
        %v958 = vsel %vm584, %v934, 0
        %v961 = vsel %vm584, %v935, 0
        %963 = vmatpush.bf16.msra.mxu0 0
        %964 = vmatpush.bf16.msra.mxu0 0
        %965 = vmatpush.bf16.msra.mxu0 0
        %966 = vmatpush.bf16.msra.mxu0 0
        %967 = vmatpush.bf16.msra.mxu0 0
        %968 = vmatpush.bf16.msra.mxu0 0
        %969 = vmatpush.bf16.msra.mxu0 %v617
        %970 = vmatpush.bf16.msra.mxu0 %v581
        %971 = vmatmul.bf16.gmra.mxu0 %v937
        %v972 = vpop.f32.mrf.mxu0
        %v973 = vadd.f32 %v526, %v972
        %v974 = vpop.f32.mrf.mxu0
        %v975 = vadd.f32 %v526, %v974
        %976 = vmatmul.bf16.gmra.mxu0 %v940
        %v977 = vpop.f32.mrf.mxu0
        %v978 = vadd.f32 %v526, %v977
        %v979 = vpop.f32.mrf.mxu0
        %v980 = vadd.f32 %v526, %v979
        %981 = vmatmul.bf16.gmra.mxu0 %v943
        %v982 = vpop.f32.mrf.mxu0
        %v983 = vadd.f32 %v526, %v982
        %v984 = vpop.f32.mrf.mxu0
        %v985 = vadd.f32 %v526, %v984
        %986 = vmatmul.bf16.gmra.mxu0 %v946
        %v987 = vpop.f32.mrf.mxu0
        %v988 = vadd.f32 %v526, %v987
        %v989 = vpop.f32.mrf.mxu0
        %v990 = vadd.f32 %v526, %v989
        %991 = vmatmul.bf16.gmra.mxu0 %v949
        %v992 = vpop.f32.mrf.mxu0
        %v993 = vadd.f32 %v526, %v992
        %v994 = vpop.f32.mrf.mxu0
        %v995 = vadd.f32 %v526, %v994
        %996 = vmatmul.bf16.gmra.mxu0 %v952
        %v997 = vpop.f32.mrf.mxu0
        %v998 = vadd.f32 %v526, %v997
        %v999 = vpop.f32.mrf.mxu0
        %v1000 = vadd.f32 %v526, %v999
        %1001 = vmatmul.bf16.gmra.mxu0 %v955
        %v1002 = vpop.f32.mrf.mxu0
        %v1003 = vadd.f32 %v526, %v1002
        %v1004 = vpop.f32.mrf.mxu0
        %v1005 = vadd.f32 %v526, %v1004
        %1006 = vmatmul.bf16.gmra.mxu0 %v958
        %v1007 = vpop.f32.mrf.mxu0
        %v1008 = vadd.f32 %v526, %v1007
        %v1009 = vpop.f32.mrf.mxu0
        %v1010 = vadd.f32 %v526, %v1009
        %1011 = vmatmul.bf16.gmra.mxu0 %v961
        %v1012 = vpop.f32.mrf.mxu0
        %v1013 = vadd.f32 %v526, %v1012
        %v1014 = vpop.f32.mrf.mxu0
        %v1015 = vadd.f32 %v526, %v1014
        %1016 = vdwg.mxu0
        %v1017 = vmax.f32 %v973, 0.0
        %v1018 = vmax.f32 %v975, 0.0
        %v1019 = vmax.f32 %v978, 0.0
        %v1020 = vmax.f32 %v980, 0.0
        %v1021 = vmax.f32 %v983, 0.0
        %v1022 = vmax.f32 %v985, 0.0
        %v1023 = vmax.f32 %v988, 0.0
        %v1024 = vmax.f32 %v990, 0.0
        %v1025 = vmax.f32 %v993, 0.0
        %v1026 = vmax.f32 %v995, 0.0
        %v1027 = vmax.f32 %v998, 0.0
        %v1028 = vmax.f32 %v1000, 0.0
        %v1029 = vmax.f32 %v1003, 0.0
        %v1030 = vmax.f32 %v1005, 0.0
        %v1031 = vmax.f32 %v1008, 0.0
        %v1032 = vmax.f32 %v1010, 0.0
        %v1033 = vmax.f32 %v1013, 0.0
        %v1034 = vmax.f32 %v1015, 0.0
        %v1035 = vmax.f32 %v854, %v1017
        %v1036 = vmax.f32 %v855, %v1018
        %v1037 = vmax.f32 %v856, %v1019
        %v1038 = vmax.f32 %v857, %v1020
        %v1039 = vmax.f32 %v858, %v1021
        %v1040 = vmax.f32 %v859, %v1022
        %v1041 = vmax.f32 %v860, %v1023
        %v1042 = vmax.f32 %v861, %v1024
        %v1043 = vmax.f32 %v862, %v1025
        %v1044 = vmax.f32 %v863, %v1026
        %v1045 = vmax.f32 %v864, %v1027
        %v1046 = vmax.f32 %v865, %v1028
        %v1047 = vmax.f32 %v866, %v1029
        %v1048 = vmax.f32 %v867, %v1030
        %v1049 = vmax.f32 %v868, %v1031
        %v1050 = vmax.f32 %v869, %v1032
        %v1051 = vmax.f32 %v870, %v1033
        %v1052 = vmax.f32 %v871, %v1034
        %s1053 = scalar_lea.vmem %s473, 216 [#allocation2]
        %v1054 = vld [vmem:[%s1053] sm:$0xf]
        %v1055 = vld [vmem:[%s1053 + $0x4] sm:$0xf]
        %v1056 = vld [vmem:[%s1053 + $0x8] sm:$0xf]
        %v1057 = vld [vmem:[%s1053 + $0xc] sm:$0xf]
        %v1058 = vld [vmem:[%s1053 + $0x10] sm:$0xf]
        %v1059 = vld [vmem:[%s1053 + $0x14] sm:$0xf]
        %v1060 = vld [vmem:[%s1053 + $0x18] sm:$0xf]
        %v1061 = vld [vmem:[%s1053 + $0x1c] sm:$0xf]
        %v1062 = vld [vmem:[%s1053 + $0x20] sm:$0xf]
        %v1063 = vld [vmem:[%s1053 + $0x24] sm:$0xf]
        %v1064 = vld [vmem:[%s1053 + $0x28] sm:$0xf]
        %v1065 = vld [vmem:[%s1053 + $0x2c] sm:$0xf]
        %v1066 = vld [vmem:[%s1053 + $0x30] sm:$0xf]
        %v1067 = vld [vmem:[%s1053 + $0x34] sm:$0xf]
        %v1068 = vld [vmem:[%s1053 + $0x38] sm:$0xf]
        %v1069 = vld [vmem:[%s1053 + $0x3c] sm:$0xf]
        %v1070 = vld [vmem:[%s1053 + $0x40] sm:$0xf]
        %v1071 = vld [vmem:[%s1053 + $0x44] sm:$0xf]
        %v1090 = vunpack.c.l.b16 %v1054
        %v1091 = vunpack.c.l.b16 %v1055
        %v1092 = vunpack.c.l.b16 %v1056
        %v1093 = vunpack.c.l.b16 %v1057
        %v1094 = vunpack.c.l.b16 %v1058
        %v1095 = vunpack.c.l.b16 %v1059
        %v1096 = vunpack.c.l.b16 %v1060
        %v1097 = vunpack.c.l.b16 %v1061
        %v1098 = vunpack.c.l.b16 %v1062
        %v1099 = vunpack.c.l.b16 %v1063
        %v1100 = vunpack.c.l.b16 %v1064
        %v1101 = vunpack.c.l.b16 %v1065
        %v1102 = vunpack.c.l.b16 %v1066
        %v1103 = vunpack.c.l.b16 %v1067
        %v1104 = vunpack.c.l.b16 %v1068
        %v1105 = vunpack.c.l.b16 %v1069
        %v1106 = vunpack.c.l.b16 %v1070
        %v1107 = vunpack.c.l.b16 %v1071
        %v1108 = vpack.c.b16 %v1091, %v1090
        %v1109 = vpack.c.b16 %v1093, %v1092
        %v1110 = vpack.c.b16 %v1095, %v1094
        %v1111 = vpack.c.b16 %v1097, %v1096
        %v1112 = vpack.c.b16 %v1099, %v1098
        %v1113 = vpack.c.b16 %v1101, %v1100
        %v1114 = vpack.c.b16 %v1103, %v1102
        %v1115 = vpack.c.b16 %v1105, %v1104
        %v1116 = vpack.c.b16 %v1107, %v1106
        %v1118 = vsel %vm584, %v1108, 0
        %v1121 = vsel %vm584, %v1109, 0
        %v1124 = vsel %vm584, %v1110, 0
        %v1127 = vsel %vm584, %v1111, 0
        %v1130 = vsel %vm584, %v1112, 0
        %v1133 = vsel %vm584, %v1113, 0
        %v1136 = vsel %vm584, %v1114, 0
        %v1139 = vsel %vm584, %v1115, 0
        %v1142 = vsel %vm584, %v1116, 0
        %1144 = vmatpush.bf16.msra.mxu0 0
        %1145 = vmatpush.bf16.msra.mxu0 0
        %1146 = vmatpush.bf16.msra.mxu0 0
        %1147 = vmatpush.bf16.msra.mxu0 0
        %1148 = vmatpush.bf16.msra.mxu0 0
        %1149 = vmatpush.bf16.msra.mxu0 0
        %1150 = vmatpush.bf16.msra.mxu0 %v617
        %1151 = vmatpush.bf16.msra.mxu0 %v581
        %1152 = vmatmul.bf16.gmra.mxu0 %v1118
        %v1153 = vpop.f32.mrf.mxu0
        %v1154 = vadd.f32 %v526, %v1153
        %v1155 = vpop.f32.mrf.mxu0
        %v1156 = vadd.f32 %v526, %v1155
        %1157 = vmatmul.bf16.gmra.mxu0 %v1121
        %v1158 = vpop.f32.mrf.mxu0
        %v1159 = vadd.f32 %v526, %v1158
        %v1160 = vpop.f32.mrf.mxu0
        %v1161 = vadd.f32 %v526, %v1160
        %1162 = vmatmul.bf16.gmra.mxu0 %v1124
        %v1163 = vpop.f32.mrf.mxu0
        %v1164 = vadd.f32 %v526, %v1163
        %v1165 = vpop.f32.mrf.mxu0
        %v1166 = vadd.f32 %v526, %v1165
        %1167 = vmatmul.bf16.gmra.mxu0 %v1127
        %v1168 = vpop.f32.mrf.mxu0
        %v1169 = vadd.f32 %v526, %v1168
        %v1170 = vpop.f32.mrf.mxu0
        %v1171 = vadd.f32 %v526, %v1170
        %1172 = vmatmul.bf16.gmra.mxu0 %v1130
        %v1173 = vpop.f32.mrf.mxu0
        %v1174 = vadd.f32 %v526, %v1173
        %v1175 = vpop.f32.mrf.mxu0
        %v1176 = vadd.f32 %v526, %v1175
        %1177 = vmatmul.bf16.gmra.mxu0 %v1133
        %v1178 = vpop.f32.mrf.mxu0
        %v1179 = vadd.f32 %v526, %v1178
        %v1180 = vpop.f32.mrf.mxu0
        %v1181 = vadd.f32 %v526, %v1180
        %1182 = vmatmul.bf16.gmra.mxu0 %v1136
        %v1183 = vpop.f32.mrf.mxu0
        %v1184 = vadd.f32 %v526, %v1183
        %v1185 = vpop.f32.mrf.mxu0
        %v1186 = vadd.f32 %v526, %v1185
        %1187 = vmatmul.bf16.gmra.mxu0 %v1139
        %v1188 = vpop.f32.mrf.mxu0
        %v1189 = vadd.f32 %v526, %v1188
        %v1190 = vpop.f32.mrf.mxu0
        %v1191 = vadd.f32 %v526, %v1190
        %1192 = vmatmul.bf16.gmra.mxu0 %v1142
        %v1193 = vpop.f32.mrf.mxu0
        %v1194 = vadd.f32 %v526, %v1193
        %v1195 = vpop.f32.mrf.mxu0
        %v1196 = vadd.f32 %v526, %v1195
        %1197 = vdwg.mxu0
        %v1198 = vmax.f32 %v1154, 0.0
        %v1199 = vmax.f32 %v1156, 0.0
        %v1200 = vmax.f32 %v1159, 0.0
        %v1201 = vmax.f32 %v1161, 0.0
        %v1202 = vmax.f32 %v1164, 0.0
        %v1203 = vmax.f32 %v1166, 0.0
        %v1204 = vmax.f32 %v1169, 0.0
        %v1205 = vmax.f32 %v1171, 0.0
        %v1206 = vmax.f32 %v1174, 0.0
        %v1207 = vmax.f32 %v1176, 0.0
        %v1208 = vmax.f32 %v1179, 0.0
        %v1209 = vmax.f32 %v1181, 0.0
        %v1210 = vmax.f32 %v1184, 0.0
        %v1211 = vmax.f32 %v1186, 0.0
        %v1212 = vmax.f32 %v1189, 0.0
        %v1213 = vmax.f32 %v1191, 0.0
        %v1214 = vmax.f32 %v1194, 0.0
        %v1215 = vmax.f32 %v1196, 0.0
        %v1216 = vmax.f32 %v1035, %v1198
        %v1217 = vmax.f32 %v1036, %v1199
        %v1218 = vmax.f32 %v1037, %v1200
        %v1219 = vmax.f32 %v1038, %v1201
        %v1220 = vmax.f32 %v1039, %v1202
        %v1221 = vmax.f32 %v1040, %v1203
        %v1222 = vmax.f32 %v1041, %v1204
        %v1223 = vmax.f32 %v1042, %v1205
        %v1224 = vmax.f32 %v1043, %v1206
        %v1225 = vmax.f32 %v1044, %v1207
        %v1226 = vmax.f32 %v1045, %v1208
        %v1227 = vmax.f32 %v1046, %v1209
        %v1228 = vmax.f32 %v1047, %v1210
        %v1229 = vmax.f32 %v1048, %v1211
        %v1230 = vmax.f32 %v1049, %v1212
        %v1231 = vmax.f32 %v1050, %v1213
        %v1232 = vmax.f32 %v1051, %v1214
        %v1233 = vmax.f32 %v1052, %v1215
        %v1234 = vpack.c.bf16 %v1216, %v1216
        %v1235 = vpack.c.bf16 %v1217, %v1217
        %v1236 = vpack.c.bf16 %v1218, %v1218
        %v1237 = vpack.c.bf16 %v1219, %v1219
        %v1238 = vpack.c.bf16 %v1220, %v1220
        %v1239 = vpack.c.bf16 %v1221, %v1221
        %v1240 = vpack.c.bf16 %v1222, %v1222
        %v1241 = vpack.c.bf16 %v1223, %v1223
        %v1242 = vpack.c.bf16 %v1224, %v1224
        %v1243 = vpack.c.bf16 %v1225, %v1225
        %v1244 = vpack.c.bf16 %v1226, %v1226
        %v1245 = vpack.c.bf16 %v1227, %v1227
        %v1246 = vpack.c.bf16 %v1228, %v1228
        %v1247 = vpack.c.bf16 %v1229, %v1229
        %v1248 = vpack.c.bf16 %v1230, %v1230
        %v1249 = vpack.c.bf16 %v1231, %v1231
        %v1250 = vpack.c.bf16 %v1232, %v1232
        %v1251 = vpack.c.bf16 %v1233, %v1233
        %1252 = vst [vmem:[%s499] sm:$0xf] %v1234
        %1253 = vst [vmem:[%s499 + $0x4] sm:$0xf] %v1235
        %1254 = vst [vmem:[%s499 + $0x8] sm:$0xf] %v1236
        %1255 = vst [vmem:[%s499 + $0xc] sm:$0xf] %v1237
        %1256 = vst [vmem:[%s499 + $0x10] sm:$0xf] %v1238
        %1257 = vst [vmem:[%s499 + $0x14] sm:$0xf] %v1239
        %1258 = vst [vmem:[%s499 + $0x18] sm:$0xf] %v1240
        %1259 = vst [vmem:[%s499 + $0x1c] sm:$0xf] %v1241
        %1260 = vst [vmem:[%s499 + $0x20] sm:$0xf] %v1242
        %1261 = vst [vmem:[%s499 + $0x24] sm:$0xf] %v1243
        %1262 = vst [vmem:[%s499 + $0x28] sm:$0xf] %v1244
        %1263 = vst [vmem:[%s499 + $0x2c] sm:$0xf] %v1245
        %1264 = vst [vmem:[%s499 + $0x30] sm:$0xf] %v1246
        %1265 = vst [vmem:[%s499 + $0x34] sm:$0xf] %v1247
        %1266 = vst [vmem:[%s499 + $0x38] sm:$0xf] %v1248
        %1267 = vst [vmem:[%s499 + $0x3c] sm:$0xf] %v1249
        %1268 = vst [vmem:[%s499 + $0x40] sm:$0xf] %v1250
        %1269 = vst [vmem:[%s499 + $0x44] sm:$0xf] %v1251
        %s1270 = smul.u32 18, %s14
        %p1271 = scmp.lt.s32.totalorder %s1270, 35
        %s1272 = scalar_select %p1271, %s1270, 35
        %s1273 = smul.addr %s1272, 4
        %s1274 = scalar_lea.vmem %s3, %s1273
        // Predicated region
        $region74: #{sparsenet_forward.3} parent=68 // pred_check
          %p1275 = pneg %p100
        $region75: #{sparsenet_forward.3} parent=68 // pred_check_branch
          %1277 = sbr.rel (%p1275) target = $region77
        $region76: #{sparsenet_forward.3} parent=68 // pred_region
          %s1278 = smul.u32 18, %s14
        $region77: #{sparsenet_forward.3} parent=68 // pred_fallthru
          _
      $region69: #{sparsenet_forward.3} parent=5 // pred_fallthru
        _
      %p1279 = scmp.le.s32.totalorder 2, %s9
      // Predicated region
      $region78: #{sparsenet_forward.3} parent=5 // pred_check
        %p1280 = pneg %p1279
      $region79: #{sparsenet_forward.3} parent=5 // pred_check_branch
        %1282 = sbr.rel (%p1280) target = $region81
      $region80: #{sparsenet_forward.3} parent=5 // pred_region
        %s1283 = ssub.s32 %s9, 2
        // Predicated region
        $region82: #{sparsenet_forward.3} parent=80 // pred_check
          %p1284 = pneg %p106
        $region83: #{sparsenet_forward.3} parent=80 // pred_check_branch
          %1286 = sbr.rel (%p1284) target = $region85
        $region84: #{sparsenet_forward.3} parent=80 // pred_region
          %s1287 = smul.u32 18, %s15
          %p1288 = scmp.lt.s32.totalorder %s1287, 35
          %s1289 = scalar_select %p1288, %s1287, 35
          %s1290 = smul.addr %s1289, 4
          %s1291 = scalar_lea.vmem %s3, %s1290
        $region85: #{sparsenet_forward.3} parent=80 // pred_fallthru
          _
      $region81: #{sparsenet_forward.3} parent=5 // pred_fallthru
        _
    $region6: #{sparsenet_forward.3} parent=1 // loop_footer
      %s13 = sadd.s32 1, %s9
    $region7: #{sparsenet_forward.3} parent=1 // loop_footer_branch
      %8 = sbr.rel target = $region3
    $region8: #{sparsenet_forward.3} parent=1 // loop_exit
      _

// kernel: sparsenet_forward.4
$region0: #{sparsenet_forward.4}
  #allocation0 [shape = 'u32[]', space=smem, size = 0x4, offset = 0x4, fixed_abs, tag = 'smem constant byte address 0x4 - core index']
  #allocation1 [shape = 'u32[72,128]{1,0:T(1,128)}', space=vmem, size = 0x9000, scoped, tag = 'internal scratch']
  %s0 = inlined_call_operand.vmem [shape: bf16[4,32,512], index: 0, kind: input, shape index: {}]
  %s1 = inlined_call_operand.vmem [shape: bf16[512,128], index: 1, kind: input, shape index: {}]
  %s2 = inlined_call_operand.vmem [shape: f32[1,128], index: 2, kind: input, shape index: {}]
  %s3 = inlined_call_operand.vmem [shape: bf16[32,128], index: 3, kind: output, shape index: {}]
  %s4 = sld [smem:[#allocation0]]
  $region68: #{sparsenet_forward.4} parent=0
    _
  %s6 = ssub.s32 1, %s4
  %s7 = scalar_select 0, %s6, %s4
  $region1: #{sparsenet_forward.4} parent=0
    #allocation2 [shape = 'u8[131072]{0}', space=vmem, size = 0x20000, scoped, tag = 'input window, operand 0']
    loop: start=0, step=1, limit=4
    $region2: #{sparsenet_forward.4} parent=1 // loop_pre_header
      _
    $region3: #{sparsenet_forward.4} parent=1 // loop_header
      %s9 = sphi 0, %s13
      %p10 = scmp.ge.s32.totalorder %s9, 4
      %s19 = sphi 0, %s21
      %s22 = sphi 0, %s19
      %s23 = sphi 0, %s22
      %s39 = sphi 0, %s23
      %s43 = sphi 0, %s43
      %s45 = sphi 0, %s43
      %s46 = sphi 0, %s45
      %s60 = sphi 0, %s46
      %s64 = sphi 0, %s64
      %s66 = sphi 0, %s64
      %s67 = sphi 0, %s66
      %s81 = sphi 0, %s67
      %s87 = sphi 0, %s89
      %s90 = sphi 0, %s87
      %s91 = sphi 0, %s90
      %s107 = sphi 0, %s91
    $region4: #{sparsenet_forward.4} parent=1 // loop_header_branch
      %12 = sbr.rel (%p10) target = $region8
    $region5: #{sparsenet_forward.4} parent=1 // loop_body
      %s14 = ssub.s32 %s9, 1
      %s15 = ssub.s32 %s9, 2
      %s16 = sadd.s32 %s9, 1
      %s17 = ssub.s32 %s9, %s16
      %p18 = scmp.eq.s32.totalorder %s17, 0
      %s20 = sadd.s32 %s19, 1
      %s21 = scalar_select %p18, %s19, %s20
      %p24 = pneg %p18
      %p25 = scmp.eq.s32.totalorder %s9, 1
      %p26 = por %p24, %p25
      %p27 = scmp.ne.s32.totalorder %s19, %s22
      %p28 = scmp.eq.s32.totalorder %s9, 0
      %p29 = por %p27, %p28
      %p30 = scmp.ne.s32.totalorder %s19, %s22
      %p31 = scmp.eq.s32.totalorder %s14, 1
      %p32 = por %p30, %p31
      %p33 = scmp.ne.s32.totalorder %s22, %s23
      %p34 = scmp.eq.s32.totalorder %s14, 0
      %p35 = por %p33, %p34
      %p36 = scmp.ne.s32.totalorder %s22, %s23
      %p37 = scmp.eq.s32.totalorder %s15, 1
      %p38 = por %p36, %p37
      %p40 = scmp.ne.s32.totalorder %s23, %s39
      %p41 = scmp.eq.s32.totalorder %s15, 0
      %p42 = por %p40, %p41
      %s44 = sadd.s32 %s43, 1
      %p47 = scmp.eq.s32.totalorder %s9, 1
      %p48 = scmp.ne.s32.totalorder %s43, %s45
      %p49 = scmp.eq.s32.totalorder %s9, 0
      %p50 = por %p48, %p49
      %p51 = scmp.ne.s32.totalorder %s43, %s45
      %p52 = scmp.eq.s32.totalorder %s14, 1
      %p53 = por %p51, %p52
      %p54 = scmp.ne.s32.totalorder %s45, %s46
      %p55 = scmp.eq.s32.totalorder %s14, 0
      %p56 = por %p54, %p55
      %p57 = scmp.ne.s32.totalorder %s45, %s46
      %p58 = scmp.eq.s32.totalorder %s15, 1
      %p59 = por %p57, %p58
      %p61 = scmp.ne.s32.totalorder %s46, %s60
      %p62 = scmp.eq.s32.totalorder %s15, 0
      %p63 = por %p61, %p62
      %s65 = sadd.s32 %s64, 1
      %p68 = scmp.eq.s32.totalorder %s9, 1
      %p69 = scmp.ne.s32.totalorder %s64, %s66
      %p70 = scmp.eq.s32.totalorder %s9, 0
      %p71 = por %p69, %p70
      %p72 = scmp.ne.s32.totalorder %s64, %s66
      %p73 = scmp.eq.s32.totalorder %s14, 1
      %p74 = por %p72, %p73
      %p75 = scmp.ne.s32.totalorder %s66, %s67
      %p76 = scmp.eq.s32.totalorder %s14, 0
      %p77 = por %p75, %p76
      %p78 = scmp.ne.s32.totalorder %s66, %s67
      %p79 = scmp.eq.s32.totalorder %s15, 1
      %p80 = por %p78, %p79
      %p82 = scmp.ne.s32.totalorder %s67, %s81
      %p83 = scmp.eq.s32.totalorder %s15, 0
      %p84 = por %p82, %p83
      %s85 = ssub.s32 %s9, %s16
      %p86 = scmp.eq.s32.totalorder %s85, 0
      %s88 = sadd.s32 %s87, 1
      %s89 = scalar_select %p86, %s87, %s88
      %p92 = pneg %p86
      %p93 = scmp.eq.s32.totalorder %s9, 1
      %p94 = por %p92, %p93
      %p95 = scmp.ne.s32.totalorder %s87, %s90
      %p96 = scmp.eq.s32.totalorder %s9, 0
      %p97 = por %p95, %p96
      %p98 = scmp.ne.s32.totalorder %s87, %s90
      %p99 = scmp.eq.s32.totalorder %s14, 1
      %p100 = por %p98, %p99
      %p101 = scmp.ne.s32.totalorder %s90, %s91
      %p102 = scmp.eq.s32.totalorder %s14, 0
      %p103 = por %p101, %p102
      %p104 = scmp.ne.s32.totalorder %s90, %s91
      %p105 = scmp.eq.s32.totalorder %s15, 1
      %p106 = por %p104, %p105
      %p108 = scmp.ne.s32.totalorder %s91, %s107
      %p109 = scmp.eq.s32.totalorder %s15, 0
      %p110 = por %p108, %p109
      %p111 = scmp.le.s32.totalorder 1, %s9
      %p112 = scmp.lt.s32.totalorder %s9, 3
      %p113 = pnand %p111, %p112
      %p114 = pneg %p113
      // Predicated region
      $region9: #{sparsenet_forward.4} parent=5 // pred_check
        _
      $region10: #{sparsenet_forward.4} parent=5 // pred_check_branch
        %116 = sbr.rel (%p113) target = $region12
      $region11: #{sparsenet_forward.4} parent=5 // pred_region
        %s117 = ssub.s32 %s9, 1
        // Predicated region
        $region13: #{sparsenet_forward.4} parent=11 // pred_check
          %p118 = pneg %p56
        $region14: #{sparsenet_forward.4} parent=11 // pred_check_branch
          %120 = sbr.rel (%p118) target = $region16
        $region15: #{sparsenet_forward.4} parent=11 // pred_region
          _
        $region16: #{sparsenet_forward.4} parent=11 // pred_fallthru
          _
        // Predicated region
        $region17: #{sparsenet_forward.4} parent=11 // pred_check
          %p121 = pneg %p77
        $region18: #{sparsenet_forward.4} parent=11 // pred_check_branch
          %123 = sbr.rel (%p121) target = $region20
        $region19: #{sparsenet_forward.4} parent=11 // pred_region
          _
        $region20: #{sparsenet_forward.4} parent=11 // pred_fallthru
          _
      $region12: #{sparsenet_forward.4} parent=5 // pred_fallthru
        _
      %p124 = scmp.lt.s32.totalorder %s9, 2
      // Predicated region
      $region21: #{sparsenet_forward.4} parent=5 // pred_check
        %p125 = pneg %p124
      $region22: #{sparsenet_forward.4} parent=5 // pred_check_branch
        %127 = sbr.rel (%p125) target = $region24
      $region23: #{sparsenet_forward.4} parent=5 // pred_region
        // Predicated region
        $region25: #{sparsenet_forward.4} parent=23 // pred_check
          %p128 = pneg %p29
        $region26: #{sparsenet_forward.4} parent=23 // pred_check_branch
          %130 = sbr.rel (%p128) target = $region28
        $region27: #{sparsenet_forward.4} parent=23 // pred_region
          %s131 = sand.u32 %s19, 1
          %s132 = sand.u32 %s19, 1
          %s133 = smul.addr %s132, 128
          %s134 = scalar_lea.vmem [#allocation2], %s133
          %s135 = smul.u32 2, %s9
          %s136 = smul.addr %s135, 4
          %s137 = smul.addr %s136, 4
          %s138 = scalar_lea.vmem %s0, %s137
          // Predicated region
          $region29: #{sparsenet_forward.4} parent=27 // pred_check
            _
          $region30: #{sparsenet_forward.4} parent=27 // pred_check_branch
            %140 = sbr.rel (0) target = $region32
          $region31: #{sparsenet_forward.4} parent=27 // pred_region
            // Predicated region
            $region33: #{sparsenet_forward.4} parent=31 // pred_check
              _
            $region34: #{sparsenet_forward.4} parent=31 // pred_check_branch
              %142 = sbr.rel (0) target = $region36
            $region35: #{sparsenet_forward.4} parent=31 // pred_region
              loop: start=0, step=1, limit=1
              $region37: #{sparsenet_forward.4} parent=35 // loop_pre_header
                _
              $region38: #{sparsenet_forward.4} parent=35 // loop_header
                %s144 = sphi 0, %s148
                %p145 = scmp.ge.s32.totalorder %s144, 1
                %s149 = sphi %s138, %s138
                %s150 = sphi %s134, %s134
              $region39: #{sparsenet_forward.4} parent=35 // loop_header_branch
                %147 = sbr.rel (%p145) target = $region43
              $region40: #{sparsenet_forward.4} parent=35 // loop_body
                %v151 = vld [vmem:[%s149] sm:$0xff]
                %152 = vst [vmem:[%s150] sm:$0xff] %v151
                %v153 = vld [vmem:[%s149 + $0x8] sm:$0xff]
                %154 = vst [vmem:[%s150 + $0x8] sm:$0xff] %v153
                %v155 = vld [vmem:[%s149 + $0x10] sm:$0xff]
                %156 = vst [vmem:[%s150 + $0x10] sm:$0xff] %v155
                %v157 = vld [vmem:[%s149 + $0x18] sm:$0xff]
                %158 = vst [vmem:[%s150 + $0x18] sm:$0xff] %v157
                %v159 = vld [vmem:[%s149 + $0x40] sm:$0xff]
                %160 = vst [vmem:[%s150 + $0x20] sm:$0xff] %v159
                %v161 = vld [vmem:[%s149 + $0x48] sm:$0xff]
                %162 = vst [vmem:[%s150 + $0x28] sm:$0xff] %v161
                %v163 = vld [vmem:[%s149 + $0x50] sm:$0xff]
                %164 = vst [vmem:[%s150 + $0x30] sm:$0xff] %v163
                %v165 = vld [vmem:[%s149 + $0x58] sm:$0xff]
                %166 = vst [vmem:[%s150 + $0x38] sm:$0xff] %v165
                %v167 = vld [vmem:[%s149 + $0x80] sm:$0xff]
                %168 = vst [vmem:[%s150 + $0x40] sm:$0xff] %v167
                %v169 = vld [vmem:[%s149 + $0x88] sm:$0xff]
                %170 = vst [vmem:[%s150 + $0x48] sm:$0xff] %v169
                %v171 = vld [vmem:[%s149 + $0x90] sm:$0xff]
                %172 = vst [vmem:[%s150 + $0x50] sm:$0xff] %v171
                %v173 = vld [vmem:[%s149 + $0x98] sm:$0xff]
                %174 = vst [vmem:[%s150 + $0x58] sm:$0xff] %v173
                %v175 = vld [vmem:[%s149 + $0xc0] sm:$0xff]
                %176 = vst [vmem:[%s150 + $0x60] sm:$0xff] %v175
                %v177 = vld [vmem:[%s149 + $0xc8] sm:$0xff]
                %178 = vst [vmem:[%s150 + $0x68] sm:$0xff] %v177
                %v179 = vld [vmem:[%s149 + $0xd0] sm:$0xff]
                %180 = vst [vmem:[%s150 + $0x70] sm:$0xff] %v179
                %v181 = vld [vmem:[%s149 + $0xd8] sm:$0xff]
                %182 = vst [vmem:[%s150 + $0x78] sm:$0xff] %v181
              $region41: #{sparsenet_forward.4} parent=35 // loop_footer
                %s148 = sadd.s32 1, %s144
              $region42: #{sparsenet_forward.4} parent=35 // loop_footer_branch
                %143 = sbr.rel target = $region38
              $region43: #{sparsenet_forward.4} parent=35 // loop_exit
                _
            $region36: #{sparsenet_forward.4} parent=31 // pred_fallthru
              _
            // Predicated region
            $region44: #{sparsenet_forward.4} parent=31 // pred_check
              _
            $region45: #{sparsenet_forward.4} parent=31 // pred_check_branch
              %184 = sbr.rel target = $region47
            $region46: #{sparsenet_forward.4} parent=31 // pred_region
              _
            $region47: #{sparsenet_forward.4} parent=31 // pred_fallthru
              _
          $region32: #{sparsenet_forward.4} parent=27 // pred_fallthru
            _
          %185 = vnop
        $region28: #{sparsenet_forward.4} parent=23 // pred_fallthru
          _
      $region24: #{sparsenet_forward.4} parent=5 // pred_fallthru
        _
      %p186 = scmp.le.s32.totalorder 1, %s9
      %p187 = scmp.lt.s32.totalorder %s9, 3
      %p188 = pnand %p186, %p187
      %p189 = pneg %p188
      // Predicated region
      $region48: #{sparsenet_forward.4} parent=5 // pred_check
        _
      $region49: #{sparsenet_forward.4} parent=5 // pred_check_branch
        %191 = sbr.rel (%p188) target = $region51
      $region50: #{sparsenet_forward.4} parent=5 // pred_region
        %s192 = ssub.s32 %s9, 1
        %s193 = sand.u32 %s22, 1
        %s194 = sand.u32 %s22, 1
        %s195 = smul.addr %s194, 128
        %s196 = scalar_lea.vmem [#allocation2], %s195
        // Predicated region
        $region52: #{sparsenet_forward.4} parent=50 // pred_check
          %p197 = pneg %p35
        $region53: #{sparsenet_forward.4} parent=50 // pred_check_branch
          %199 = sbr.rel (%p197) target = $region55
        $region54: #{sparsenet_forward.4} parent=50 // pred_region
          _
        $region55: #{sparsenet_forward.4} parent=50 // pred_fallthru
          _
        %s200 = sand.u32 %s22, 1
        %s201 = sand.u32 %s22, 1
        %s202 = smul.addr %s201, 128
        %s203 = scalar_lea.vmem [#allocation2], %s202
        %p204 = pneg %p35
        %p205 = pneg %p32
        %p206 = pneg %p56
        %p207 = pneg %p53
        %p208 = pneg %p77
        %p209 = pneg %p74
        %p210 = pneg %p103
        %p211 = pneg %p100
        %s212 = smul.u32 2, %s14
        %p213 = scmp.lt.s32.totalorder %s212, 3
        %s214 = scalar_select %p213, %s212, 3
        %s215 = smul.addr %s214, 4
        %s216 = scalar_lea.vmem %s3, %s215
        %s217 = smul.u32 2, %s14
        %s218 = smul.u32 2, %s14
        %p219 = scmp.lt.s32.totalorder %s218, 3
        %s220 = scalar_select %p219, %s218, 3
        %s221 = smul.addr %s220, 4
        %s222 = scalar_lea.vmem %s3, %s221
        %s223 = smul.u32 2, %s14
        %v224 = vld [vmem:[%s1] sm:$0xf]
        %v225 = vld [vmem:[%s1 + $0x4] sm:$0xf]
        %v226 = vld [vmem:[%s1 + $0x8] sm:$0xf]
        %v227 = vld [vmem:[%s1 + $0xc] sm:$0xf]
        %v228 = vld [vmem:[%s1 + $0x10] sm:$0xf]
        %v229 = vld [vmem:[%s1 + $0x14] sm:$0xf]
        %v230 = vld [vmem:[%s1 + $0x18] sm:$0xf]
        %v231 = vld [vmem:[%s1 + $0x1c] sm:$0xf]
        %v232 = vld [vmem:[%s1 + $0x20] sm:$0xf]
        %v233 = vld [vmem:[%s1 + $0x24] sm:$0xf]
        %v234 = vld [vmem:[%s1 + $0x28] sm:$0xf]
        %v235 = vld [vmem:[%s1 + $0x2c] sm:$0xf]
        %v236 = vld [vmem:[%s1 + $0x30] sm:$0xf]
        %v237 = vld [vmem:[%s1 + $0x34] sm:$0xf]
        %v238 = vld [vmem:[%s1 + $0x38] sm:$0xf]
        %v239 = vld [vmem:[%s1 + $0x3c] sm:$0xf]
        %v240 = vld [vmem:[%s1 + $0x40] sm:$0xf]
        %v241 = vld [vmem:[%s1 + $0x44] sm:$0xf]
        %v242 = vld [vmem:[%s1 + $0x48] sm:$0xf]
        %v243 = vld [vmem:[%s1 + $0x4c] sm:$0xf]
        %v244 = vld [vmem:[%s1 + $0x50] sm:$0xf]
        %v245 = vld [vmem:[%s1 + $0x54] sm:$0xf]
        %v246 = vld [vmem:[%s1 + $0x58] sm:$0xf]
        %v247 = vld [vmem:[%s1 + $0x5c] sm:$0xf]
        %v248 = vld [vmem:[%s1 + $0x60] sm:$0xf]
        %v249 = vld [vmem:[%s1 + $0x64] sm:$0xf]
        %v250 = vld [vmem:[%s1 + $0x68] sm:$0xf]
        %v251 = vld [vmem:[%s1 + $0x6c] sm:$0xf]
        %v252 = vld [vmem:[%s1 + $0x70] sm:$0xf]
        %v253 = vld [vmem:[%s1 + $0x74] sm:$0xf]
        %v254 = vld [vmem:[%s1 + $0x78] sm:$0xf]
        %v255 = vld [vmem:[%s1 + $0x7c] sm:$0xf]
        %v256 = vld [vmem:[%s1 + $0x80] sm:$0xf]
        %v257 = vld [vmem:[%s1 + $0x84] sm:$0xf]
        %v258 = vld [vmem:[%s1 + $0x88] sm:$0xf]
        %v259 = vld [vmem:[%s1 + $0x8c] sm:$0xf]
        %v260 = vld [vmem:[%s1 + $0x90] sm:$0xf]
        %v261 = vld [vmem:[%s1 + $0x94] sm:$0xf]
        %v262 = vld [vmem:[%s1 + $0x98] sm:$0xf]
        %v263 = vld [vmem:[%s1 + $0x9c] sm:$0xf]
        %v264 = vld [vmem:[%s1 + $0xa0] sm:$0xf]
        %v265 = vld [vmem:[%s1 + $0xa4] sm:$0xf]
        %v266 = vld [vmem:[%s1 + $0xa8] sm:$0xf]
        %v267 = vld [vmem:[%s1 + $0xac] sm:$0xf]
        %v268 = vld [vmem:[%s1 + $0xb0] sm:$0xf]
        %v269 = vld [vmem:[%s1 + $0xb4] sm:$0xf]
        %v270 = vld [vmem:[%s1 + $0xb8] sm:$0xf]
        %v271 = vld [vmem:[%s1 + $0xbc] sm:$0xf]
        %v272 = vld [vmem:[%s1 + $0xc0] sm:$0xf]
        %v273 = vld [vmem:[%s1 + $0xc4] sm:$0xf]
        %v274 = vld [vmem:[%s1 + $0xc8] sm:$0xf]
        %v275 = vld [vmem:[%s1 + $0xcc] sm:$0xf]
        %v276 = vld [vmem:[%s1 + $0xd0] sm:$0xf]
        %v277 = vld [vmem:[%s1 + $0xd4] sm:$0xf]
        %v278 = vld [vmem:[%s1 + $0xd8] sm:$0xf]
        %v279 = vld [vmem:[%s1 + $0xdc] sm:$0xf]
        %v280 = vld [vmem:[%s1 + $0xe0] sm:$0xf]
        %v281 = vld [vmem:[%s1 + $0xe4] sm:$0xf]
        %v282 = vld [vmem:[%s1 + $0xe8] sm:$0xf]
        %v283 = vld [vmem:[%s1 + $0xec] sm:$0xf]
        %v284 = vld [vmem:[%s1 + $0xf0] sm:$0xf]
        %v285 = vld [vmem:[%s1 + $0xf4] sm:$0xf]
        %v286 = vld [vmem:[%s1 + $0xf8] sm:$0xf]
        %v287 = vld [vmem:[%s1 + $0xfc] sm:$0xf]
        %v288 = vld [vmem:[%s2] sm:$0x1]
        %v289 = vld [vmem:[%s196] sm:$0xff]
        %v290 = vld [vmem:[%s196 + $0x8] sm:$0xff]
        %v291 = vld [vmem:[%s196 + $0x10] sm:$0xff]
        %v292 = vld [vmem:[%s196 + $0x18] sm:$0xff]
        %v294 = vperm.slane %v288, 0
        %v300 = vunpack.c.l.b16 %v289
        %v301 = vunpack.c.h.b16 %v289
        %v302 = vunpack.c.l.b16 %v290
        %v303 = vunpack.c.h.b16 %v290
        %v304 = vunpack.c.l.b16 %v291
        %v305 = vunpack.c.h.b16 %v291
        %v306 = vunpack.c.l.b16 %v292
        %v307 = vunpack.c.h.b16 %v292
        %v308 = vpack.c.b16 %v304, %v300
        %v309 = vpack.c.b16 %v305, %v301
        %v310 = vpack.c.b16 %v306, %v302
        %v311 = vpack.c.b16 %v307, %v303
        %v380 = vunpack.c.l.b16 %v224
        %v381 = vunpack.c.l.b16 %v225
        %v382 = vunpack.c.l.b16 %v226
        %v383 = vunpack.c.l.b16 %v227
        %v384 = vunpack.c.l.b16 %v228
        %v385 = vunpack.c.l.b16 %v229
        %v386 = vunpack.c.l.b16 %v230
        %v387 = vunpack.c.l.b16 %v231
        %v388 = vunpack.c.l.b16 %v232
        %v389 = vunpack.c.l.b16 %v233
        %v390 = vunpack.c.l.b16 %v234
        %v391 = vunpack.c.l.b16 %v235
        %v392 = vunpack.c.l.b16 %v236
        %v393 = vunpack.c.l.b16 %v237
        %v394 = vunpack.c.l.b16 %v238
        %v395 = vunpack.c.l.b16 %v239
        %v396 = vunpack.c.l.b16 %v240
        %v397 = vunpack.c.l.b16 %v241
        %v398 = vunpack.c.l.b16 %v242
        %v399 = vunpack.c.l.b16 %v243
        %v400 = vunpack.c.l.b16 %v244
        %v401 = vunpack.c.l.b16 %v245
        %v402 = vunpack.c.l.b16 %v246
        %v403 = vunpack.c.l.b16 %v247
        %v404 = vunpack.c.l.b16 %v248
        %v405 = vunpack.c.l.b16 %v249
        %v406 = vunpack.c.l.b16 %v250
        %v407 = vunpack.c.l.b16 %v251
        %v408 = vunpack.c.l.b16 %v252
        %v409 = vunpack.c.l.b16 %v253
        %v410 = vunpack.c.l.b16 %v254
        %v411 = vunpack.c.l.b16 %v255
        %v412 = vunpack.c.l.b16 %v256
        %v413 = vunpack.c.l.b16 %v257
        %v414 = vunpack.c.l.b16 %v258
        %v415 = vunpack.c.l.b16 %v259
        %v416 = vunpack.c.l.b16 %v260
        %v417 = vunpack.c.l.b16 %v261
        %v418 = vunpack.c.l.b16 %v262
        %v419 = vunpack.c.l.b16 %v263
        %v420 = vunpack.c.l.b16 %v264
        %v421 = vunpack.c.l.b16 %v265
        %v422 = vunpack.c.l.b16 %v266
        %v423 = vunpack.c.l.b16 %v267
        %v424 = vunpack.c.l.b16 %v268
        %v425 = vunpack.c.l.b16 %v269
        %v426 = vunpack.c.l.b16 %v270
        %v427 = vunpack.c.l.b16 %v271
        %v428 = vunpack.c.l.b16 %v272
        %v429 = vunpack.c.l.b16 %v273
        %v430 = vunpack.c.l.b16 %v274
        %v431 = vunpack.c.l.b16 %v275
        %v432 = vunpack.c.l.b16 %v276
        %v433 = vunpack.c.l.b16 %v277
        %v434 = vunpack.c.l.b16 %v278
        %v435 = vunpack.c.l.b16 %v279
        %v436 = vunpack.c.l.b16 %v280
        %v437 = vunpack.c.l.b16 %v281
        %v438 = vunpack.c.l.b16 %v282
        %v439 = vunpack.c.l.b16 %v283
        %v440 = vunpack.c.l.b16 %v284
        %v441 = vunpack.c.l.b16 %v285
        %v442 = vunpack.c.l.b16 %v286
        %v443 = vunpack.c.l.b16 %v287
        %v444 = vpack.c.b16 %v381, %v380
        %v445 = vpack.c.b16 %v383, %v382
        %v446 = vpack.c.b16 %v385, %v384
        %v447 = vpack.c.b16 %v387, %v386
        %v448 = vpack.c.b16 %v389, %v388
        %v449 = vpack.c.b16 %v391, %v390
        %v450 = vpack.c.b16 %v393, %v392
        %v451 = vpack.c.b16 %v395, %v394
        %v452 = vpack.c.b16 %v397, %v396
        %v453 = vpack.c.b16 %v399, %v398
        %v454 = vpack.c.b16 %v401, %v400
        %v455 = vpack.c.b16 %v403, %v402
        %v456 = vpack.c.b16 %v405, %v404
        %v457 = vpack.c.b16 %v407, %v406
        %v458 = vpack.c.b16 %v409, %v408
        %v459 = vpack.c.b16 %v411, %v410
        %v460 = vpack.c.b16 %v413, %v412
        %v461 = vpack.c.b16 %v415, %v414
        %v462 = vpack.c.b16 %v417, %v416
        %v463 = vpack.c.b16 %v419, %v418
        %v464 = vpack.c.b16 %v421, %v420
        %v465 = vpack.c.b16 %v423, %v422
        %v466 = vpack.c.b16 %v425, %v424
        %v467 = vpack.c.b16 %v427, %v426
        %v468 = vpack.c.b16 %v429, %v428
        %v469 = vpack.c.b16 %v431, %v430
        %v470 = vpack.c.b16 %v433, %v432
        %v471 = vpack.c.b16 %v435, %v434
        %v472 = vpack.c.b16 %v437, %v436
        %v473 = vpack.c.b16 %v439, %v438
        %v474 = vpack.c.b16 %v441, %v440
        %v475 = vpack.c.b16 %v443, %v442
        %508 = vmatpush.bf16.msra.mxu0 %v451
        %509 = vmatpush.bf16.msra.mxu0 %v450
        %510 = vmatpush.bf16.msra.mxu0 %v449
        %511 = vmatpush.bf16.msra.mxu0 %v448
        %512 = vmatpush.bf16.msra.mxu0 %v447
        %513 = vmatpush.bf16.msra.mxu0 %v446
        %514 = vmatpush.bf16.msra.mxu0 %v445
        %515 = vmatpush.bf16.msra.mxu0 %v444
        %516 = vmatmul.bf16.gmra.mxu0 %v308
        %v517 = vpop.f32.mrf.mxu0
        %v518 = vadd.f32 %v294, %v517
        %v519 = vpop.f32.mrf.mxu0
        %v520 = vadd.f32 %v294, %v519
        %521 = vdwg.mxu0
        %522 = vmatpush.bf16.msra.mxu0 %v459
        %523 = vmatpush.bf16.msra.mxu0 %v458
        %524 = vmatpush.bf16.msra.mxu0 %v457
        %525 = vmatpush.bf16.msra.mxu0 %v456
        %526 = vmatpush.bf16.msra.mxu0 %v455
        %527 = vmatpush.bf16.msra.mxu0 %v454
        %528 = vmatpush.bf16.msra.mxu0 %v453
        %529 = vmatpush.bf16.msra.mxu0 %v452
        %530 = vmatmul.bf16.gmra.mxu0 %v309
        %v531 = vpop.f32.mrf.mxu0
        %v532 = vadd.f32 %v518, %v531
        %v533 = vpop.f32.mrf.mxu0
        %v534 = vadd.f32 %v520, %v533
        %535 = vdwg.mxu0
        %536 = vmatpush.bf16.msra.mxu0 %v467
        %537 = vmatpush.bf16.msra.mxu0 %v466
        %538 = vmatpush.bf16.msra.mxu0 %v465
        %539 = vmatpush.bf16.msra.mxu0 %v464
        %540 = vmatpush.bf16.msra.mxu0 %v463
        %541 = vmatpush.bf16.msra.mxu0 %v462
        %542 = vmatpush.bf16.msra.mxu0 %v461
        %543 = vmatpush.bf16.msra.mxu0 %v460
        %544 = vmatmul.bf16.gmra.mxu0 %v310
        %v545 = vpop.f32.mrf.mxu0
        %v546 = vadd.f32 %v532, %v545
        %v547 = vpop.f32.mrf.mxu0
        %v548 = vadd.f32 %v534, %v547
        %549 = vdwg.mxu0
        %550 = vmatpush.bf16.msra.mxu0 %v475
        %551 = vmatpush.bf16.msra.mxu0 %v474
        %552 = vmatpush.bf16.msra.mxu0 %v473
        %553 = vmatpush.bf16.msra.mxu0 %v472
        %554 = vmatpush.bf16.msra.mxu0 %v471
        %555 = vmatpush.bf16.msra.mxu0 %v470
        %556 = vmatpush.bf16.msra.mxu0 %v469
        %557 = vmatpush.bf16.msra.mxu0 %v468
        %558 = vmatmul.bf16.gmra.mxu0 %v311
        %v559 = vpop.f32.mrf.mxu0
        %v560 = vadd.f32 %v546, %v559
        %v561 = vpop.f32.mrf.mxu0
        %v562 = vadd.f32 %v548, %v561
        %563 = vdwg.mxu0
        %v564 = vmax.f32 %v560, 0.0
        %v565 = vmax.f32 %v562, 0.0
        %s566 = scalar_lea.vmem %s196, 32 [#allocation2]
        %v567 = vld [vmem:[%s566] sm:$0xff]
        %v568 = vld [vmem:[%s566 + $0x8] sm:$0xff]
        %v569 = vld [vmem:[%s566 + $0x10] sm:$0xff]
        %v570 = vld [vmem:[%s566 + $0x18] sm:$0xff]
        %v575 = vunpack.c.l.b16 %v567
        %v576 = vunpack.c.h.b16 %v567
        %v577 = vunpack.c.l.b16 %v568
        %v578 = vunpack.c.h.b16 %v568
        %v579 = vunpack.c.l.b16 %v569
        %v580 = vunpack.c.h.b16 %v569
        %v581 = vunpack.c.l.b16 %v570
        %v582 = vunpack.c.h.b16 %v570
        %v583 = vpack.c.b16 %v579, %v575
        %v584 = vpack.c.b16 %v580, %v576
        %v585 = vpack.c.b16 %v581, %v577
        %v586 = vpack.c.b16 %v582, %v578
        %591 = vmatpush.bf16.msra.mxu0 %v451
        %592 = vmatpush.bf16.msra.mxu0 %v450
        %593 = vmatpush.bf16.msra.mxu0 %v449
        %594 = vmatpush.bf16.msra.mxu0 %v448
        %595 = vmatpush.bf16.msra.mxu0 %v447
        %596 = vmatpush.bf16.msra.mxu0 %v446
        %597 = vmatpush.bf16.msra.mxu0 %v445
        %598 = vmatpush.bf16.msra.mxu0 %v444
        %599 = vmatmul.bf16.gmra.mxu0 %v583
        %v600 = vpop.f32.mrf.mxu0
        %v601 = vadd.f32 %v294, %v600
        %v602 = vpop.f32.mrf.mxu0
        %v603 = vadd.f32 %v294, %v602
        %604 = vdwg.mxu0
        %605 = vmatpush.bf16.msra.mxu0 %v459
        %606 = vmatpush.bf16.msra.mxu0 %v458
        %607 = vmatpush.bf16.msra.mxu0 %v457
        %608 = vmatpush.bf16.msra.mxu0 %v456
        %609 = vmatpush.bf16.msra.mxu0 %v455
        %610 = vmatpush.bf16.msra.mxu0 %v454
        %611 = vmatpush.bf16.msra.mxu0 %v453
        %612 = vmatpush.bf16.msra.mxu0 %v452
        %613 = vmatmul.bf16.gmra.mxu0 %v584
        %v614 = vpop.f32.mrf.mxu0
        %v615 = vadd.f32 %v601, %v614
        %v616 = vpop.f32.mrf.mxu0
        %v617 = vadd.f32 %v603, %v616
        %618 = vdwg.mxu0
        %619 = vmatpush.bf16.msra.mxu0 %v467
        %620 = vmatpush.bf16.msra.mxu0 %v466
        %621 = vmatpush.bf16.msra.mxu0 %v465
        %622 = vmatpush.bf16.msra.mxu0 %v464
        %623 = vmatpush.bf16.msra.mxu0 %v463
        %624 = vmatpush.bf16.msra.mxu0 %v462
        %625 = vmatpush.bf16.msra.mxu0 %v461
        %626 = vmatpush.bf16.msra.mxu0 %v460
        %627 = vmatmul.bf16.gmra.mxu0 %v585
        %v628 = vpop.f32.mrf.mxu0
        %v629 = vadd.f32 %v615, %v628
        %v630 = vpop.f32.mrf.mxu0
        %v631 = vadd.f32 %v617, %v630
        %632 = vdwg.mxu0
        %633 = vmatpush.bf16.msra.mxu0 %v475
        %634 = vmatpush.bf16.msra.mxu0 %v474
        %635 = vmatpush.bf16.msra.mxu0 %v473
        %636 = vmatpush.bf16.msra.mxu0 %v472
        %637 = vmatpush.bf16.msra.mxu0 %v471
        %638 = vmatpush.bf16.msra.mxu0 %v470
        %639 = vmatpush.bf16.msra.mxu0 %v469
        %640 = vmatpush.bf16.msra.mxu0 %v468
        %641 = vmatmul.bf16.gmra.mxu0 %v586
        %v642 = vpop.f32.mrf.mxu0
        %v643 = vadd.f32 %v629, %v642
        %v644 = vpop.f32.mrf.mxu0
        %v645 = vadd.f32 %v631, %v644
        %646 = vdwg.mxu0
        %v647 = vmax.f32 %v643, 0.0
        %v648 = vmax.f32 %v645, 0.0
        %v649 = vmax.f32 %v564, %v647
        %v650 = vmax.f32 %v565, %v648
        %s651 = scalar_lea.vmem %s196, 64 [#allocation2]
        %v652 = vld [vmem:[%s651] sm:$0xff]
        %v653 = vld [vmem:[%s651 + $0x8] sm:$0xff]
        %v654 = vld [vmem:[%s651 + $0x10] sm:$0xff]
        %v655 = vld [vmem:[%s651 + $0x18] sm:$0xff]
        %v660 = vunpack.c.l.b16 %v652
        %v661 = vunpack.c.h.b16 %v652
        %v662 = vunpack.c.l.b16 %v653
        %v663 = vunpack.c.h.b16 %v653
        %v664 = vunpack.c.l.b16 %v654
        %v665 = vunpack.c.h.b16 %v654
        %v666 = vunpack.c.l.b16 %v655
        %v667 = vunpack.c.h.b16 %v655
        %v668 = vpack.c.b16 %v664, %v660
        %v669 = vpack.c.b16 %v665, %v661
        %v670 = vpack.c.b16 %v666, %v662
        %v671 = vpack.c.b16 %v667, %v663
        %676 = vmatpush.bf16.msra.mxu0 %v451
        %677 = vmatpush.bf16.msra.mxu0 %v450
        %678 = vmatpush.bf16.msra.mxu0 %v449
        %679 = vmatpush.bf16.msra.mxu0 %v448
        %680 = vmatpush.bf16.msra.mxu0 %v447
        %681 = vmatpush.bf16.msra.mxu0 %v446
        %682 = vmatpush.bf16.msra.mxu0 %v445
        %683 = vmatpush.bf16.msra.mxu0 %v444
        %684 = vmatmul.bf16.gmra.mxu0 %v668
        %v685 = vpop.f32.mrf.mxu0
        %v686 = vadd.f32 %v294, %v685
        %v687 = vpop.f32.mrf.mxu0
        %v688 = vadd.f32 %v294, %v687
        %689 = vdwg.mxu0
        %690 = vmatpush.bf16.msra.mxu0 %v459
        %691 = vmatpush.bf16.msra.mxu0 %v458
        %692 = vmatpush.bf16.msra.mxu0 %v457
        %693 = vmatpush.bf16.msra.mxu0 %v456
        %694 = vmatpush.bf16.msra.mxu0 %v455
        %695 = vmatpush.bf16.msra.mxu0 %v454
        %696 = vmatpush.bf16.msra.mxu0 %v453
        %697 = vmatpush.bf16.msra.mxu0 %v452
        %698 = vmatmul.bf16.gmra.mxu0 %v669
        %v699 = vpop.f32.mrf.mxu0
        %v700 = vadd.f32 %v686, %v699
        %v701 = vpop.f32.mrf.mxu0
        %v702 = vadd.f32 %v688, %v701
        %703 = vdwg.mxu0
        %704 = vmatpush.bf16.msra.mxu0 %v467
        %705 = vmatpush.bf16.msra.mxu0 %v466
        %706 = vmatpush.bf16.msra.mxu0 %v465
        %707 = vmatpush.bf16.msra.mxu0 %v464
        %708 = vmatpush.bf16.msra.mxu0 %v463
        %709 = vmatpush.bf16.msra.mxu0 %v462
        %710 = vmatpush.bf16.msra.mxu0 %v461
        %711 = vmatpush.bf16.msra.mxu0 %v460
        %712 = vmatmul.bf16.gmra.mxu0 %v670
        %v713 = vpop.f32.mrf.mxu0
        %v714 = vadd.f32 %v700, %v713
        %v715 = vpop.f32.mrf.mxu0
        %v716 = vadd.f32 %v702, %v715
        %717 = vdwg.mxu0
        %718 = vmatpush.bf16.msra.mxu0 %v475
        %719 = vmatpush.bf16.msra.mxu0 %v474
        %720 = vmatpush.bf16.msra.mxu0 %v473
        %721 = vmatpush.bf16.msra.mxu0 %v472
        %722 = vmatpush.bf16.msra.mxu0 %v471
        %723 = vmatpush.bf16.msra.mxu0 %v470
        %724 = vmatpush.bf16.msra.mxu0 %v469
        %725 = vmatpush.bf16.msra.mxu0 %v468
        %726 = vmatmul.bf16.gmra.mxu0 %v671
        %v727 = vpop.f32.mrf.mxu0
        %v728 = vadd.f32 %v714, %v727
        %v729 = vpop.f32.mrf.mxu0
        %v730 = vadd.f32 %v716, %v729
        %731 = vdwg.mxu0
        %v732 = vmax.f32 %v728, 0.0
        %v733 = vmax.f32 %v730, 0.0
        %v734 = vmax.f32 %v649, %v732
        %v735 = vmax.f32 %v650, %v733
        %s736 = scalar_lea.vmem %s196, 96 [#allocation2]
        %v737 = vld [vmem:[%s736] sm:$0xff]
        %v738 = vld [vmem:[%s736 + $0x8] sm:$0xff]
        %v739 = vld [vmem:[%s736 + $0x10] sm:$0xff]
        %v740 = vld [vmem:[%s736 + $0x18] sm:$0xff]
        %v745 = vunpack.c.l.b16 %v737
        %v746 = vunpack.c.h.b16 %v737
        %v747 = vunpack.c.l.b16 %v738
        %v748 = vunpack.c.h.b16 %v738
        %v749 = vunpack.c.l.b16 %v739
        %v750 = vunpack.c.h.b16 %v739
        %v751 = vunpack.c.l.b16 %v740
        %v752 = vunpack.c.h.b16 %v740
        %v753 = vpack.c.b16 %v749, %v745
        %v754 = vpack.c.b16 %v750, %v746
        %v755 = vpack.c.b16 %v751, %v747
        %v756 = vpack.c.b16 %v752, %v748
        %761 = vmatpush.bf16.msra.mxu0 %v451
        %762 = vmatpush.bf16.msra.mxu0 %v450
        %763 = vmatpush.bf16.msra.mxu0 %v449
        %764 = vmatpush.bf16.msra.mxu0 %v448
        %765 = vmatpush.bf16.msra.mxu0 %v447
        %766 = vmatpush.bf16.msra.mxu0 %v446
        %767 = vmatpush.bf16.msra.mxu0 %v445
        %768 = vmatpush.bf16.msra.mxu0 %v444
        %769 = vmatmul.bf16.gmra.mxu0 %v753
        %v770 = vpop.f32.mrf.mxu0
        %v771 = vadd.f32 %v294, %v770
        %v772 = vpop.f32.mrf.mxu0
        %v773 = vadd.f32 %v294, %v772
        %774 = vdwg.mxu0
        %775 = vmatpush.bf16.msra.mxu0 %v459
        %776 = vmatpush.bf16.msra.mxu0 %v458
        %777 = vmatpush.bf16.msra.mxu0 %v457
        %778 = vmatpush.bf16.msra.mxu0 %v456
        %779 = vmatpush.bf16.msra.mxu0 %v455
        %780 = vmatpush.bf16.msra.mxu0 %v454
        %781 = vmatpush.bf16.msra.mxu0 %v453
        %782 = vmatpush.bf16.msra.mxu0 %v452
        %783 = vmatmul.bf16.gmra.mxu0 %v754
        %v784 = vpop.f32.mrf.mxu0
        %v785 = vadd.f32 %v771, %v784
        %v786 = vpop.f32.mrf.mxu0
        %v787 = vadd.f32 %v773, %v786
        %788 = vdwg.mxu0
        %789 = vmatpush.bf16.msra.mxu0 %v467
        %790 = vmatpush.bf16.msra.mxu0 %v466
        %791 = vmatpush.bf16.msra.mxu0 %v465
        %792 = vmatpush.bf16.msra.mxu0 %v464
        %793 = vmatpush.bf16.msra.mxu0 %v463
        %794 = vmatpush.bf16.msra.mxu0 %v462
        %795 = vmatpush.bf16.msra.mxu0 %v461
        %796 = vmatpush.bf16.msra.mxu0 %v460
        %797 = vmatmul.bf16.gmra.mxu0 %v755
        %v798 = vpop.f32.mrf.mxu0
        %v799 = vadd.f32 %v785, %v798
        %v800 = vpop.f32.mrf.mxu0
        %v801 = vadd.f32 %v787, %v800
        %802 = vdwg.mxu0
        %803 = vmatpush.bf16.msra.mxu0 %v475
        %804 = vmatpush.bf16.msra.mxu0 %v474
        %805 = vmatpush.bf16.msra.mxu0 %v473
        %806 = vmatpush.bf16.msra.mxu0 %v472
        %807 = vmatpush.bf16.msra.mxu0 %v471
        %808 = vmatpush.bf16.msra.mxu0 %v470
        %809 = vmatpush.bf16.msra.mxu0 %v469
        %810 = vmatpush.bf16.msra.mxu0 %v468
        %811 = vmatmul.bf16.gmra.mxu0 %v756
        %v812 = vpop.f32.mrf.mxu0
        %v813 = vadd.f32 %v799, %v812
        %v814 = vpop.f32.mrf.mxu0
        %v815 = vadd.f32 %v801, %v814
        %816 = vdwg.mxu0
        %v817 = vmax.f32 %v813, 0.0
        %v818 = vmax.f32 %v815, 0.0
        %v819 = vmax.f32 %v734, %v817
        %v820 = vmax.f32 %v735, %v818
        %v821 = vpack.c.bf16 %v819, %v819
        %v822 = vpack.c.bf16 %v820, %v820
        %823 = vst [vmem:[%s222] sm:$0xf] %v821
        %824 = vst [vmem:[%s222 + $0x4] sm:$0xf] %v822
        %s825 = smul.u32 2, %s14
        %p826 = scmp.lt.s32.totalorder %s825, 3
        %s827 = scalar_select %p826, %s825, 3
        %s828 = smul.addr %s827, 4
        %s829 = scalar_lea.vmem %s3, %s828
        // Predicated region
        $region56: #{sparsenet_forward.4} parent=50 // pred_check
          %p830 = pneg %p100
        $region57: #{sparsenet_forward.4} parent=50 // pred_check_branch
          %832 = sbr.rel (%p830) target = $region59
        $region58: #{sparsenet_forward.4} parent=50 // pred_region
          %s833 = smul.u32 2, %s14
        $region59: #{sparsenet_forward.4} parent=50 // pred_fallthru
          _
      $region51: #{sparsenet_forward.4} parent=5 // pred_fallthru
        _
      %p834 = scmp.le.s32.totalorder 2, %s9
      // Predicated region
      $region60: #{sparsenet_forward.4} parent=5 // pred_check
        %p835 = pneg %p834
      $region61: #{sparsenet_forward.4} parent=5 // pred_check_branch
        %837 = sbr.rel (%p835) target = $region63
      $region62: #{sparsenet_forward.4} parent=5 // pred_region
        %s838 = ssub.s32 %s9, 2
        // Predicated region
        $region64: #{sparsenet_forward.4} parent=62 // pred_check
          %p839 = pneg %p106
        $region65: #{sparsenet_forward.4} parent=62 // pred_check_branch
          %841 = sbr.rel (%p839) target = $region67
        $region66: #{sparsenet_forward.4} parent=62 // pred_region
          %s842 = smul.u32 2, %s15
          %p843 = scmp.lt.s32.totalorder %s842, 3
          %s844 = scalar_select %p843, %s842, 3
          %s845 = smul.addr %s844, 4
          %s846 = scalar_lea.vmem %s3, %s845
        $region67: #{sparsenet_forward.4} parent=62 // pred_fallthru
          _
      $region63: #{sparsenet_forward.4} parent=5 // pred_fallthru
        _
    $region6: #{sparsenet_forward.4} parent=1 // loop_footer
      %s13 = sadd.s32 1, %s9
    $region7: #{sparsenet_forward.4} parent=1 // loop_footer_branch
      %8 = sbr.rel target = $region3
    $region8: #{sparsenet_forward.4} parent=1 // loop_exit
      _

// kernel: sparsenet_forward.5
$region0: #{sparsenet_forward.5}
  #allocation0 [shape = 'u32[]', space=smem, size = 0x4, offset = 0x4, fixed_abs, tag = 'smem constant byte address 0x4 - core index']
  #allocation1 [shape = 'u32[72,128]{1,0:T(1,128)}', space=vmem, size = 0x9000, scoped, tag = 'internal scratch']
  %s0 = inlined_call_operand.vmem [shape: bf16[2,2048], index: 0, kind: input, shape index: {}]
  %s1 = inlined_call_operand.vmem [shape: bf16[2048,512], index: 1, kind: input, shape index: {}]
  %s2 = inlined_call_operand.vmem [shape: f32[1,512], index: 2, kind: input, shape index: {}]
  %s3 = inlined_call_operand.vmem [shape: bf16[512,128], index: 3, kind: input, shape index: {}]
  %s4 = inlined_call_operand.vmem [shape: f32[1,128], index: 4, kind: input, shape index: {}]
  %s5 = inlined_call_operand.hbm [shape: f32[2,128], index: 5, kind: output, shape index: {}]
  %s6 = sld [smem:[#allocation0]]
  $region30: #{sparsenet_forward.5} parent=0
    _
  %s8 = ssub.s32 1, %s6
  %s9 = scalar_select 0, %s8, %s6
  $region1: #{sparsenet_forward.5} parent=0
    #allocation2 [shape = 'u8[1024]{0}', space=vmem, size = 0x400, scoped, tag = 'output window, operand 0, single buffered']
    #allocation3 [shape = 's32[1]{0}', space=sflag, size = 0x4, scoped, tag = 'scoped memory for sparsenet_forward.5']
    %10 = vsyncpa [#allocation3], 0
    // Predicated region
    $region2: #{sparsenet_forward.5} parent=1 // pred_check
      _
    $region3: #{sparsenet_forward.5} parent=1 // pred_check_branch
      %12 = sbr.rel (0) target = $region5
    $region4: #{sparsenet_forward.5} parent=1 // pred_region
      _
    $region5: #{sparsenet_forward.5} parent=1 // pred_fallthru
      _
    // Predicated region
    $region6: #{sparsenet_forward.5} parent=1 // pred_check
      _
    $region7: #{sparsenet_forward.5} parent=1 // pred_check_branch
      %14 = sbr.rel (0) target = $region9
    $region8: #{sparsenet_forward.5} parent=1 // pred_region
      _
    $region9: #{sparsenet_forward.5} parent=1 // pred_fallthru
      _
    // Predicated region
    $region10: #{sparsenet_forward.5} parent=1 // pred_check
      _
    $region11: #{sparsenet_forward.5} parent=1 // pred_check_branch
      %16 = sbr.rel (0) target = $region13
    $region12: #{sparsenet_forward.5} parent=1 // pred_region
      _
    $region13: #{sparsenet_forward.5} parent=1 // pred_fallthru
      _
    // Predicated region
    $region14: #{sparsenet_forward.5} parent=1 // pred_check
      _
    $region15: #{sparsenet_forward.5} parent=1 // pred_check_branch
      %18 = sbr.rel (0) target = $region17
    $region16: #{sparsenet_forward.5} parent=1 // pred_region
      _
    $region17: #{sparsenet_forward.5} parent=1 // pred_fallthru
      _
    // Predicated region
    $region18: #{sparsenet_forward.5} parent=1 // pred_check
      _
    $region19: #{sparsenet_forward.5} parent=1 // pred_check_branch
      %20 = sbr.rel (0) target = $region21
    $region20: #{sparsenet_forward.5} parent=1 // pred_region
      _
    $region21: #{sparsenet_forward.5} parent=1 // pred_fallthru
      _
    %v21 = vld [vmem:[%s0] sm:$0xff]
    %v22 = vld [vmem:[%s0 + $0x8] sm:$0xff]
    %v23 = vld [vmem:[%s1] sm:$0xff]
    %v24 = vld [vmem:[%s1 + $0x8] sm:$0xff]
    %v25 = vld [vmem:[%s1 + $0x10] sm:$0xff]
    %v26 = vld [vmem:[%s1 + $0x18] sm:$0xff]
    %v27 = vld [vmem:[%s1 + $0x20] sm:$0xff]
    %v28 = vld [vmem:[%s1 + $0x28] sm:$0xff]
    %v29 = vld [vmem:[%s1 + $0x30] sm:$0xff]
    %v30 = vld [vmem:[%s1 + $0x38] sm:$0xff]
    %v31 = vld [vmem:[%s1 + $0x40] sm:$0xff]
    %v32 = vld [vmem:[%s1 + $0x48] sm:$0xff]
    %v33 = vld [vmem:[%s1 + $0x50] sm:$0xff]
    %v34 = vld [vmem:[%s1 + $0x58] sm:$0xff]
    %v35 = vld [vmem:[%s1 + $0x60] sm:$0xff]
    %v36 = vld [vmem:[%s1 + $0x68] sm:$0xff]
    %v37 = vld [vmem:[%s1 + $0x70] sm:$0xff]
    %v38 = vld [vmem:[%s1 + $0x78] sm:$0xff]
    %v39 = vld [vmem:[%s1 + $0x80] sm:$0xff]
    %v40 = vld [vmem:[%s1 + $0x88] sm:$0xff]
    %v41 = vld [vmem:[%s1 + $0x90] sm:$0xff]
    %v42 = vld [vmem:[%s1 + $0x98] sm:$0xff]
    %v43 = vld [vmem:[%s1 + $0xa0] sm:$0xff]
    %v44 = vld [vmem:[%s1 + $0xa8] sm:$0xff]
    %v45 = vld [vmem:[%s1 + $0xb0] sm:$0xff]
    %v46 = vld [vmem:[%s1 + $0xb8] sm:$0xff]
    %v47 = vld [vmem:[%s1 + $0xc0] sm:$0xff]
    %v48 = vld [vmem:[%s1 + $0xc8] sm:$0xff]
    %v49 = vld [vmem:[%s1 + $0xd0] sm:$0xff]
    %v50 = vld [vmem:[%s1 + $0xd8] sm:$0xff]
    %v51 = vld [vmem:[%s1 + $0xe0] sm:$0xff]
    %v52 = vld [vmem:[%s1 + $0xe8] sm:$0xff]
    %v53 = vld [vmem:[%s1 + $0xf0] sm:$0xff]
    %v54 = vld [vmem:[%s1 + $0xf8] sm:$0xff]
    %v55 = vld [vmem:[%s1 + $0x100] sm:$0xff]
    %v56 = vld [vmem:[%s1 + $0x108] sm:$0xff]
    %v57 = vld [vmem:[%s1 + $0x110] sm:$0xff]
    %v58 = vld [vmem:[%s1 + $0x118] sm:$0xff]
    %v59 = vld [vmem:[%s1 + $0x120] sm:$0xff]
    %v60 = vld [vmem:[%s1 + $0x128] sm:$0xff]
    %v61 = vld [vmem:[%s1 + $0x130] sm:$0xff]
    %v62 = vld [vmem:[%s1 + $0x138] sm:$0xff]
    %v63 = vld [vmem:[%s1 + $0x140] sm:$0xff]
    %v64 = vld [vmem:[%s1 + $0x148] sm:$0xff]
    %v65 = vld [vmem:[%s1 + $0x150] sm:$0xff]
    %v66 = vld [vmem:[%s1 + $0x158] sm:$0xff]
    %v67 = vld [vmem:[%s1 + $0x160] sm:$0xff]
    %v68 = vld [vmem:[%s1 + $0x168] sm:$0xff]
    %v69 = vld [vmem:[%s1 + $0x170] sm:$0xff]
    %v70 = vld [vmem:[%s1 + $0x178] sm:$0xff]
    %v71 = vld [vmem:[%s1 + $0x180] sm:$0xff]
    %v72 = vld [vmem:[%s1 + $0x188] sm:$0xff]
    %v73 = vld [vmem:[%s1 + $0x190] sm:$0xff]
    %v74 = vld [vmem:[%s1 + $0x198] sm:$0xff]
    %v75 = vld [vmem:[%s1 + $0x1a0] sm:$0xff]
    %v76 = vld [vmem:[%s1 + $0x1a8] sm:$0xff]
    %v77 = vld [vmem:[%s1 + $0x1b0] sm:$0xff]
    %v78 = vld [vmem:[%s1 + $0x1b8] sm:$0xff]
    %v79 = vld [vmem:[%s1 + $0x1c0] sm:$0xff]
    %v80 = vld [vmem:[%s1 + $0x1c8] sm:$0xff]
    %v81 = vld [vmem:[%s1 + $0x1d0] sm:$0xff]
    %v82 = vld [vmem:[%s1 + $0x1d8] sm:$0xff]
    %v83 = vld [vmem:[%s1 + $0x1e0] sm:$0xff]
    %v84 = vld [vmem:[%s1 + $0x1e8] sm:$0xff]
    %v85 = vld [vmem:[%s1 + $0x1f0] sm:$0xff]
    %v86 = vld [vmem:[%s1 + $0x1f8] sm:$0xff]
    %v87 = vld [vmem:[%s1 + $0x200] sm:$0xff]
    %v88 = vld [vmem:[%s1 + $0x208] sm:$0xff]
    %v89 = vld [vmem:[%s1 + $0x210] sm:$0xff]
    %v90 = vld [vmem:[%s1 + $0x218] sm:$0xff]
    %v91 = vld [vmem:[%s1 + $0x220] sm:$0xff]
    %v92 = vld [vmem:[%s1 + $0x228] sm:$0xff]
    %v93 = vld [vmem:[%s1 + $0x230] sm:$0xff]
    %v94 = vld [vmem:[%s1 + $0x238] sm:$0xff]
    %v95 = vld [vmem:[%s1 + $0x240] sm:$0xff]
    %v96 = vld [vmem:[%s1 + $0x248] sm:$0xff]
    %v97 = vld [vmem:[%s1 + $0x250] sm:$0xff]
    %v98 = vld [vmem:[%s1 + $0x258] sm:$0xff]
    %v99 = vld [vmem:[%s1 + $0x260] sm:$0xff]
    %v100 = vld [vmem:[%s1 + $0x268] sm:$0xff]
    %v101 = vld [vmem:[%s1 + $0x270] sm:$0xff]
    %v102 = vld [vmem:[%s1 + $0x278] sm:$0xff]
    %v103 = vld [vmem:[%s1 + $0x280] sm:$0xff]
    %v104 = vld [vmem:[%s1 + $0x288] sm:$0xff]
    %v105 = vld [vmem:[%s1 + $0x290] sm:$0xff]
    %v106 = vld [vmem:[%s1 + $0x298] sm:$0xff]
    %v107 = vld [vmem:[%s1 + $0x2a0] sm:$0xff]
    %v108 = vld [vmem:[%s1 + $0x2a8] sm:$0xff]
    %v109 = vld [vmem:[%s1 + $0x2b0] sm:$0xff]
    %v110 = vld [vmem:[%s1 + $0x2b8] sm:$0xff]
    %v111 = vld [vmem:[%s1 + $0x2c0] sm:$0xff]
    %v112 = vld [vmem:[%s1 + $0x2c8] sm:$0xff]
    %v113 = vld [vmem:[%s1 + $0x2d0] sm:$0xff]
    %v114 = vld [vmem:[%s1 + $0x2d8] sm:$0xff]
    %v115 = vld [vmem:[%s1 + $0x2e0] sm:$0xff]
    %v116 = vld [vmem:[%s1 + $0x2e8] sm:$0xff]
    %v117 = vld [vmem:[%s1 + $0x2f0] sm:$0xff]
    %v118 = vld [vmem:[%s1 + $0x2f8] sm:$0xff]
    %v119 = vld [vmem:[%s1 + $0x300] sm:$0xff]
    %v120 = vld [vmem:[%s1 + $0x308] sm:$0xff]
    %v121 = vld [vmem:[%s1 + $0x310] sm:$0xff]
    %v122 = vld [vmem:[%s1 + $0x318] sm:$0xff]
    %v123 = vld [vmem:[%s1 + $0x320] sm:$0xff]
    %v124 = vld [vmem:[%s1 + $0x328] sm:$0xff]
    %v125 = vld [vmem:[%s1 + $0x330] sm:$0xff]
    %v126 = vld [vmem:[%s1 + $0x338] sm:$0xff]
    %v127 = vld [vmem:[%s1 + $0x340] sm:$0xff]
    %v128 = vld [vmem:[%s1 + $0x348] sm:$0xff]
    %v129 = vld [vmem:[%s1 + $0x350] sm:$0xff]
    %v130 = vld [vmem:[%s1 + $0x358] sm:$0xff]
    %v131 = vld [vmem:[%s1 + $0x360] sm:$0xff]
    %v132 = vld [vmem:[%s1 + $0x368] sm:$0xff]
    %v133 = vld [vmem:[%s1 + $0x370] sm:$0xff]
    %v134 = vld [vmem:[%s1 + $0x378] sm:$0xff]
    %v135 = vld [vmem:[%s1 + $0x380] sm:$0xff]
    %v136 = vld [vmem:[%s1 + $0x388] sm:$0xff]
    %v137 = vld [vmem:[%s1 + $0x390] sm:$0xff]
    %v138 = vld [vmem:[%s1 + $0x398] sm:$0xff]
    %v139 = vld [vmem:[%s1 + $0x3a0] sm:$0xff]
    %v140 = vld [vmem:[%s1 + $0x3a8] sm:$0xff]
    %v141 = vld [vmem:[%s1 + $0x3b0] sm:$0xff]
    %v142 = vld [vmem:[%s1 + $0x3b8] sm:$0xff]
    %v143 = vld [vmem:[%s1 + $0x3c0] sm:$0xff]
    %v144 = vld [vmem:[%s1 + $0x3c8] sm:$0xff]
    %v145 = vld [vmem:[%s1 + $0x3d0] sm:$0xff]
    %v146 = vld [vmem:[%s1 + $0x3d8] sm:$0xff]
    %v147 = vld [vmem:[%s1 + $0x3e0] sm:$0xff]
    %v148 = vld [vmem:[%s1 + $0x3e8] sm:$0xff]
    %v149 = vld [vmem:[%s1 + $0x3f0] sm:$0xff]
    %v150 = vld [vmem:[%s1 + $0x3f8] sm:$0xff]
    %v151 = vld [vmem:[%s1 + $0x400] sm:$0xff]
    %v152 = vld [vmem:[%s1 + $0x408] sm:$0xff]
    %v153 = vld [vmem:[%s1 + $0x410] sm:$0xff]
    %v154 = vld [vmem:[%s1 + $0x418] sm:$0xff]
    %v155 = vld [vmem:[%s1 + $0x420] sm:$0xff]
    %v156 = vld [vmem:[%s1 + $0x428] sm:$0xff]
    %v157 = vld [vmem:[%s1 + $0x430] sm:$0xff]
    %v158 = vld [vmem:[%s1 + $0x438] sm:$0xff]
    %v159 = vld [vmem:[%s1 + $0x440] sm:$0xff]
    %v160 = vld [vmem:[%s1 + $0x448] sm:$0xff]
    %v161 = vld [vmem:[%s1 + $0x450] sm:$0xff]
    %v162 = vld [vmem:[%s1 + $0x458] sm:$0xff]
    %v163 = vld [vmem:[%s1 + $0x460] sm:$0xff]
    %v164 = vld [vmem:[%s1 + $0x468] sm:$0xff]
    %v165 = vld [vmem:[%s1 + $0x470] sm:$0xff]
    %v166 = vld [vmem:[%s1 + $0x478] sm:$0xff]
    %v167 = vld [vmem:[%s1 + $0x480] sm:$0xff]
    %v168 = vld [vmem:[%s1 + $0x488] sm:$0xff]
    %v169 = vld [vmem:[%s1 + $0x490] sm:$0xff]
    %v170 = vld [vmem:[%s1 + $0x498] sm:$0xff]
    %v171 = vld [vmem:[%s1 + $0x4a0] sm:$0xff]
    %v172 = vld [vmem:[%s1 + $0x4a8] sm:$0xff]
    %v173 = vld [vmem:[%s1 + $0x4b0] sm:$0xff]
    %v174 = vld [vmem:[%s1 + $0x4b8] sm:$0xff]
    %v175 = vld [vmem:[%s1 + $0x4c0] sm:$0xff]
    %v176 = vld [vmem:[%s1 + $0x4c8] sm:$0xff]
    %v177 = vld [vmem:[%s1 + $0x4d0] sm:$0xff]
    %v178 = vld [vmem:[%s1 + $0x4d8] sm:$0xff]
    %v179 = vld [vmem:[%s1 + $0x4e0] sm:$0xff]
    %v180 = vld [vmem:[%s1 + $0x4e8] sm:$0xff]
    %v181 = vld [vmem:[%s1 + $0x4f0] sm:$0xff]
    %v182 = vld [vmem:[%s1 + $0x4f8] sm:$0xff]
    %v183 = vld [vmem:[%s1 + $0x500] sm:$0xff]
    %v184 = vld [vmem:[%s1 + $0x508] sm:$0xff]
    %v185 = vld [vmem:[%s1 + $0x510] sm:$0xff]
    %v186 = vld [vmem:[%s1 + $0x518] sm:$0xff]
    %v187 = vld [vmem:[%s1 + $0x520] sm:$0xff]
    %v188 = vld [vmem:[%s1 + $0x528] sm:$0xff]
    %v189 = vld [vmem:[%s1 + $0x530] sm:$0xff]
    %v190 = vld [vmem:[%s1 + $0x538] sm:$0xff]
    %v191 = vld [vmem:[%s1 + $0x540] sm:$0xff]
    %v192 = vld [vmem:[%s1 + $0x548] sm:$0xff]
    %v193 = vld [vmem:[%s1 + $0x550] sm:$0xff]
    %v194 = vld [vmem:[%s1 + $0x558] sm:$0xff]
    %v195 = vld [vmem:[%s1 + $0x560] sm:$0xff]
    %v196 = vld [vmem:[%s1 + $0x568] sm:$0xff]
    %v197 = vld [vmem:[%s1 + $0x570] sm:$0xff]
    %v198 = vld [vmem:[%s1 + $0x578] sm:$0xff]
    %v199 = vld [vmem:[%s1 + $0x580] sm:$0xff]
    %v200 = vld [vmem:[%s1 + $0x588] sm:$0xff]
    %v201 = vld [vmem:[%s1 + $0x590] sm:$0xff]
    %v202 = vld [vmem:[%s1 + $0x598] sm:$0xff]
    %v203 = vld [vmem:[%s1 + $0x5a0] sm:$0xff]
    %v204 = vld [vmem:[%s1 + $0x5a8] sm:$0xff]
    %v205 = vld [vmem:[%s1 + $0x5b0] sm:$0xff]
    %v206 = vld [vmem:[%s1 + $0x5b8] sm:$0xff]
    %v207 = vld [vmem:[%s1 + $0x5c0] sm:$0xff]
    %v208 = vld [vmem:[%s1 + $0x5c8] sm:$0xff]
    %v209 = vld [vmem:[%s1 + $0x5d0] sm:$0xff]
    %v210 = vld [vmem:[%s1 + $0x5d8] sm:$0xff]
    %v211 = vld [vmem:[%s1 + $0x5e0] sm:$0xff]
    %v212 = vld [vmem:[%s1 + $0x5e8] sm:$0xff]
    %v213 = vld [vmem:[%s1 + $0x5f0] sm:$0xff]
    %v214 = vld [vmem:[%s1 + $0x5f8] sm:$0xff]
    %v215 = vld [vmem:[%s1 + $0x600] sm:$0xff]
    %v216 = vld [vmem:[%s1 + $0x608] sm:$0xff]
    %v217 = vld [vmem:[%s1 + $0x610] sm:$0xff]
    %v218 = vld [vmem:[%s1 + $0x618] sm:$0xff]
    %v219 = vld [vmem:[%s1 + $0x620] sm:$0xff]
    %v220 = vld [vmem:[%s1 + $0x628] sm:$0xff]
    %v221 = vld [vmem:[%s1 + $0x630] sm:$0xff]
    %v222 = vld [vmem:[%s1 + $0x638] sm:$0xff]
    %v223 = vld [vmem:[%s1 + $0x640] sm:$0xff]
    %v224 = vld [vmem:[%s1 + $0x648] sm:$0xff]
    %v225 = vld [vmem:[%s1 + $0x650] sm:$0xff]
    %v226 = vld [vmem:[%s1 + $0x658] sm:$0xff]
    %v227 = vld [vmem:[%s1 + $0x660] sm:$0xff]
    %v228 = vld [vmem:[%s1 + $0x668] sm:$0xff]
    %v229 = vld [vmem:[%s1 + $0x670] sm:$0xff]
    %v230 = vld [vmem:[%s1 + $0x678] sm:$0xff]
    %v231 = vld [vmem:[%s1 + $0x680] sm:$0xff]
    %v232 = vld [vmem:[%s1 + $0x688] sm:$0xff]
    %v233 = vld [vmem:[%s1 + $0x690] sm:$0xff]
    %v234 = vld [vmem:[%s1 + $0x698] sm:$0xff]
    %v235 = vld [vmem:[%s1 + $0x6a0] sm:$0xff]
    %v236 = vld [vmem:[%s1 + $0x6a8] sm:$0xff]
    %v237 = vld [vmem:[%s1 + $0x6b0] sm:$0xff]
    %v238 = vld [vmem:[%s1 + $0x6b8] sm:$0xff]
    %v239 = vld [vmem:[%s1 + $0x6c0] sm:$0xff]
    %v240 = vld [vmem:[%s1 + $0x6c8] sm:$0xff]
    %v241 = vld [vmem:[%s1 + $0x6d0] sm:$0xff]
    %v242 = vld [vmem:[%s1 + $0x6d8] sm:$0xff]
    %v243 = vld [vmem:[%s1 + $0x6e0] sm:$0xff]
    %v244 = vld [vmem:[%s1 + $0x6e8] sm:$0xff]
    %v245 = vld [vmem:[%s1 + $0x6f0] sm:$0xff]
    %v246 = vld [vmem:[%s1 + $0x6f8] sm:$0xff]
    %v247 = vld [vmem:[%s1 + $0x700] sm:$0xff]
    %v248 = vld [vmem:[%s1 + $0x708] sm:$0xff]
    %v249 = vld [vmem:[%s1 + $0x710] sm:$0xff]
    %v250 = vld [vmem:[%s1 + $0x718] sm:$0xff]
    %v251 = vld [vmem:[%s1 + $0x720] sm:$0xff]
    %v252 = vld [vmem:[%s1 + $0x728] sm:$0xff]
    %v253 = vld [vmem:[%s1 + $0x730] sm:$0xff]
    %v254 = vld [vmem:[%s1 + $0x738] sm:$0xff]
    %v255 = vld [vmem:[%s1 + $0x740] sm:$0xff]
    %v256 = vld [vmem:[%s1 + $0x748] sm:$0xff]
    %v257 = vld [vmem:[%s1 + $0x750] sm:$0xff]
    %v258 = vld [vmem:[%s1 + $0x758] sm:$0xff]
    %v259 = vld [vmem:[%s1 + $0x760] sm:$0xff]
    %v260 = vld [vmem:[%s1 + $0x768] sm:$0xff]
    %v261 = vld [vmem:[%s1 + $0x770] sm:$0xff]
    %v262 = vld [vmem:[%s1 + $0x778] sm:$0xff]
    %v263 = vld [vmem:[%s1 + $0x780] sm:$0xff]
    %v264 = vld [vmem:[%s1 + $0x788] sm:$0xff]
    %v265 = vld [vmem:[%s1 + $0x790] sm:$0xff]
    %v266 = vld [vmem:[%s1 + $0x798] sm:$0xff]
    %v267 = vld [vmem:[%s1 + $0x7a0] sm:$0xff]
    %v268 = vld [vmem:[%s1 + $0x7a8] sm:$0xff]
    %v269 = vld [vmem:[%s1 + $0x7b0] sm:$0xff]
    %v270 = vld [vmem:[%s1 + $0x7b8] sm:$0xff]
    %v271 = vld [vmem:[%s1 + $0x7c0] sm:$0xff]
    %v272 = vld [vmem:[%s1 + $0x7c8] sm:$0xff]
    %v273 = vld [vmem:[%s1 + $0x7d0] sm:$0xff]
    %v274 = vld [vmem:[%s1 + $0x7d8] sm:$0xff]
    %v275 = vld [vmem:[%s1 + $0x7e0] sm:$0xff]
    %v276 = vld [vmem:[%s1 + $0x7e8] sm:$0xff]
    %v277 = vld [vmem:[%s1 + $0x7f0] sm:$0xff]
    %v278 = vld [vmem:[%s1 + $0x7f8] sm:$0xff]
    %v279 = vld [vmem:[%s1 + $0x800] sm:$0xff]
    %v280 = vld [vmem:[%s1 + $0x808] sm:$0xff]
    %v281 = vld [vmem:[%s1 + $0x810] sm:$0xff]
    %v282 = vld [vmem:[%s1 + $0x818] sm:$0xff]
    %v283 = vld [vmem:[%s1 + $0x820] sm:$0xff]
    %v284 = vld [vmem:[%s1 + $0x828] sm:$0xff]
    %v285 = vld [vmem:[%s1 + $0x830] sm:$0xff]
    %v286 = vld [vmem:[%s1 + $0x838] sm:$0xff]
    %v287 = vld [vmem:[%s1 + $0x840] sm:$0xff]
    %v288 = vld [vmem:[%s1 + $0x848] sm:$0xff]
    %v289 = vld [vmem:[%s1 + $0x850] sm:$0xff]
    %v290 = vld [vmem:[%s1 + $0x858] sm:$0xff]
    %v291 = vld [vmem:[%s1 + $0x860] sm:$0xff]
    %v292 = vld [vmem:[%s1 + $0x868] sm:$0xff]
    %v293 = vld [vmem:[%s1 + $0x870] sm:$0xff]
    %v294 = vld [vmem:[%s1 + $0x878] sm:$0xff]
    %v295 = vld [vmem:[%s1 + $0x880] sm:$0xff]
    %v296 = vld [vmem:[%s1 + $0x888] sm:$0xff]
    %v297 = vld [vmem:[%s1 + $0x890] sm:$0xff]
    %v298 = vld [vmem:[%s1 + $0x898] sm:$0xff]
    %v299 = vld [vmem:[%s1 + $0x8a0] sm:$0xff]
    %v300 = vld [vmem:[%s1 + $0x8a8] sm:$0xff]
    %v301 = vld [vmem:[%s1 + $0x8b0] sm:$0xff]
    %v302 = vld [vmem:[%s1 + $0x8b8] sm:$0xff]
    %v303 = vld [vmem:[%s1 + $0x8c0] sm:$0xff]
    %v304 = vld [vmem:[%s1 + $0x8c8] sm:$0xff]
    %v305 = vld [vmem:[%s1 + $0x8d0] sm:$0xff]
    %v306 = vld [vmem:[%s1 + $0x8d8] sm:$0xff]
    %v307 = vld [vmem:[%s1 + $0x8e0] sm:$0xff]
    %v308 = vld [vmem:[%s1 + $0x8e8] sm:$0xff]
    %v309 = vld [vmem:[%s1 + $0x8f0] sm:$0xff]
    %v310 = vld [vmem:[%s1 + $0x8f8] sm:$0xff]
    %v311 = vld [vmem:[%s1 + $0x900] sm:$0xff]
    %v312 = vld [vmem:[%s1 + $0x908] sm:$0xff]
    %v313 = vld [vmem:[%s1 + $0x910] sm:$0xff]
    %v314 = vld [vmem:[%s1 + $0x918] sm:$0xff]
    %v315 = vld [vmem:[%s1 + $0x920] sm:$0xff]
    %v316 = vld [vmem:[%s1 + $0x928] sm:$0xff]
    %v317 = vld [vmem:[%s1 + $0x930] sm:$0xff]
    %v318 = vld [vmem:[%s1 + $0x938] sm:$0xff]
    %v319 = vld [vmem:[%s1 + $0x940] sm:$0xff]
    %v320 = vld [vmem:[%s1 + $0x948] sm:$0xff]
    %v321 = vld [vmem:[%s1 + $0x950] sm:$0xff]
    %v322 = vld [vmem:[%s1 + $0x958] sm:$0xff]
    %v323 = vld [vmem:[%s1 + $0x960] sm:$0xff]
    %v324 = vld [vmem:[%s1 + $0x968] sm:$0xff]
    %v325 = vld [vmem:[%s1 + $0x970] sm:$0xff]
    %v326 = vld [vmem:[%s1 + $0x978] sm:$0xff]
    %v327 = vld [vmem:[%s1 + $0x980] sm:$0xff]
    %v328 = vld [vmem:[%s1 + $0x988] sm:$0xff]
    %v329 = vld [vmem:[%s1 + $0x990] sm:$0xff]
    %v330 = vld [vmem:[%s1 + $0x998] sm:$0xff]
    %v331 = vld [vmem:[%s1 + $0x9a0] sm:$0xff]
    %v332 = vld [vmem:[%s1 + $0x9a8] sm:$0xff]
    %v333 = vld [vmem:[%s1 + $0x9b0] sm:$0xff]
    %v334 = vld [vmem:[%s1 + $0x9b8] sm:$0xff]
    %v335 = vld [vmem:[%s1 + $0x9c0] sm:$0xff]
    %v336 = vld [vmem:[%s1 + $0x9c8] sm:$0xff]
    %v337 = vld [vmem:[%s1 + $0x9d0] sm:$0xff]
    %v338 = vld [vmem:[%s1 + $0x9d8] sm:$0xff]
    %v339 = vld [vmem:[%s1 + $0x9e0] sm:$0xff]
    %v340 = vld [vmem:[%s1 + $0x9e8] sm:$0xff]
    %v341 = vld [vmem:[%s1 + $0x9f0] sm:$0xff]
    %v342 = vld [vmem:[%s1 + $0x9f8] sm:$0xff]
    %v343 = vld [vmem:[%s1 + $0xa00] sm:$0xff]
    %v344 = vld [vmem:[%s1 + $0xa08] sm:$0xff]
    %v345 = vld [vmem:[%s1 + $0xa10] sm:$0xff]
    %v346 = vld [vmem:[%s1 + $0xa18] sm:$0xff]
    %v347 = vld [vmem:[%s1 + $0xa20] sm:$0xff]
    %v348 = vld [vmem:[%s1 + $0xa28] sm:$0xff]
    %v349 = vld [vmem:[%s1 + $0xa30] sm:$0xff]
    %v350 = vld [vmem:[%s1 + $0xa38] sm:$0xff]
    %v351 = vld [vmem:[%s1 + $0xa40] sm:$0xff]
    %v352 = vld [vmem:[%s1 + $0xa48] sm:$0xff]
    %v353 = vld [vmem:[%s1 + $0xa50] sm:$0xff]
    %v354 = vld [vmem:[%s1 + $0xa58] sm:$0xff]
    %v355 = vld [vmem:[%s1 + $0xa60] sm:$0xff]
    %v356 = vld [vmem:[%s1 + $0xa68] sm:$0xff]
    %v357 = vld [vmem:[%s1 + $0xa70] sm:$0xff]
    %v358 = vld [vmem:[%s1 + $0xa78] sm:$0xff]
    %v359 = vld [vmem:[%s1 + $0xa80] sm:$0xff]
    %v360 = vld [vmem:[%s1 + $0xa88] sm:$0xff]
    %v361 = vld [vmem:[%s1 + $0xa90] sm:$0xff]
    %v362 = vld [vmem:[%s1 + $0xa98] sm:$0xff]
    %v363 = vld [vmem:[%s1 + $0xaa0] sm:$0xff]
    %v364 = vld [vmem:[%s1 + $0xaa8] sm:$0xff]
    %v365 = vld [vmem:[%s1 + $0xab0] sm:$0xff]
    %v366 = vld [vmem:[%s1 + $0xab8] sm:$0xff]
    %v367 = vld [vmem:[%s1 + $0xac0] sm:$0xff]
    %v368 = vld [vmem:[%s1 + $0xac8] sm:$0xff]
    %v369 = vld [vmem:[%s1 + $0xad0] sm:$0xff]
    %v370 = vld [vmem:[%s1 + $0xad8] sm:$0xff]
    %v371 = vld [vmem:[%s1 + $0xae0] sm:$0xff]
    %v372 = vld [vmem:[%s1 + $0xae8] sm:$0xff]
    %v373 = vld [vmem:[%s1 + $0xaf0] sm:$0xff]
    %v374 = vld [vmem:[%s1 + $0xaf8] sm:$0xff]
    %v375 = vld [vmem:[%s1 + $0xb00] sm:$0xff]
    %v376 = vld [vmem:[%s1 + $0xb08] sm:$0xff]
    %v377 = vld [vmem:[%s1 + $0xb10] sm:$0xff]
    %v378 = vld [vmem:[%s1 + $0xb18] sm:$0xff]
    %v379 = vld [vmem:[%s1 + $0xb20] sm:$0xff]
    %v380 = vld [vmem:[%s1 + $0xb28] sm:$0xff]
    %v381 = vld [vmem:[%s1 + $0xb30] sm:$0xff]
    %v382 = vld [vmem:[%s1 + $0xb38] sm:$0xff]
    %v383 = vld [vmem:[%s1 + $0xb40] sm:$0xff]
    %v384 = vld [vmem:[%s1 + $0xb48] sm:$0xff]
    %v385 = vld [vmem:[%s1 + $0xb50] sm:$0xff]
    %v386 = vld [vmem:[%s1 + $0xb58] sm:$0xff]
    %v387 = vld [vmem:[%s1 + $0xb60] sm:$0xff]
    %v388 = vld [vmem:[%s1 + $0xb68] sm:$0xff]
    %v389 = vld [vmem:[%s1 + $0xb70] sm:$0xff]
    %v390 = vld [vmem:[%s1 + $0xb78] sm:$0xff]
    %v391 = vld [vmem:[%s1 + $0xb80] sm:$0xff]
    %v392 = vld [vmem:[%s1 + $0xb88] sm:$0xff]
    %v393 = vld [vmem:[%s1 + $0xb90] sm:$0xff]
    %v394 = vld [vmem:[%s1 + $0xb98] sm:$0xff]
    %v395 = vld [vmem:[%s1 + $0xba0] sm:$0xff]
    %v396 = vld [vmem:[%s1 + $0xba8] sm:$0xff]
    %v397 = vld [vmem:[%s1 + $0xbb0] sm:$0xff]
    %v398 = vld [vmem:[%s1 + $0xbb8] sm:$0xff]
    %v399 = vld [vmem:[%s1 + $0xbc0] sm:$0xff]
    %v400 = vld [vmem:[%s1 + $0xbc8] sm:$0xff]
    %v401 = vld [vmem:[%s1 + $0xbd0] sm:$0xff]
    %v402 = vld [vmem:[%s1 + $0xbd8] sm:$0xff]
    %v403 = vld [vmem:[%s1 + $0xbe0] sm:$0xff]
    %v404 = vld [vmem:[%s1 + $0xbe8] sm:$0xff]
    %v405 = vld [vmem:[%s1 + $0xbf0] sm:$0xff]
    %v406 = vld [vmem:[%s1 + $0xbf8] sm:$0xff]
    %v407 = vld [vmem:[%s1 + $0xc00] sm:$0xff]
    %v408 = vld [vmem:[%s1 + $0xc08] sm:$0xff]
    %v409 = vld [vmem:[%s1 + $0xc10] sm:$0xff]
    %v410 = vld [vmem:[%s1 + $0xc18] sm:$0xff]
    %v411 = vld [vmem:[%s1 + $0xc20] sm:$0xff]
    %v412 = vld [vmem:[%s1 + $0xc28] sm:$0xff]
    %v413 = vld [vmem:[%s1 + $0xc30] sm:$0xff]
    %v414 = vld [vmem:[%s1 + $0xc38] sm:$0xff]
    %v415 = vld [vmem:[%s1 + $0xc40] sm:$0xff]
    %v416 = vld [vmem:[%s1 + $0xc48] sm:$0xff]
    %v417 = vld [vmem:[%s1 + $0xc50] sm:$0xff]
    %v418 = vld [vmem:[%s1 + $0xc58] sm:$0xff]
    %v419 = vld [vmem:[%s1 + $0xc60] sm:$0xff]
    %v420 = vld [vmem:[%s1 + $0xc68] sm:$0xff]
    %v421 = vld [vmem:[%s1 + $0xc70] sm:$0xff]
    %v422 = vld [vmem:[%s1 + $0xc78] sm:$0xff]
    %v423 = vld [vmem:[%s1 + $0xc80] sm:$0xff]
    %v424 = vld [vmem:[%s1 + $0xc88] sm:$0xff]
    %v425 = vld [vmem:[%s1 + $0xc90] sm:$0xff]
    %v426 = vld [vmem:[%s1 + $0xc98] sm:$0xff]
    %v427 = vld [vmem:[%s1 + $0xca0] sm:$0xff]
    %v428 = vld [vmem:[%s1 + $0xca8] sm:$0xff]
    %v429 = vld [vmem:[%s1 + $0xcb0] sm:$0xff]
    %v430 = vld [vmem:[%s1 + $0xcb8] sm:$0xff]
    %v431 = vld [vmem:[%s1 + $0xcc0] sm:$0xff]
    %v432 = vld [vmem:[%s1 + $0xcc8] sm:$0xff]
    %v433 = vld [vmem:[%s1 + $0xcd0] sm:$0xff]
    %v434 = vld [vmem:[%s1 + $0xcd8] sm:$0xff]
    %v435 = vld [vmem:[%s1 + $0xce0] sm:$0xff]
    %v436 = vld [vmem:[%s1 + $0xce8] sm:$0xff]
    %v437 = vld [vmem:[%s1 + $0xcf0] sm:$0xff]
    %v438 = vld [vmem:[%s1 + $0xcf8] sm:$0xff]
    %v439 = vld [vmem:[%s1 + $0xd00] sm:$0xff]
    %v440 = vld [vmem:[%s1 + $0xd08] sm:$0xff]
    %v441 = vld [vmem:[%s1 + $0xd10] sm:$0xff]
    %v442 = vld [vmem:[%s1 + $0xd18] sm:$0xff]
    %v443 = vld [vmem:[%s1 + $0xd20] sm:$0xff]
    %v444 = vld [vmem:[%s1 + $0xd28] sm:$0xff]
    %v445 = vld [vmem:[%s1 + $0xd30] sm:$0xff]
    %v446 = vld [vmem:[%s1 + $0xd38] sm:$0xff]
    %v447 = vld [vmem:[%s1 + $0xd40] sm:$0xff]
    %v448 = vld [vmem:[%s1 + $0xd48] sm:$0xff]
    %v449 = vld [vmem:[%s1 + $0xd50] sm:$0xff]
    %v450 = vld [vmem:[%s1 + $0xd58] sm:$0xff]
    %v451 = vld [vmem:[%s1 + $0xd60] sm:$0xff]
    %v452 = vld [vmem:[%s1 + $0xd68] sm:$0xff]
    %v453 = vld [vmem:[%s1 + $0xd70] sm:$0xff]
    %v454 = vld [vmem:[%s1 + $0xd78] sm:$0xff]
    %v455 = vld [vmem:[%s1 + $0xd80] sm:$0xff]
    %v456 = vld [vmem:[%s1 + $0xd88] sm:$0xff]
    %v457 = vld [vmem:[%s1 + $0xd90] sm:$0xff]
    %v458 = vld [vmem:[%s1 + $0xd98] sm:$0xff]
    %v459 = vld [vmem:[%s1 + $0xda0] sm:$0xff]
    %v460 = vld [vmem:[%s1 + $0xda8] sm:$0xff]
    %v461 = vld [vmem:[%s1 + $0xdb0] sm:$0xff]
    %v462 = vld [vmem:[%s1 + $0xdb8] sm:$0xff]
    %v463 = vld [vmem:[%s1 + $0xdc0] sm:$0xff]
    %v464 = vld [vmem:[%s1 + $0xdc8] sm:$0xff]
    %v465 = vld [vmem:[%s1 + $0xdd0] sm:$0xff]
    %v466 = vld [vmem:[%s1 + $0xdd8] sm:$0xff]
    %v467 = vld [vmem:[%s1 + $0xde0] sm:$0xff]
    %v468 = vld [vmem:[%s1 + $0xde8] sm:$0xff]
    %v469 = vld [vmem:[%s1 + $0xdf0] sm:$0xff]
    %v470 = vld [vmem:[%s1 + $0xdf8] sm:$0xff]
    %v471 = vld [vmem:[%s1 + $0xe00] sm:$0xff]
    %v472 = vld [vmem:[%s1 + $0xe08] sm:$0xff]
    %v473 = vld [vmem:[%s1 + $0xe10] sm:$0xff]
    %v474 = vld [vmem:[%s1 + $0xe18] sm:$0xff]
    %v475 = vld [vmem:[%s1 + $0xe20] sm:$0xff]
    %v476 = vld [vmem:[%s1 + $0xe28] sm:$0xff]
    %v477 = vld [vmem:[%s1 + $0xe30] sm:$0xff]
    %v478 = vld [vmem:[%s1 + $0xe38] sm:$0xff]
    %v479 = vld [vmem:[%s1 + $0xe40] sm:$0xff]
    %v480 = vld [vmem:[%s1 + $0xe48] sm:$0xff]
    %v481 = vld [vmem:[%s1 + $0xe50] sm:$0xff]
    %v482 = vld [vmem:[%s1 + $0xe58] sm:$0xff]
    %v483 = vld [vmem:[%s1 + $0xe60] sm:$0xff]
    %v484 = vld [vmem:[%s1 + $0xe68] sm:$0xff]
    %v485 = vld [vmem:[%s1 + $0xe70] sm:$0xff]
    %v486 = vld [vmem:[%s1 + $0xe78] sm:$0xff]
    %v487 = vld [vmem:[%s1 + $0xe80] sm:$0xff]
    %v488 = vld [vmem:[%s1 + $0xe88] sm:$0xff]
    %v489 = vld [vmem:[%s1 + $0xe90] sm:$0xff]
    %v490 = vld [vmem:[%s1 + $0xe98] sm:$0xff]
    %v491 = vld [vmem:[%s1 + $0xea0] sm:$0xff]
    %v492 = vld [vmem:[%s1 + $0xea8] sm:$0xff]
    %v493 = vld [vmem:[%s1 + $0xeb0] sm:$0xff]
    %v494 = vld [vmem:[%s1 + $0xeb8] sm:$0xff]
    %v495 = vld [vmem:[%s1 + $0xec0] sm:$0xff]
    %v496 = vld [vmem:[%s1 + $0xec8] sm:$0xff]
    %v497 = vld [vmem:[%s1 + $0xed0] sm:$0xff]
    %v498 = vld [vmem:[%s1 + $0xed8] sm:$0xff]
    %v499 = vld [vmem:[%s1 + $0xee0] sm:$0xff]
    %v500 = vld [vmem:[%s1 + $0xee8] sm:$0xff]
    %v501 = vld [vmem:[%s1 + $0xef0] sm:$0xff]
    %v502 = vld [vmem:[%s1 + $0xef8] sm:$0xff]
    %v503 = vld [vmem:[%s1 + $0xf00] sm:$0xff]
    %v504 = vld [vmem:[%s1 + $0xf08] sm:$0xff]
    %v505 = vld [vmem:[%s1 + $0xf10] sm:$0xff]
    %v506 = vld [vmem:[%s1 + $0xf18] sm:$0xff]
    %v507 = vld [vmem:[%s1 + $0xf20] sm:$0xff]
    %v508 = vld [vmem:[%s1 + $0xf28] sm:$0xff]
    %v509 = vld [vmem:[%s1 + $0xf30] sm:$0xff]
    %v510 = vld [vmem:[%s1 + $0xf38] sm:$0xff]
    %v511 = vld [vmem:[%s1 + $0xf40] sm:$0xff]
    %v512 = vld [vmem:[%s1 + $0xf48] sm:$0xff]
    %v513 = vld [vmem:[%s1 + $0xf50] sm:$0xff]
    %v514 = vld [vmem:[%s1 + $0xf58] sm:$0xff]
    %v515 = vld [vmem:[%s1 + $0xf60] sm:$0xff]
    %v516 = vld [vmem:[%s1 + $0xf68] sm:$0xff]
    %v517 = vld [vmem:[%s1 + $0xf70] sm:$0xff]
    %v518 = vld [vmem:[%s1 + $0xf78] sm:$0xff]
    %v519 = vld [vmem:[%s1 + $0xf80] sm:$0xff]
    %v520 = vld [vmem:[%s1 + $0xf88] sm:$0xff]
    %v521 = vld [vmem:[%s1 + $0xf90] sm:$0xff]
    %v522 = vld [vmem:[%s1 + $0xf98] sm:$0xff]
    %v523 = vld [vmem:[%s1 + $0xfa0] sm:$0xff]
    %v524 = vld [vmem:[%s1 + $0xfa8] sm:$0xff]
    %v525 = vld [vmem:[%s1 + $0xfb0] sm:$0xff]
    %v526 = vld [vmem:[%s1 + $0xfb8] sm:$0xff]
    %v527 = vld [vmem:[%s1 + $0xfc0] sm:$0xff]
    %v528 = vld [vmem:[%s1 + $0xfc8] sm:$0xff]
    %v529 = vld [vmem:[%s1 + $0xfd0] sm:$0xff]
    %v530 = vld [vmem:[%s1 + $0xfd8] sm:$0xff]
    %v531 = vld [vmem:[%s1 + $0xfe0] sm:$0xff]
    %v532 = vld [vmem:[%s1 + $0xfe8] sm:$0xff]
    %v533 = vld [vmem:[%s1 + $0xff0] sm:$0xff]
    %v534 = vld [vmem:[%s1 + $0xff8] sm:$0xff]
    %v535 = vld [vmem:[%s2] sm:$0xf]
    %v537 = vperm.slane %v535, 0
    %v538 = vperm.slane %v535, 1
    %v539 = vperm.slane %v535, 2
    %v540 = vperm.slane %v535, 3
    %546 = vst [vmem:[#allocation1] ss:$9 sm:$0xff] %v21
    %v547 = vld [vmem:[#allocation1] sm:$0xff]
    %v548 = vld [vmem:[#allocation1 + $0x9] sm:$0xff]
    %v549 = vld [vmem:[#allocation1 + $0x12] sm:$0xff]
    %v550 = vld [vmem:[#allocation1 + $0x1b] sm:$0xff]
    %v551 = vld [vmem:[#allocation1 + $0x24] sm:$0xff]
    %v552 = vld [vmem:[#allocation1 + $0x2d] sm:$0xff]
    %v553 = vld [vmem:[#allocation1 + $0x36] sm:$0xff]
    %v554 = vld [vmem:[#allocation1 + $0x3f] sm:$0xff]
    %556 = vst [vmem:[#allocation1] ss:$9 sm:$0xff] %v22
    %v557 = vld [vmem:[#allocation1] sm:$0xff]
    %v558 = vld [vmem:[#allocation1 + $0x9] sm:$0xff]
    %v559 = vld [vmem:[#allocation1 + $0x12] sm:$0xff]
    %v560 = vld [vmem:[#allocation1 + $0x1b] sm:$0xff]
    %v561 = vld [vmem:[#allocation1 + $0x24] sm:$0xff]
    %v562 = vld [vmem:[#allocation1 + $0x2d] sm:$0xff]
    %v563 = vld [vmem:[#allocation1 + $0x36] sm:$0xff]
    %v564 = vld [vmem:[#allocation1 + $0x3f] sm:$0xff]
    %v1093 = vunpack.c.l.b16 %v23
    %v1094 = vunpack.c.h.b16 %v23
    %v1095 = vunpack.c.l.b16 %v24
    %v1096 = vunpack.c.h.b16 %v24
    %v1097 = vunpack.c.l.b16 %v25
    %v1098 = vunpack.c.h.b16 %v25
    %v1099 = vunpack.c.l.b16 %v26
    %v1100 = vunpack.c.h.b16 %v26
    %v1101 = vunpack.c.l.b16 %v27
    %v1102 = vunpack.c.h.b16 %v27
    %v1103 = vunpack.c.l.b16 %v28
    %v1104 = vunpack.c.h.b16 %v28
    %v1105 = vunpack.c.l.b16 %v29
    %v1106 = vunpack.c.h.b16 %v29
    %v1107 = vunpack.c.l.b16 %v30
    %v1108 = vunpack.c.h.b16 %v30
    %v1109 = vunpack.c.l.b16 %v31
    %v1110 = vunpack.c.h.b16 %v31
    %v1111 = vunpack.c.l.b16 %v32
    %v1112 = vunpack.c.h.b16 %v32
    %v1113 = vunpack.c.l.b16 %v33
    %v1114 = vunpack.c.h.b16 %v33
    %v1115 = vunpack.c.l.b16 %v34
    %v1116 = vunpack.c.h.b16 %v34
    %v1117 = vunpack.c.l.b16 %v35
    %v1118 = vunpack.c.h.b16 %v35
    %v1119 = vunpack.c.l.b16 %v36
    %v1120 = vunpack.c.h.b16 %v36
    %v1121 = vunpack.c.l.b16 %v37
    %v1122 = vunpack.c.h.b16 %v37
    %v1123 = vunpack.c.l.b16 %v38
    %v1124 = vunpack.c.h.b16 %v38
    %v1125 = vunpack.c.l.b16 %v39
    %v1126 = vunpack.c.h.b16 %v39
    %v1127 = vunpack.c.l.b16 %v40
    %v1128 = vunpack.c.h.b16 %v40
    %v1129 = vunpack.c.l.b16 %v41
    %v1130 = vunpack.c.h.b16 %v41
    %v1131 = vunpack.c.l.b16 %v42
    %v1132 = vunpack.c.h.b16 %v42
    %v1133 = vunpack.c.l.b16 %v43
    %v1134 = vunpack.c.h.b16 %v43
    %v1135 = vunpack.c.l.b16 %v44
    %v1136 = vunpack.c.h.b16 %v44
    %v1137 = vunpack.c.l.b16 %v45
    %v1138 = vunpack.c.h.b16 %v45
    %v1139 = vunpack.c.l.b16 %v46
    %v1140 = vunpack.c.h.b16 %v46
    %v1141 = vunpack.c.l.b16 %v47
    %v1142 = vunpack.c.h.b16 %v47
    %v1143 = vunpack.c.l.b16 %v48
    %v1144 = vunpack.c.h.b16 %v48
    %v1145 = vunpack.c.l.b16 %v49
    %v1146 = vunpack.c.h.b16 %v49
    %v1147 = vunpack.c.l.b16 %v50
    %v1148 = vunpack.c.h.b16 %v50
    %v1149 = vunpack.c.l.b16 %v51
    %v1150 = vunpack.c.h.b16 %v51
    %v1151 = vunpack.c.l.b16 %v52
    %v1152 = vunpack.c.h.b16 %v52
    %v1153 = vunpack.c.l.b16 %v53
    %v1154 = vunpack.c.h.b16 %v53
    %v1155 = vunpack.c.l.b16 %v54
    %v1156 = vunpack.c.h.b16 %v54
    %v1157 = vunpack.c.l.b16 %v55
    %v1158 = vunpack.c.h.b16 %v55
    %v1159 = vunpack.c.l.b16 %v56
    %v1160 = vunpack.c.h.b16 %v56
    %v1161 = vunpack.c.l.b16 %v57
    %v1162 = vunpack.c.h.b16 %v57
    %v1163 = vunpack.c.l.b16 %v58
    %v1164 = vunpack.c.h.b16 %v58
    %v1165 = vunpack.c.l.b16 %v59
    %v1166 = vunpack.c.h.b16 %v59
    %v1167 = vunpack.c.l.b16 %v60
    %v1168 = vunpack.c.h.b16 %v60
    %v1169 = vunpack.c.l.b16 %v61
    %v1170 = vunpack.c.h.b16 %v61
    %v1171 = vunpack.c.l.b16 %v62
    %v1172 = vunpack.c.h.b16 %v62
    %v1173 = vunpack.c.l.b16 %v63
    %v1174 = vunpack.c.h.b16 %v63
    %v1175 = vunpack.c.l.b16 %v64
    %v1176 = vunpack.c.h.b16 %v64
    %v1177 = vunpack.c.l.b16 %v65
    %v1178 = vunpack.c.h.b16 %v65
    %v1179 = vunpack.c.l.b16 %v66
    %v1180 = vunpack.c.h.b16 %v66
    %v1181 = vunpack.c.l.b16 %v67
    %v1182 = vunpack.c.h.b16 %v67
    %v1183 = vunpack.c.l.b16 %v68
    %v1184 = vunpack.c.h.b16 %v68
    %v1185 = vunpack.c.l.b16 %v69
    %v1186 = vunpack.c.h.b16 %v69
    %v1187 = vunpack.c.l.b16 %v70
    %v1188 = vunpack.c.h.b16 %v70
    %v1189 = vunpack.c.l.b16 %v71
    %v1190 = vunpack.c.h.b16 %v71
    %v1191 = vunpack.c.l.b16 %v72
    %v1192 = vunpack.c.h.b16 %v72
    %v1193 = vunpack.c.l.b16 %v73
    %v1194 = vunpack.c.h.b16 %v73
    %v1195 = vunpack.c.l.b16 %v74
    %v1196 = vunpack.c.h.b16 %v74
    %v1197 = vunpack.c.l.b16 %v75
    %v1198 = vunpack.c.h.b16 %v75
    %v1199 = vunpack.c.l.b16 %v76
    %v1200 = vunpack.c.h.b16 %v76
    %v1201 = vunpack.c.l.b16 %v77
    %v1202 = vunpack.c.h.b16 %v77
    %v1203 = vunpack.c.l.b16 %v78
    %v1204 = vunpack.c.h.b16 %v78
    %v1205 = vunpack.c.l.b16 %v79
    %v1206 = vunpack.c.h.b16 %v79
    %v1207 = vunpack.c.l.b16 %v80
    %v1208 = vunpack.c.h.b16 %v80
    %v1209 = vunpack.c.l.b16 %v81
    %v1210 = vunpack.c.h.b16 %v81
    %v1211 = vunpack.c.l.b16 %v82
    %v1212 = vunpack.c.h.b16 %v82
    %v1213 = vunpack.c.l.b16 %v83
    %v1214 = vunpack.c.h.b16 %v83
    %v1215 = vunpack.c.l.b16 %v84
    %v1216 = vunpack.c.h.b16 %v84
    %v1217 = vunpack.c.l.b16 %v85
    %v1218 = vunpack.c.h.b16 %v85
    %v1219 = vunpack.c.l.b16 %v86
    %v1220 = vunpack.c.h.b16 %v86
    %v1221 = vunpack.c.l.b16 %v87
    %v1222 = vunpack.c.h.b16 %v87
    %v1223 = vunpack.c.l.b16 %v88
    %v1224 = vunpack.c.h.b16 %v88
    %v1225 = vunpack.c.l.b16 %v89
    %v1226 = vunpack.c.h.b16 %v89
    %v1227 = vunpack.c.l.b16 %v90
    %v1228 = vunpack.c.h.b16 %v90
    %v1229 = vunpack.c.l.b16 %v91
    %v1230 = vunpack.c.h.b16 %v91
    %v1231 = vunpack.c.l.b16 %v92
    %v1232 = vunpack.c.h.b16 %v92
    %v1233 = vunpack.c.l.b16 %v93
    %v1234 = vunpack.c.h.b16 %v93
    %v1235 = vunpack.c.l.b16 %v94
    %v1236 = vunpack.c.h.b16 %v94
    %v1237 = vunpack.c.l.b16 %v95
    %v1238 = vunpack.c.h.b16 %v95
    %v1239 = vunpack.c.l.b16 %v96
    %v1240 = vunpack.c.h.b16 %v96
    %v1241 = vunpack.c.l.b16 %v97
    %v1242 = vunpack.c.h.b16 %v97
    %v1243 = vunpack.c.l.b16 %v98
    %v1244 = vunpack.c.h.b16 %v98
    %v1245 = vunpack.c.l.b16 %v99
    %v1246 = vunpack.c.h.b16 %v99
    %v1247 = vunpack.c.l.b16 %v100
    %v1248 = vunpack.c.h.b16 %v100
    %v1249 = vunpack.c.l.b16 %v101
    %v1250 = vunpack.c.h.b16 %v101
    %v1251 = vunpack.c.l.b16 %v102
    %v1252 = vunpack.c.h.b16 %v102
    %v1253 = vunpack.c.l.b16 %v103
    %v1254 = vunpack.c.h.b16 %v103
    %v1255 = vunpack.c.l.b16 %v104
    %v1256 = vunpack.c.h.b16 %v104
    %v1257 = vunpack.c.l.b16 %v105
    %v1258 = vunpack.c.h.b16 %v105
    %v1259 = vunpack.c.l.b16 %v106
    %v1260 = vunpack.c.h.b16 %v106
    %v1261 = vunpack.c.l.b16 %v107
    %v1262 = vunpack.c.h.b16 %v107
    %v1263 = vunpack.c.l.b16 %v108
    %v1264 = vunpack.c.h.b16 %v108
    %v1265 = vunpack.c.l.b16 %v109
    %v1266 = vunpack.c.h.b16 %v109
    %v1267 = vunpack.c.l.b16 %v110
    %v1268 = vunpack.c.h.b16 %v110
    %v1269 = vunpack.c.l.b16 %v111
    %v1270 = vunpack.c.h.b16 %v111
    %v1271 = vunpack.c.l.b16 %v112
    %v1272 = vunpack.c.h.b16 %v112
    %v1273 = vunpack.c.l.b16 %v113
    %v1274 = vunpack.c.h.b16 %v113
    %v1275 = vunpack.c.l.b16 %v114
    %v1276 = vunpack.c.h.b16 %v114
    %v1277 = vunpack.c.l.b16 %v115
    %v1278 = vunpack.c.h.b16 %v115
    %v1279 = vunpack.c.l.b16 %v116
    %v1280 = vunpack.c.h.b16 %v116
    %v1281 = vunpack.c.l.b16 %v117
    %v1282 = vunpack.c.h.b16 %v117
    %v1283 = vunpack.c.l.b16 %v118
    %v1284 = vunpack.c.h.b16 %v118
    %v1285 = vunpack.c.l.b16 %v119
    %v1286 = vunpack.c.h.b16 %v119
    %v1287 = vunpack.c.l.b16 %v120
    %v1288 = vunpack.c.h.b16 %v120
    %v1289 = vunpack.c.l.b16 %v121
    %v1290 = vunpack.c.h.b16 %v121
    %v1291 = vunpack.c.l.b16 %v122
    %v1292 = vunpack.c.h.b16 %v122
    %v1293 = vunpack.c.l.b16 %v123
    %v1294 = vunpack.c.h.b16 %v123
    %v1295 = vunpack.c.l.b16 %v124
    %v1296 = vunpack.c.h.b16 %v124
    %v1297 = vunpack.c.l.b16 %v125
    %v1298 = vunpack.c.h.b16 %v125
    %v1299 = vunpack.c.l.b16 %v126
    %v1300 = vunpack.c.h.b16 %v126
    %v1301 = vunpack.c.l.b16 %v127
    %v1302 = vunpack.c.h.b16 %v127
    %v1303 = vunpack.c.l.b16 %v128
    %v1304 = vunpack.c.h.b16 %v128
    %v1305 = vunpack.c.l.b16 %v129
    %v1306 = vunpack.c.h.b16 %v129
    %v1307 = vunpack.c.l.b16 %v130
    %v1308 = vunpack.c.h.b16 %v130
    %v1309 = vunpack.c.l.b16 %v131
    %v1310 = vunpack.c.h.b16 %v131
    %v1311 = vunpack.c.l.b16 %v132
    %v1312 = vunpack.c.h.b16 %v132
    %v1313 = vunpack.c.l.b16 %v133
    %v1314 = vunpack.c.h.b16 %v133
    %v1315 = vunpack.c.l.b16 %v134
    %v1316 = vunpack.c.h.b16 %v134
    %v1317 = vunpack.c.l.b16 %v135
    %v1318 = vunpack.c.h.b16 %v135
    %v1319 = vunpack.c.l.b16 %v136
    %v1320 = vunpack.c.h.b16 %v136
    %v1321 = vunpack.c.l.b16 %v137
    %v1322 = vunpack.c.h.b16 %v137
    %v1323 = vunpack.c.l.b16 %v138
    %v1324 = vunpack.c.h.b16 %v138
    %v1325 = vunpack.c.l.b16 %v139
    %v1326 = vunpack.c.h.b16 %v139
    %v1327 = vunpack.c.l.b16 %v140
    %v1328 = vunpack.c.h.b16 %v140
    %v1329 = vunpack.c.l.b16 %v141
    %v1330 = vunpack.c.h.b16 %v141
    %v1331 = vunpack.c.l.b16 %v142
    %v1332 = vunpack.c.h.b16 %v142
    %v1333 = vunpack.c.l.b16 %v143
    %v1334 = vunpack.c.h.b16 %v143
    %v1335 = vunpack.c.l.b16 %v144
    %v1336 = vunpack.c.h.b16 %v144
    %v1337 = vunpack.c.l.b16 %v145
    %v1338 = vunpack.c.h.b16 %v145
    %v1339 = vunpack.c.l.b16 %v146
    %v1340 = vunpack.c.h.b16 %v146
    %v1341 = vunpack.c.l.b16 %v147
    %v1342 = vunpack.c.h.b16 %v147
    %v1343 = vunpack.c.l.b16 %v148
    %v1344 = vunpack.c.h.b16 %v148
    %v1345 = vunpack.c.l.b16 %v149
    %v1346 = vunpack.c.h.b16 %v149
    %v1347 = vunpack.c.l.b16 %v150
    %v1348 = vunpack.c.h.b16 %v150
    %v1349 = vunpack.c.l.b16 %v151
    %v1350 = vunpack.c.h.b16 %v151
    %v1351 = vunpack.c.l.b16 %v152
    %v1352 = vunpack.c.h.b16 %v152
    %v1353 = vunpack.c.l.b16 %v153
    %v1354 = vunpack.c.h.b16 %v153
    %v1355 = vunpack.c.l.b16 %v154
    %v1356 = vunpack.c.h.b16 %v154
    %v1357 = vunpack.c.l.b16 %v155
    %v1358 = vunpack.c.h.b16 %v155
    %v1359 = vunpack.c.l.b16 %v156
    %v1360 = vunpack.c.h.b16 %v156
    %v1361 = vunpack.c.l.b16 %v157
    %v1362 = vunpack.c.h.b16 %v157
    %v1363 = vunpack.c.l.b16 %v158
    %v1364 = vunpack.c.h.b16 %v158
    %v1365 = vunpack.c.l.b16 %v159
    %v1366 = vunpack.c.h.b16 %v159
    %v1367 = vunpack.c.l.b16 %v160
    %v1368 = vunpack.c.h.b16 %v160
    %v1369 = vunpack.c.l.b16 %v161
    %v1370 = vunpack.c.h.b16 %v161
    %v1371 = vunpack.c.l.b16 %v162
    %v1372 = vunpack.c.h.b16 %v162
    %v1373 = vunpack.c.l.b16 %v163
    %v1374 = vunpack.c.h.b16 %v163
    %v1375 = vunpack.c.l.b16 %v164
    %v1376 = vunpack.c.h.b16 %v164
    %v1377 = vunpack.c.l.b16 %v165
    %v1378 = vunpack.c.h.b16 %v165
    %v1379 = vunpack.c.l.b16 %v166
    %v1380 = vunpack.c.h.b16 %v166
    %v1381 = vunpack.c.l.b16 %v167
    %v1382 = vunpack.c.h.b16 %v167
    %v1383 = vunpack.c.l.b16 %v168
    %v1384 = vunpack.c.h.b16 %v168
    %v1385 = vunpack.c.l.b16 %v169
    %v1386 = vunpack.c.h.b16 %v169
    %v1387 = vunpack.c.l.b16 %v170
    %v1388 = vunpack.c.h.b16 %v170
    %v1389 = vunpack.c.l.b16 %v171
    %v1390 = vunpack.c.h.b16 %v171
    %v1391 = vunpack.c.l.b16 %v172
    %v1392 = vunpack.c.h.b16 %v172
    %v1393 = vunpack.c.l.b16 %v173
    %v1394 = vunpack.c.h.b16 %v173
    %v1395 = vunpack.c.l.b16 %v174
    %v1396 = vunpack.c.h.b16 %v174
    %v1397 = vunpack.c.l.b16 %v175
    %v1398 = vunpack.c.h.b16 %v175
    %v1399 = vunpack.c.l.b16 %v176
    %v1400 = vunpack.c.h.b16 %v176
    %v1401 = vunpack.c.l.b16 %v177
    %v1402 = vunpack.c.h.b16 %v177
    %v1403 = vunpack.c.l.b16 %v178
    %v1404 = vunpack.c.h.b16 %v178
    %v1405 = vunpack.c.l.b16 %v179
    %v1406 = vunpack.c.h.b16 %v179
    %v1407 = vunpack.c.l.b16 %v180
    %v1408 = vunpack.c.h.b16 %v180
    %v1409 = vunpack.c.l.b16 %v181
    %v1410 = vunpack.c.h.b16 %v181
    %v1411 = vunpack.c.l.b16 %v182
    %v1412 = vunpack.c.h.b16 %v182
    %v1413 = vunpack.c.l.b16 %v183
    %v1414 = vunpack.c.h.b16 %v183
    %v1415 = vunpack.c.l.b16 %v184
    %v1416 = vunpack.c.h.b16 %v184
    %v1417 = vunpack.c.l.b16 %v185
    %v1418 = vunpack.c.h.b16 %v185
    %v1419 = vunpack.c.l.b16 %v186
    %v1420 = vunpack.c.h.b16 %v186
    %v1421 = vunpack.c.l.b16 %v187
    %v1422 = vunpack.c.h.b16 %v187
    %v1423 = vunpack.c.l.b16 %v188
    %v1424 = vunpack.c.h.b16 %v188
    %v1425 = vunpack.c.l.b16 %v189
    %v1426 = vunpack.c.h.b16 %v189
    %v1427 = vunpack.c.l.b16 %v190
    %v1428 = vunpack.c.h.b16 %v190
    %v1429 = vunpack.c.l.b16 %v191
    %v1430 = vunpack.c.h.b16 %v191
    %v1431 = vunpack.c.l.b16 %v192
    %v1432 = vunpack.c.h.b16 %v192
    %v1433 = vunpack.c.l.b16 %v193
    %v1434 = vunpack.c.h.b16 %v193
    %v1435 = vunpack.c.l.b16 %v194
    %v1436 = vunpack.c.h.b16 %v194
    %v1437 = vunpack.c.l.b16 %v195
    %v1438 = vunpack.c.h.b16 %v195
    %v1439 = vunpack.c.l.b16 %v196
    %v1440 = vunpack.c.h.b16 %v196
    %v1441 = vunpack.c.l.b16 %v197
    %v1442 = vunpack.c.h.b16 %v197
    %v1443 = vunpack.c.l.b16 %v198
    %v1444 = vunpack.c.h.b16 %v198
    %v1445 = vunpack.c.l.b16 %v199
    %v1446 = vunpack.c.h.b16 %v199
    %v1447 = vunpack.c.l.b16 %v200
    %v1448 = vunpack.c.h.b16 %v200
    %v1449 = vunpack.c.l.b16 %v201
    %v1450 = vunpack.c.h.b16 %v201
    %v1451 = vunpack.c.l.b16 %v202
    %v1452 = vunpack.c.h.b16 %v202
    %v1453 = vunpack.c.l.b16 %v203
    %v1454 = vunpack.c.h.b16 %v203
    %v1455 = vunpack.c.l.b16 %v204
    %v1456 = vunpack.c.h.b16 %v204
    %v1457 = vunpack.c.l.b16 %v205
    %v1458 = vunpack.c.h.b16 %v205
    %v1459 = vunpack.c.l.b16 %v206
    %v1460 = vunpack.c.h.b16 %v206
    %v1461 = vunpack.c.l.b16 %v207
    %v1462 = vunpack.c.h.b16 %v207
    %v1463 = vunpack.c.l.b16 %v208
    %v1464 = vunpack.c.h.b16 %v208
    %v1465 = vunpack.c.l.b16 %v209
    %v1466 = vunpack.c.h.b16 %v209
    %v1467 = vunpack.c.l.b16 %v210
    %v1468 = vunpack.c.h.b16 %v210
    %v1469 = vunpack.c.l.b16 %v211
    %v1470 = vunpack.c.h.b16 %v211
    %v1471 = vunpack.c.l.b16 %v212
    %v1472 = vunpack.c.h.b16 %v212
    %v1473 = vunpack.c.l.b16 %v213
    %v1474 = vunpack.c.h.b16 %v213
    %v1475 = vunpack.c.l.b16 %v214
    %v1476 = vunpack.c.h.b16 %v214
    %v1477 = vunpack.c.l.b16 %v215
    %v1478 = vunpack.c.h.b16 %v215
    %v1479 = vunpack.c.l.b16 %v216
    %v1480 = vunpack.c.h.b16 %v216
    %v1481 = vunpack.c.l.b16 %v217
    %v1482 = vunpack.c.h.b16 %v217
    %v1483 = vunpack.c.l.b16 %v218
    %v1484 = vunpack.c.h.b16 %v218
    %v1485 = vunpack.c.l.b16 %v219
    %v1486 = vunpack.c.h.b16 %v219
    %v1487 = vunpack.c.l.b16 %v220
    %v1488 = vunpack.c.h.b16 %v220
    %v1489 = vunpack.c.l.b16 %v221
    %v1490 = vunpack.c.h.b16 %v221
    %v1491 = vunpack.c.l.b16 %v222
    %v1492 = vunpack.c.h.b16 %v222
    %v1493 = vunpack.c.l.b16 %v223
    %v1494 = vunpack.c.h.b16 %v223
    %v1495 = vunpack.c.l.b16 %v224
    %v1496 = vunpack.c.h.b16 %v224
    %v1497 = vunpack.c.l.b16 %v225
    %v1498 = vunpack.c.h.b16 %v225
    %v1499 = vunpack.c.l.b16 %v226
    %v1500 = vunpack.c.h.b16 %v226
    %v1501 = vunpack.c.l.b16 %v227
    %v1502 = vunpack.c.h.b16 %v227
    %v1503 = vunpack.c.l.b16 %v228
    %v1504 = vunpack.c.h.b16 %v228
    %v1505 = vunpack.c.l.b16 %v229
    %v1506 = vunpack.c.h.b16 %v229
    %v1507 = vunpack.c.l.b16 %v230
    %v1508 = vunpack.c.h.b16 %v230
    %v1509 = vunpack.c.l.b16 %v231
    %v1510 = vunpack.c.h.b16 %v231
    %v1511 = vunpack.c.l.b16 %v232
    %v1512 = vunpack.c.h.b16 %v232
    %v1513 = vunpack.c.l.b16 %v233
    %v1514 = vunpack.c.h.b16 %v233
    %v1515 = vunpack.c.l.b16 %v234
    %v1516 = vunpack.c.h.b16 %v234
    %v1517 = vunpack.c.l.b16 %v235
    %v1518 = vunpack.c.h.b16 %v235
    %v1519 = vunpack.c.l.b16 %v236
    %v1520 = vunpack.c.h.b16 %v236
    %v1521 = vunpack.c.l.b16 %v237
    %v1522 = vunpack.c.h.b16 %v237
    %v1523 = vunpack.c.l.b16 %v238
    %v1524 = vunpack.c.h.b16 %v238
    %v1525 = vunpack.c.l.b16 %v239
    %v1526 = vunpack.c.h.b16 %v239
    %v1527 = vunpack.c.l.b16 %v240
    %v1528 = vunpack.c.h.b16 %v240
    %v1529 = vunpack.c.l.b16 %v241
    %v1530 = vunpack.c.h.b16 %v241
    %v1531 = vunpack.c.l.b16 %v242
    %v1532 = vunpack.c.h.b16 %v242
    %v1533 = vunpack.c.l.b16 %v243
    %v1534 = vunpack.c.h.b16 %v243
    %v1535 = vunpack.c.l.b16 %v244
    %v1536 = vunpack.c.h.b16 %v244
    %v1537 = vunpack.c.l.b16 %v245
    %v1538 = vunpack.c.h.b16 %v245
    %v1539 = vunpack.c.l.b16 %v246
    %v1540 = vunpack.c.h.b16 %v246
    %v1541 = vunpack.c.l.b16 %v247
    %v1542 = vunpack.c.h.b16 %v247
    %v1543 = vunpack.c.l.b16 %v248
    %v1544 = vunpack.c.h.b16 %v248
    %v1545 = vunpack.c.l.b16 %v249
    %v1546 = vunpack.c.h.b16 %v249
    %v1547 = vunpack.c.l.b16 %v250
    %v1548 = vunpack.c.h.b16 %v250
    %v1549 = vunpack.c.l.b16 %v251
    %v1550 = vunpack.c.h.b16 %v251
    %v1551 = vunpack.c.l.b16 %v252
    %v1552 = vunpack.c.h.b16 %v252
    %v1553 = vunpack.c.l.b16 %v253
    %v1554 = vunpack.c.h.b16 %v253
    %v1555 = vunpack.c.l.b16 %v254
    %v1556 = vunpack.c.h.b16 %v254
    %v1557 = vunpack.c.l.b16 %v255
    %v1558 = vunpack.c.h.b16 %v255
    %v1559 = vunpack.c.l.b16 %v256
    %v1560 = vunpack.c.h.b16 %v256
    %v1561 = vunpack.c.l.b16 %v257
    %v1562 = vunpack.c.h.b16 %v257
    %v1563 = vunpack.c.l.b16 %v258
    %v1564 = vunpack.c.h.b16 %v258
    %v1565 = vunpack.c.l.b16 %v259
    %v1566 = vunpack.c.h.b16 %v259
    %v1567 = vunpack.c.l.b16 %v260
    %v1568 = vunpack.c.h.b16 %v260
    %v1569 = vunpack.c.l.b16 %v261
    %v1570 = vunpack.c.h.b16 %v261
    %v1571 = vunpack.c.l.b16 %v262
    %v1572 = vunpack.c.h.b16 %v262
    %v1573 = vunpack.c.l.b16 %v263
    %v1574 = vunpack.c.h.b16 %v263
    %v1575 = vunpack.c.l.b16 %v264
    %v1576 = vunpack.c.h.b16 %v264
    %v1577 = vunpack.c.l.b16 %v265
    %v1578 = vunpack.c.h.b16 %v265
    %v1579 = vunpack.c.l.b16 %v266
    %v1580 = vunpack.c.h.b16 %v266
    %v1581 = vunpack.c.l.b16 %v267
    %v1582 = vunpack.c.h.b16 %v267
    %v1583 = vunpack.c.l.b16 %v268
    %v1584 = vunpack.c.h.b16 %v268
    %v1585 = vunpack.c.l.b16 %v269
    %v1586 = vunpack.c.h.b16 %v269
    %v1587 = vunpack.c.l.b16 %v270
    %v1588 = vunpack.c.h.b16 %v270
    %v1589 = vunpack.c.l.b16 %v271
    %v1590 = vunpack.c.h.b16 %v271
    %v1591 = vunpack.c.l.b16 %v272
    %v1592 = vunpack.c.h.b16 %v272
    %v1593 = vunpack.c.l.b16 %v273
    %v1594 = vunpack.c.h.b16 %v273
    %v1595 = vunpack.c.l.b16 %v274
    %v1596 = vunpack.c.h.b16 %v274
    %v1597 = vunpack.c.l.b16 %v275
    %v1598 = vunpack.c.h.b16 %v275
    %v1599 = vunpack.c.l.b16 %v276
    %v1600 = vunpack.c.h.b16 %v276
    %v1601 = vunpack.c.l.b16 %v277
    %v1602 = vunpack.c.h.b16 %v277
    %v1603 = vunpack.c.l.b16 %v278
    %v1604 = vunpack.c.h.b16 %v278
    %v1605 = vunpack.c.l.b16 %v279
    %v1606 = vunpack.c.h.b16 %v279
    %v1607 = vunpack.c.l.b16 %v280
    %v1608 = vunpack.c.h.b16 %v280
    %v1609 = vunpack.c.l.b16 %v281
    %v1610 = vunpack.c.h.b16 %v281
    %v1611 = vunpack.c.l.b16 %v282
    %v1612 = vunpack.c.h.b16 %v282
    %v1613 = vunpack.c.l.b16 %v283
    %v1614 = vunpack.c.h.b16 %v283
    %v1615 = vunpack.c.l.b16 %v284
    %v1616 = vunpack.c.h.b16 %v284
    %v1617 = vunpack.c.l.b16 %v285
    %v1618 = vunpack.c.h.b16 %v285
    %v1619 = vunpack.c.l.b16 %v286
    %v1620 = vunpack.c.h.b16 %v286
    %v1621 = vunpack.c.l.b16 %v287
    %v1622 = vunpack.c.h.b16 %v287
    %v1623 = vunpack.c.l.b16 %v288
    %v1624 = vunpack.c.h.b16 %v288
    %v1625 = vunpack.c.l.b16 %v289
    %v1626 = vunpack.c.h.b16 %v289
    %v1627 = vunpack.c.l.b16 %v290
    %v1628 = vunpack.c.h.b16 %v290
    %v1629 = vunpack.c.l.b16 %v291
    %v1630 = vunpack.c.h.b16 %v291
    %v1631 = vunpack.c.l.b16 %v292
    %v1632 = vunpack.c.h.b16 %v292
    %v1633 = vunpack.c.l.b16 %v293
    %v1634 = vunpack.c.h.b16 %v293
    %v1635 = vunpack.c.l.b16 %v294
    %v1636 = vunpack.c.h.b16 %v294
    %v1637 = vunpack.c.l.b16 %v295
    %v1638 = vunpack.c.h.b16 %v295
    %v1639 = vunpack.c.l.b16 %v296
    %v1640 = vunpack.c.h.b16 %v296
    %v1641 = vunpack.c.l.b16 %v297
    %v1642 = vunpack.c.h.b16 %v297
    %v1643 = vunpack.c.l.b16 %v298
    %v1644 = vunpack.c.h.b16 %v298
    %v1645 = vunpack.c.l.b16 %v299
    %v1646 = vunpack.c.h.b16 %v299
    %v1647 = vunpack.c.l.b16 %v300
    %v1648 = vunpack.c.h.b16 %v300
    %v1649 = vunpack.c.l.b16 %v301
    %v1650 = vunpack.c.h.b16 %v301
    %v1651 = vunpack.c.l.b16 %v302
    %v1652 = vunpack.c.h.b16 %v302
    %v1653 = vunpack.c.l.b16 %v303
    %v1654 = vunpack.c.h.b16 %v303
    %v1655 = vunpack.c.l.b16 %v304
    %v1656 = vunpack.c.h.b16 %v304
    %v1657 = vunpack.c.l.b16 %v305
    %v1658 = vunpack.c.h.b16 %v305
    %v1659 = vunpack.c.l.b16 %v306
    %v1660 = vunpack.c.h.b16 %v306
    %v1661 = vunpack.c.l.b16 %v307
    %v1662 = vunpack.c.h.b16 %v307
    %v1663 = vunpack.c.l.b16 %v308
    %v1664 = vunpack.c.h.b16 %v308
    %v1665 = vunpack.c.l.b16 %v309
    %v1666 = vunpack.c.h.b16 %v309
    %v1667 = vunpack.c.l.b16 %v310
    %v1668 = vunpack.c.h.b16 %v310
    %v1669 = vunpack.c.l.b16 %v311
    %v1670 = vunpack.c.h.b16 %v311
    %v1671 = vunpack.c.l.b16 %v312
    %v1672 = vunpack.c.h.b16 %v312
    %v1673 = vunpack.c.l.b16 %v313
    %v1674 = vunpack.c.h.b16 %v313
    %v1675 = vunpack.c.l.b16 %v314
    %v1676 = vunpack.c.h.b16 %v314
    %v1677 = vunpack.c.l.b16 %v315
    %v1678 = vunpack.c.h.b16 %v315
    %v1679 = vunpack.c.l.b16 %v316
    %v1680 = vunpack.c.h.b16 %v316
    %v1681 = vunpack.c.l.b16 %v317
    %v1682 = vunpack.c.h.b16 %v317
    %v1683 = vunpack.c.l.b16 %v318
    %v1684 = vunpack.c.h.b16 %v318
    %v1685 = vunpack.c.l.b16 %v319
    %v1686 = vunpack.c.h.b16 %v319
    %v1687 = vunpack.c.l.b16 %v320
    %v1688 = vunpack.c.h.b16 %v320
    %v1689 = vunpack.c.l.b16 %v321
    %v1690 = vunpack.c.h.b16 %v321
    %v1691 = vunpack.c.l.b16 %v322
    %v1692 = vunpack.c.h.b16 %v322
    %v1693 = vunpack.c.l.b16 %v323
    %v1694 = vunpack.c.h.b16 %v323
    %v1695 = vunpack.c.l.b16 %v324
    %v1696 = vunpack.c.h.b16 %v324
    %v1697 = vunpack.c.l.b16 %v325
    %v1698 = vunpack.c.h.b16 %v325
    %v1699 = vunpack.c.l.b16 %v326
    %v1700 = vunpack.c.h.b16 %v326
    %v1701 = vunpack.c.l.b16 %v327
    %v1702 = vunpack.c.h.b16 %v327
    %v1703 = vunpack.c.l.b16 %v328
    %v1704 = vunpack.c.h.b16 %v328
    %v1705 = vunpack.c.l.b16 %v329
    %v1706 = vunpack.c.h.b16 %v329
    %v1707 = vunpack.c.l.b16 %v330
    %v1708 = vunpack.c.h.b16 %v330
    %v1709 = vunpack.c.l.b16 %v331
    %v1710 = vunpack.c.h.b16 %v331
    %v1711 = vunpack.c.l.b16 %v332
    %v1712 = vunpack.c.h.b16 %v332
    %v1713 = vunpack.c.l.b16 %v333
    %v1714 = vunpack.c.h.b16 %v333
    %v1715 = vunpack.c.l.b16 %v334
    %v1716 = vunpack.c.h.b16 %v334
    %v1717 = vunpack.c.l.b16 %v335
    %v1718 = vunpack.c.h.b16 %v335
    %v1719 = vunpack.c.l.b16 %v336
    %v1720 = vunpack.c.h.b16 %v336
    %v1721 = vunpack.c.l.b16 %v337
    %v1722 = vunpack.c.h.b16 %v337
    %v1723 = vunpack.c.l.b16 %v338
    %v1724 = vunpack.c.h.b16 %v338
    %v1725 = vunpack.c.l.b16 %v339
    %v1726 = vunpack.c.h.b16 %v339
    %v1727 = vunpack.c.l.b16 %v340
    %v1728 = vunpack.c.h.b16 %v340
    %v1729 = vunpack.c.l.b16 %v341
    %v1730 = vunpack.c.h.b16 %v341
    %v1731 = vunpack.c.l.b16 %v342
    %v1732 = vunpack.c.h.b16 %v342
    %v1733 = vunpack.c.l.b16 %v343
    %v1734 = vunpack.c.h.b16 %v343
    %v1735 = vunpack.c.l.b16 %v344
    %v1736 = vunpack.c.h.b16 %v344
    %v1737 = vunpack.c.l.b16 %v345
    %v1738 = vunpack.c.h.b16 %v345
    %v1739 = vunpack.c.l.b16 %v346
    %v1740 = vunpack.c.h.b16 %v346
    %v1741 = vunpack.c.l.b16 %v347
    %v1742 = vunpack.c.h.b16 %v347
    %v1743 = vunpack.c.l.b16 %v348
    %v1744 = vunpack.c.h.b16 %v348
    %v1745 = vunpack.c.l.b16 %v349
    %v1746 = vunpack.c.h.b16 %v349
    %v1747 = vunpack.c.l.b16 %v350
    %v1748 = vunpack.c.h.b16 %v350
    %v1749 = vunpack.c.l.b16 %v351
    %v1750 = vunpack.c.h.b16 %v351
    %v1751 = vunpack.c.l.b16 %v352
    %v1752 = vunpack.c.h.b16 %v352
    %v1753 = vunpack.c.l.b16 %v353
    %v1754 = vunpack.c.h.b16 %v353
    %v1755 = vunpack.c.l.b16 %v354
    %v1756 = vunpack.c.h.b16 %v354
    %v1757 = vunpack.c.l.b16 %v355
    %v1758 = vunpack.c.h.b16 %v355
    %v1759 = vunpack.c.l.b16 %v356
    %v1760 = vunpack.c.h.b16 %v356
    %v1761 = vunpack.c.l.b16 %v357
    %v1762 = vunpack.c.h.b16 %v357
    %v1763 = vunpack.c.l.b16 %v358
    %v1764 = vunpack.c.h.b16 %v358
    %v1765 = vunpack.c.l.b16 %v359
    %v1766 = vunpack.c.h.b16 %v359
    %v1767 = vunpack.c.l.b16 %v360
    %v1768 = vunpack.c.h.b16 %v360
    %v1769 = vunpack.c.l.b16 %v361
    %v1770 = vunpack.c.h.b16 %v361
    %v1771 = vunpack.c.l.b16 %v362
    %v1772 = vunpack.c.h.b16 %v362
    %v1773 = vunpack.c.l.b16 %v363
    %v1774 = vunpack.c.h.b16 %v363
    %v1775 = vunpack.c.l.b16 %v364
    %v1776 = vunpack.c.h.b16 %v364
    %v1777 = vunpack.c.l.b16 %v365
    %v1778 = vunpack.c.h.b16 %v365
    %v1779 = vunpack.c.l.b16 %v366
    %v1780 = vunpack.c.h.b16 %v366
    %v1781 = vunpack.c.l.b16 %v367
    %v1782 = vunpack.c.h.b16 %v367
    %v1783 = vunpack.c.l.b16 %v368
    %v1784 = vunpack.c.h.b16 %v368
    %v1785 = vunpack.c.l.b16 %v369
    %v1786 = vunpack.c.h.b16 %v369
    %v1787 = vunpack.c.l.b16 %v370
    %v1788 = vunpack.c.h.b16 %v370
    %v1789 = vunpack.c.l.b16 %v371
    %v1790 = vunpack.c.h.b16 %v371
    %v1791 = vunpack.c.l.b16 %v372
    %v1792 = vunpack.c.h.b16 %v372
    %v1793 = vunpack.c.l.b16 %v373
    %v1794 = vunpack.c.h.b16 %v373
    %v1795 = vunpack.c.l.b16 %v374
    %v1796 = vunpack.c.h.b16 %v374
    %v1797 = vunpack.c.l.b16 %v375
    %v1798 = vunpack.c.h.b16 %v375
    %v1799 = vunpack.c.l.b16 %v376
    %v1800 = vunpack.c.h.b16 %v376
    %v1801 = vunpack.c.l.b16 %v377
    %v1802 = vunpack.c.h.b16 %v377
    %v1803 = vunpack.c.l.b16 %v378
    %v1804 = vunpack.c.h.b16 %v378
    %v1805 = vunpack.c.l.b16 %v379
    %v1806 = vunpack.c.h.b16 %v379
    %v1807 = vunpack.c.l.b16 %v380
    %v1808 = vunpack.c.h.b16 %v380
    %v1809 = vunpack.c.l.b16 %v381
    %v1810 = vunpack.c.h.b16 %v381
    %v1811 = vunpack.c.l.b16 %v382
    %v1812 = vunpack.c.h.b16 %v382
    %v1813 = vunpack.c.l.b16 %v383
    %v1814 = vunpack.c.h.b16 %v383
    %v1815 = vunpack.c.l.b16 %v384
    %v1816 = vunpack.c.h.b16 %v384
    %v1817 = vunpack.c.l.b16 %v385
    %v1818 = vunpack.c.h.b16 %v385
    %v1819 = vunpack.c.l.b16 %v386
    %v1820 = vunpack.c.h.b16 %v386
    %v1821 = vunpack.c.l.b16 %v387
    %v1822 = vunpack.c.h.b16 %v387
    %v1823 = vunpack.c.l.b16 %v388
    %v1824 = vunpack.c.h.b16 %v388
    %v1825 = vunpack.c.l.b16 %v389
    %v1826 = vunpack.c.h.b16 %v389
    %v1827 = vunpack.c.l.b16 %v390
    %v1828 = vunpack.c.h.b16 %v390
    %v1829 = vunpack.c.l.b16 %v391
    %v1830 = vunpack.c.h.b16 %v391
    %v1831 = vunpack.c.l.b16 %v392
    %v1832 = vunpack.c.h.b16 %v392
    %v1833 = vunpack.c.l.b16 %v393
    %v1834 = vunpack.c.h.b16 %v393
    %v1835 = vunpack.c.l.b16 %v394
    %v1836 = vunpack.c.h.b16 %v394
    %v1837 = vunpack.c.l.b16 %v395
    %v1838 = vunpack.c.h.b16 %v395
    %v1839 = vunpack.c.l.b16 %v396
    %v1840 = vunpack.c.h.b16 %v396
    %v1841 = vunpack.c.l.b16 %v397
    %v1842 = vunpack.c.h.b16 %v397
    %v1843 = vunpack.c.l.b16 %v398
    %v1844 = vunpack.c.h.b16 %v398
    %v1845 = vunpack.c.l.b16 %v399
    %v1846 = vunpack.c.h.b16 %v399
    %v1847 = vunpack.c.l.b16 %v400
    %v1848 = vunpack.c.h.b16 %v400
    %v1849 = vunpack.c.l.b16 %v401
    %v1850 = vunpack.c.h.b16 %v401
    %v1851 = vunpack.c.l.b16 %v402
    %v1852 = vunpack.c.h.b16 %v402
    %v1853 = vunpack.c.l.b16 %v403
    %v1854 = vunpack.c.h.b16 %v403
    %v1855 = vunpack.c.l.b16 %v404
    %v1856 = vunpack.c.h.b16 %v404
    %v1857 = vunpack.c.l.b16 %v405
    %v1858 = vunpack.c.h.b16 %v405
    %v1859 = vunpack.c.l.b16 %v406
    %v1860 = vunpack.c.h.b16 %v406
    %v1861 = vunpack.c.l.b16 %v407
    %v1862 = vunpack.c.h.b16 %v407
    %v1863 = vunpack.c.l.b16 %v408
    %v1864 = vunpack.c.h.b16 %v408
    %v1865 = vunpack.c.l.b16 %v409
    %v1866 = vunpack.c.h.b16 %v409
    %v1867 = vunpack.c.l.b16 %v410
    %v1868 = vunpack.c.h.b16 %v410
    %v1869 = vunpack.c.l.b16 %v411
    %v1870 = vunpack.c.h.b16 %v411
    %v1871 = vunpack.c.l.b16 %v412
    %v1872 = vunpack.c.h.b16 %v412
    %v1873 = vunpack.c.l.b16 %v413
    %v1874 = vunpack.c.h.b16 %v413
    %v1875 = vunpack.c.l.b16 %v414
    %v1876 = vunpack.c.h.b16 %v414
    %v1877 = vunpack.c.l.b16 %v415
    %v1878 = vunpack.c.h.b16 %v415
    %v1879 = vunpack.c.l.b16 %v416
    %v1880 = vunpack.c.h.b16 %v416
    %v1881 = vunpack.c.l.b16 %v417
    %v1882 = vunpack.c.h.b16 %v417
    %v1883 = vunpack.c.l.b16 %v418
    %v1884 = vunpack.c.h.b16 %v418
    %v1885 = vunpack.c.l.b16 %v419
    %v1886 = vunpack.c.h.b16 %v419
    %v1887 = vunpack.c.l.b16 %v420
    %v1888 = vunpack.c.h.b16 %v420
    %v1889 = vunpack.c.l.b16 %v421
    %v1890 = vunpack.c.h.b16 %v421
    %v1891 = vunpack.c.l.b16 %v422
    %v1892 = vunpack.c.h.b16 %v422
    %v1893 = vunpack.c.l.b16 %v423
    %v1894 = vunpack.c.h.b16 %v423
    %v1895 = vunpack.c.l.b16 %v424
    %v1896 = vunpack.c.h.b16 %v424
    %v1897 = vunpack.c.l.b16 %v425
    %v1898 = vunpack.c.h.b16 %v425
    %v1899 = vunpack.c.l.b16 %v426
    %v1900 = vunpack.c.h.b16 %v426
    %v1901 = vunpack.c.l.b16 %v427
    %v1902 = vunpack.c.h.b16 %v427
    %v1903 = vunpack.c.l.b16 %v428
    %v1904 = vunpack.c.h.b16 %v428
    %v1905 = vunpack.c.l.b16 %v429
    %v1906 = vunpack.c.h.b16 %v429
    %v1907 = vunpack.c.l.b16 %v430
    %v1908 = vunpack.c.h.b16 %v430
    %v1909 = vunpack.c.l.b16 %v431
    %v1910 = vunpack.c.h.b16 %v431
    %v1911 = vunpack.c.l.b16 %v432
    %v1912 = vunpack.c.h.b16 %v432
    %v1913 = vunpack.c.l.b16 %v433
    %v1914 = vunpack.c.h.b16 %v433
    %v1915 = vunpack.c.l.b16 %v434
    %v1916 = vunpack.c.h.b16 %v434
    %v1917 = vunpack.c.l.b16 %v435
    %v1918 = vunpack.c.h.b16 %v435
    %v1919 = vunpack.c.l.b16 %v436
    %v1920 = vunpack.c.h.b16 %v436
    %v1921 = vunpack.c.l.b16 %v437
    %v1922 = vunpack.c.h.b16 %v437
    %v1923 = vunpack.c.l.b16 %v438
    %v1924 = vunpack.c.h.b16 %v438
    %v1925 = vunpack.c.l.b16 %v439
    %v1926 = vunpack.c.h.b16 %v439
    %v1927 = vunpack.c.l.b16 %v440
    %v1928 = vunpack.c.h.b16 %v440
    %v1929 = vunpack.c.l.b16 %v441
    %v1930 = vunpack.c.h.b16 %v441
    %v1931 = vunpack.c.l.b16 %v442
    %v1932 = vunpack.c.h.b16 %v442
    %v1933 = vunpack.c.l.b16 %v443
    %v1934 = vunpack.c.h.b16 %v443
    %v1935 = vunpack.c.l.b16 %v444
    %v1936 = vunpack.c.h.b16 %v444
    %v1937 = vunpack.c.l.b16 %v445
    %v1938 = vunpack.c.h.b16 %v445
    %v1939 = vunpack.c.l.b16 %v446
    %v1940 = vunpack.c.h.b16 %v446
    %v1941 = vunpack.c.l.b16 %v447
    %v1942 = vunpack.c.h.b16 %v447
    %v1943 = vunpack.c.l.b16 %v448
    %v1944 = vunpack.c.h.b16 %v448
    %v1945 = vunpack.c.l.b16 %v449
    %v1946 = vunpack.c.h.b16 %v449
    %v1947 = vunpack.c.l.b16 %v450
    %v1948 = vunpack.c.h.b16 %v450
    %v1949 = vunpack.c.l.b16 %v451
    %v1950 = vunpack.c.h.b16 %v451
    %v1951 = vunpack.c.l.b16 %v452
    %v1952 = vunpack.c.h.b16 %v452
    %v1953 = vunpack.c.l.b16 %v453
    %v1954 = vunpack.c.h.b16 %v453
    %v1955 = vunpack.c.l.b16 %v454
    %v1956 = vunpack.c.h.b16 %v454
    %v1957 = vunpack.c.l.b16 %v455
    %v1958 = vunpack.c.h.b16 %v455
    %v1959 = vunpack.c.l.b16 %v456
    %v1960 = vunpack.c.h.b16 %v456
    %v1961 = vunpack.c.l.b16 %v457
    %v1962 = vunpack.c.h.b16 %v457
    %v1963 = vunpack.c.l.b16 %v458
    %v1964 = vunpack.c.h.b16 %v458
    %v1965 = vunpack.c.l.b16 %v459
    %v1966 = vunpack.c.h.b16 %v459
    %v1967 = vunpack.c.l.b16 %v460
    %v1968 = vunpack.c.h.b16 %v460
    %v1969 = vunpack.c.l.b16 %v461
    %v1970 = vunpack.c.h.b16 %v461
    %v1971 = vunpack.c.l.b16 %v462
    %v1972 = vunpack.c.h.b16 %v462
    %v1973 = vunpack.c.l.b16 %v463
    %v1974 = vunpack.c.h.b16 %v463
    %v1975 = vunpack.c.l.b16 %v464
    %v1976 = vunpack.c.h.b16 %v464
    %v1977 = vunpack.c.l.b16 %v465
    %v1978 = vunpack.c.h.b16 %v465
    %v1979 = vunpack.c.l.b16 %v466
    %v1980 = vunpack.c.h.b16 %v466
    %v1981 = vunpack.c.l.b16 %v467
    %v1982 = vunpack.c.h.b16 %v467
    %v1983 = vunpack.c.l.b16 %v468
    %v1984 = vunpack.c.h.b16 %v468
    %v1985 = vunpack.c.l.b16 %v469
    %v1986 = vunpack.c.h.b16 %v469
    %v1987 = vunpack.c.l.b16 %v470
    %v1988 = vunpack.c.h.b16 %v470
    %v1989 = vunpack.c.l.b16 %v471
    %v1990 = vunpack.c.h.b16 %v471
    %v1991 = vunpack.c.l.b16 %v472
    %v1992 = vunpack.c.h.b16 %v472
    %v1993 = vunpack.c.l.b16 %v473
    %v1994 = vunpack.c.h.b16 %v473
    %v1995 = vunpack.c.l.b16 %v474
    %v1996 = vunpack.c.h.b16 %v474
    %v1997 = vunpack.c.l.b16 %v475
    %v1998 = vunpack.c.h.b16 %v475
    %v1999 = vunpack.c.l.b16 %v476
    %v2000 = vunpack.c.h.b16 %v476
    %v2001 = vunpack.c.l.b16 %v477
    %v2002 = vunpack.c.h.b16 %v477
    %v2003 = vunpack.c.l.b16 %v478
    %v2004 = vunpack.c.h.b16 %v478
    %v2005 = vunpack.c.l.b16 %v479
    %v2006 = vunpack.c.h.b16 %v479
    %v2007 = vunpack.c.l.b16 %v480
    %v2008 = vunpack.c.h.b16 %v480
    %v2009 = vunpack.c.l.b16 %v481
    %v2010 = vunpack.c.h.b16 %v481
    %v2011 = vunpack.c.l.b16 %v482
    %v2012 = vunpack.c.h.b16 %v482
    %v2013 = vunpack.c.l.b16 %v483
    %v2014 = vunpack.c.h.b16 %v483
    %v2015 = vunpack.c.l.b16 %v484
    %v2016 = vunpack.c.h.b16 %v484
    %v2017 = vunpack.c.l.b16 %v485
    %v2018 = vunpack.c.h.b16 %v485
    %v2019 = vunpack.c.l.b16 %v486
    %v2020 = vunpack.c.h.b16 %v486
    %v2021 = vunpack.c.l.b16 %v487
    %v2022 = vunpack.c.h.b16 %v487
    %v2023 = vunpack.c.l.b16 %v488
    %v2024 = vunpack.c.h.b16 %v488
    %v2025 = vunpack.c.l.b16 %v489
    %v2026 = vunpack.c.h.b16 %v489
    %v2027 = vunpack.c.l.b16 %v490
    %v2028 = vunpack.c.h.b16 %v490
    %v2029 = vunpack.c.l.b16 %v491
    %v2030 = vunpack.c.h.b16 %v491
    %v2031 = vunpack.c.l.b16 %v492
    %v2032 = vunpack.c.h.b16 %v492
    %v2033 = vunpack.c.l.b16 %v493
    %v2034 = vunpack.c.h.b16 %v493
    %v2035 = vunpack.c.l.b16 %v494
    %v2036 = vunpack.c.h.b16 %v494
    %v2037 = vunpack.c.l.b16 %v495
    %v2038 = vunpack.c.h.b16 %v495
    %v2039 = vunpack.c.l.b16 %v496
    %v2040 = vunpack.c.h.b16 %v496
    %v2041 = vunpack.c.l.b16 %v497
    %v2042 = vunpack.c.h.b16 %v497
    %v2043 = vunpack.c.l.b16 %v498
    %v2044 = vunpack.c.h.b16 %v498
    %v2045 = vunpack.c.l.b16 %v499
    %v2046 = vunpack.c.h.b16 %v499
    %v2047 = vunpack.c.l.b16 %v500
    %v2048 = vunpack.c.h.b16 %v500
    %v2049 = vunpack.c.l.b16 %v501
    %v2050 = vunpack.c.h.b16 %v501
    %v2051 = vunpack.c.l.b16 %v502
    %v2052 = vunpack.c.h.b16 %v502
    %v2053 = vunpack.c.l.b16 %v503
    %v2054 = vunpack.c.h.b16 %v503
    %v2055 = vunpack.c.l.b16 %v504
    %v2056 = vunpack.c.h.b16 %v504
    %v2057 = vunpack.c.l.b16 %v505
    %v2058 = vunpack.c.h.b16 %v505
    %v2059 = vunpack.c.l.b16 %v506
    %v2060 = vunpack.c.h.b16 %v506
    %v2061 = vunpack.c.l.b16 %v507
    %v2062 = vunpack.c.h.b16 %v507
    %v2063 = vunpack.c.l.b16 %v508
    %v2064 = vunpack.c.h.b16 %v508
    %v2065 = vunpack.c.l.b16 %v509
    %v2066 = vunpack.c.h.b16 %v509
    %v2067 = vunpack.c.l.b16 %v510
    %v2068 = vunpack.c.h.b16 %v510
    %v2069 = vunpack.c.l.b16 %v511
    %v2070 = vunpack.c.h.b16 %v511
    %v2071 = vunpack.c.l.b16 %v512
    %v2072 = vunpack.c.h.b16 %v512
    %v2073 = vunpack.c.l.b16 %v513
    %v2074 = vunpack.c.h.b16 %v513
    %v2075 = vunpack.c.l.b16 %v514
    %v2076 = vunpack.c.h.b16 %v514
    %v2077 = vunpack.c.l.b16 %v515
    %v2078 = vunpack.c.h.b16 %v515
    %v2079 = vunpack.c.l.b16 %v516
    %v2080 = vunpack.c.h.b16 %v516
    %v2081 = vunpack.c.l.b16 %v517
    %v2082 = vunpack.c.h.b16 %v517
    %v2083 = vunpack.c.l.b16 %v518
    %v2084 = vunpack.c.h.b16 %v518
    %v2085 = vunpack.c.l.b16 %v519
    %v2086 = vunpack.c.h.b16 %v519
    %v2087 = vunpack.c.l.b16 %v520
    %v2088 = vunpack.c.h.b16 %v520
    %v2089 = vunpack.c.l.b16 %v521
    %v2090 = vunpack.c.h.b16 %v521
    %v2091 = vunpack.c.l.b16 %v522
    %v2092 = vunpack.c.h.b16 %v522
    %v2093 = vunpack.c.l.b16 %v523
    %v2094 = vunpack.c.h.b16 %v523
    %v2095 = vunpack.c.l.b16 %v524
    %v2096 = vunpack.c.h.b16 %v524
    %v2097 = vunpack.c.l.b16 %v525
    %v2098 = vunpack.c.h.b16 %v525
    %v2099 = vunpack.c.l.b16 %v526
    %v2100 = vunpack.c.h.b16 %v526
    %v2101 = vunpack.c.l.b16 %v527
    %v2102 = vunpack.c.h.b16 %v527
    %v2103 = vunpack.c.l.b16 %v528
    %v2104 = vunpack.c.h.b16 %v528
    %v2105 = vunpack.c.l.b16 %v529
    %v2106 = vunpack.c.h.b16 %v529
    %v2107 = vunpack.c.l.b16 %v530
    %v2108 = vunpack.c.h.b16 %v530
    %v2109 = vunpack.c.l.b16 %v531
    %v2110 = vunpack.c.h.b16 %v531
    %v2111 = vunpack.c.l.b16 %v532
    %v2112 = vunpack.c.h.b16 %v532
    %v2113 = vunpack.c.l.b16 %v533
    %v2114 = vunpack.c.h.b16 %v533
    %v2115 = vunpack.c.l.b16 %v534
    %v2116 = vunpack.c.h.b16 %v534
    %v2117 = vpack.c.b16 %v1097, %v1093
    %v2118 = vpack.c.b16 %v1098, %v1094
    %v2119 = vpack.c.b16 %v1099, %v1095
    %v2120 = vpack.c.b16 %v1100, %v1096
    %v2121 = vpack.c.b16 %v1105, %v1101
    %v2122 = vpack.c.b16 %v1106, %v1102
    %v2123 = vpack.c.b16 %v1107, %v1103
    %v2124 = vpack.c.b16 %v1108, %v1104
    %v2125 = vpack.c.b16 %v1113, %v1109
    %v2126 = vpack.c.b16 %v1114, %v1110
    %v2127 = vpack.c.b16 %v1115, %v1111
    %v2128 = vpack.c.b16 %v1116, %v1112
    %v2129 = vpack.c.b16 %v1121, %v1117
    %v2130 = vpack.c.b16 %v1122, %v1118
    %v2131 = vpack.c.b16 %v1123, %v1119
    %v2132 = vpack.c.b16 %v1124, %v1120
    %v2133 = vpack.c.b16 %v1129, %v1125
    %v2134 = vpack.c.b16 %v1130, %v1126
    %v2135 = vpack.c.b16 %v1131, %v1127
    %v2136 = vpack.c.b16 %v1132, %v1128
    %v2137 = vpack.c.b16 %v1137, %v1133
    %v2138 = vpack.c.b16 %v1138, %v1134
    %v2139 = vpack.c.b16 %v1139, %v1135
    %v2140 = vpack.c.b16 %v1140, %v1136
    %v2141 = vpack.c.b16 %v1145, %v1141
    %v2142 = vpack.c.b16 %v1146, %v1142
    %v2143 = vpack.c.b16 %v1147, %v1143
    %v2144 = vpack.c.b16 %v1148, %v1144
    %v2145 = vpack.c.b16 %v1153, %v1149
    %v2146 = vpack.c.b16 %v1154, %v1150
    %v2147 = vpack.c.b16 %v1155, %v1151
    %v2148 = vpack.c.b16 %v1156, %v1152
    %v2149 = vpack.c.b16 %v1161, %v1157
    %v2150 = vpack.c.b16 %v1162, %v1158
    %v2151 = vpack.c.b16 %v1163, %v1159
    %v2152 = vpack.c.b16 %v1164, %v1160
    %v2153 = vpack.c.b16 %v1169, %v1165
    %v2154 = vpack.c.b16 %v1170, %v1166
    %v2155 = vpack.c.b16 %v1171, %v1167
    %v2156 = vpack.c.b16 %v1172, %v1168
    %v2157 = vpack.c.b16 %v1177, %v1173
    %v2158 = vpack.c.b16 %v1178, %v1174
    %v2159 = vpack.c.b16 %v1179, %v1175
    %v2160 = vpack.c.b16 %v1180, %v1176
    %v2161 = vpack.c.b16 %v1185, %v1181
    %v2162 = vpack.c.b16 %v1186, %v1182
    %v2163 = vpack.c.b16 %v1187, %v1183
    %v2164 = vpack.c.b16 %v1188, %v1184
    %v2165 = vpack.c.b16 %v1193, %v1189
    %v2166 = vpack.c.b16 %v1194, %v1190
    %v2167 = vpack.c.b16 %v1195, %v1191
    %v2168 = vpack.c.b16 %v1196, %v1192
    %v2169 = vpack.c.b16 %v1201, %v1197
    %v2170 = vpack.c.b16 %v1202, %v1198
    %v2171 = vpack.c.b16 %v1203, %v1199
    %v2172 = vpack.c.b16 %v1204, %v1200
    %v2173 = vpack.c.b16 %v1209, %v1205
    %v2174 = vpack.c.b16 %v1210, %v1206
    %v2175 = vpack.c.b16 %v1211, %v1207
    %v2176 = vpack.c.b16 %v1212, %v1208
    %v2177 = vpack.c.b16 %v1217, %v1213
    %v2178 = vpack.c.b16 %v1218, %v1214
    %v2179 = vpack.c.b16 %v1219, %v1215
    %v2180 = vpack.c.b16 %v1220, %v1216
    %v2181 = vpack.c.b16 %v1225, %v1221
    %v2182 = vpack.c.b16 %v1226, %v1222
    %v2183 = vpack.c.b16 %v1227, %v1223
    %v2184 = vpack.c.b16 %v1228, %v1224
    %v2185 = vpack.c.b16 %v1233, %v1229
    %v2186 = vpack.c.b16 %v1234, %v1230
    %v2187 = vpack.c.b16 %v1235, %v1231
    %v2188 = vpack.c.b16 %v1236, %v1232
    %v2189 = vpack.c.b16 %v1241, %v1237
    %v2190 = vpack.c.b16 %v1242, %v1238
    %v2191 = vpack.c.b16 %v1243, %v1239
    %v2192 = vpack.c.b16 %v1244, %v1240
    %v2193 = vpack.c.b16 %v1249, %v1245
    %v2194 = vpack.c.b16 %v1250, %v1246
    %v2195 = vpack.c.b16 %v1251, %v1247
    %v2196 = vpack.c.b16 %v1252, %v1248
    %v2197 = vpack.c.b16 %v1257, %v1253
    %v2198 = vpack.c.b16 %v1258, %v1254
    %v2199 = vpack.c.b16 %v1259, %v1255
    %v2200 = vpack.c.b16 %v1260, %v1256
    %v2201 = vpack.c.b16 %v1265, %v1261
    %v2202 = vpack.c.b16 %v1266, %v1262
    %v2203 = vpack.c.b16 %v1267, %v1263
    %v2204 = vpack.c.b16 %v1268, %v1264
    %v2205 = vpack.c.b16 %v1273, %v1269
    %v2206 = vpack.c.b16 %v1274, %v1270
    %v2207 = vpack.c.b16 %v1275, %v1271
    %v2208 = vpack.c.b16 %v1276, %v1272
    %v2209 = vpack.c.b16 %v1281, %v1277
    %v2210 = vpack.c.b16 %v1282, %v1278
    %v2211 = vpack.c.b16 %v1283, %v1279
    %v2212 = vpack.c.b16 %v1284, %v1280
    %v2213 = vpack.c.b16 %v1289, %v1285
    %v2214 = vpack.c.b16 %v1290, %v1286
    %v2215 = vpack.c.b16 %v1291, %v1287
    %v2216 = vpack.c.b16 %v1292, %v1288
    %v2217 = vpack.c.b16 %v1297, %v1293
    %v2218 = vpack.c.b16 %v1298, %v1294
    %v2219 = vpack.c.b16 %v1299, %v1295
    %v2220 = vpack.c.b16 %v1300, %v1296
    %v2221 = vpack.c.b16 %v1305, %v1301
    %v2222 = vpack.c.b16 %v1306, %v1302
    %v2223 = vpack.c.b16 %v1307, %v1303
    %v2224 = vpack.c.b16 %v1308, %v1304
    %v2225 = vpack.c.b16 %v1313, %v1309
    %v2226 = vpack.c.b16 %v1314, %v1310
    %v2227 = vpack.c.b16 %v1315, %v1311
    %v2228 = vpack.c.b16 %v1316, %v1312
    %v2229 = vpack.c.b16 %v1321, %v1317
    %v2230 = vpack.c.b16 %v1322, %v1318
    %v2231 = vpack.c.b16 %v1323, %v1319
    %v2232 = vpack.c.b16 %v1324, %v1320
    %v2233 = vpack.c.b16 %v1329, %v1325
    %v2234 = vpack.c.b16 %v1330, %v1326
    %v2235 = vpack.c.b16 %v1331, %v1327
    %v2236 = vpack.c.b16 %v1332, %v1328
    %v2237 = vpack.c.b16 %v1337, %v1333
    %v2238 = vpack.c.b16 %v1338, %v1334
    %v2239 = vpack.c.b16 %v1339, %v1335
    %v2240 = vpack.c.b16 %v1340, %v1336
    %v2241 = vpack.c.b16 %v1345, %v1341
    %v2242 = vpack.c.b16 %v1346, %v1342
    %v2243 = vpack.c.b16 %v1347, %v1343
    %v2244 = vpack.c.b16 %v1348, %v1344
    %v2245 = vpack.c.b16 %v1353, %v1349
    %v2246 = vpack.c.b16 %v1354, %v1350
    %v2247 = vpack.c.b16 %v1355, %v1351
    %v2248 = vpack.c.b16 %v1356, %v1352
    %v2249 = vpack.c.b16 %v1361, %v1357
    %v2250 = vpack.c.b16 %v1362, %v1358
    %v2251 = vpack.c.b16 %v1363, %v1359
    %v2252 = vpack.c.b16 %v1364, %v1360
    %v2253 = vpack.c.b16 %v1369, %v1365
    %v2254 = vpack.c.b16 %v1370, %v1366
    %v2255 = vpack.c.b16 %v1371, %v1367
    %v2256 = vpack.c.b16 %v1372, %v1368
    %v2257 = vpack.c.b16 %v1377, %v1373
    %v2258 = vpack.c.b16 %v1378, %v1374
    %v2259 = vpack.c.b16 %v1379, %v1375
    %v2260 = vpack.c.b16 %v1380, %v1376
    %v2261 = vpack.c.b16 %v1385, %v1381
    %v2262 = vpack.c.b16 %v1386, %v1382
    %v2263 = vpack.c.b16 %v1387, %v1383
    %v2264 = vpack.c.b16 %v1388, %v1384
    %v2265 = vpack.c.b16 %v1393, %v1389
    %v2266 = vpack.c.b16 %v1394, %v1390
    %v2267 = vpack.c.b16 %v1395, %v1391
    %v2268 = vpack.c.b16 %v1396, %v1392
    %v2269 = vpack.c.b16 %v1401, %v1397
    %v2270 = vpack.c.b16 %v1402, %v1398
    %v2271 = vpack.c.b16 %v1403, %v1399
    %v2272 = vpack.c.b16 %v1404, %v1400
    %v2273 = vpack.c.b16 %v1409, %v1405
    %v2274 = vpack.c.b16 %v1410, %v1406
    %v2275 = vpack.c.b16 %v1411, %v1407
    %v2276 = vpack.c.b16 %v1412, %v1408
    %v2277 = vpack.c.b16 %v1417, %v1413
    %v2278 = vpack.c.b16 %v1418, %v1414
    %v2279 = vpack.c.b16 %v1419, %v1415
    %v2280 = vpack.c.b16 %v1420, %v1416
    %v2281 = vpack.c.b16 %v1425, %v1421
    %v2282 = vpack.c.b16 %v1426, %v1422
    %v2283 = vpack.c.b16 %v1427, %v1423
    %v2284 = vpack.c.b16 %v1428, %v1424
    %v2285 = vpack.c.b16 %v1433, %v1429
    %v2286 = vpack.c.b16 %v1434, %v1430
    %v2287 = vpack.c.b16 %v1435, %v1431
    %v2288 = vpack.c.b16 %v1436, %v1432
    %v2289 = vpack.c.b16 %v1441, %v1437
    %v2290 = vpack.c.b16 %v1442, %v1438
    %v2291 = vpack.c.b16 %v1443, %v1439
    %v2292 = vpack.c.b16 %v1444, %v1440
    %v2293 = vpack.c.b16 %v1449, %v1445
    %v2294 = vpack.c.b16 %v1450, %v1446
    %v2295 = vpack.c.b16 %v1451, %v1447
    %v2296 = vpack.c.b16 %v1452, %v1448
    %v2297 = vpack.c.b16 %v1457, %v1453
    %v2298 = vpack.c.b16 %v1458, %v1454
    %v2299 = vpack.c.b16 %v1459, %v1455
    %v2300 = vpack.c.b16 %v1460, %v1456
    %v2301 = vpack.c.b16 %v1465, %v1461
    %v2302 = vpack.c.b16 %v1466, %v1462
    %v2303 = vpack.c.b16 %v1467, %v1463
    %v2304 = vpack.c.b16 %v1468, %v1464
    %v2305 = vpack.c.b16 %v1473, %v1469
    %v2306 = vpack.c.b16 %v1474, %v1470
    %v2307 = vpack.c.b16 %v1475, %v1471
    %v2308 = vpack.c.b16 %v1476, %v1472
    %v2309 = vpack.c.b16 %v1481, %v1477
    %v2310 = vpack.c.b16 %v1482, %v1478
    %v2311 = vpack.c.b16 %v1483, %v1479
    %v2312 = vpack.c.b16 %v1484, %v1480
    %v2313 = vpack.c.b16 %v1489, %v1485
    %v2314 = vpack.c.b16 %v1490, %v1486
    %v2315 = vpack.c.b16 %v1491, %v1487
    %v2316 = vpack.c.b16 %v1492, %v1488
    %v2317 = vpack.c.b16 %v1497, %v1493
    %v2318 = vpack.c.b16 %v1498, %v1494
    %v2319 = vpack.c.b16 %v1499, %v1495
    %v2320 = vpack.c.b16 %v1500, %v1496
    %v2321 = vpack.c.b16 %v1505, %v1501
    %v2322 = vpack.c.b16 %v1506, %v1502
    %v2323 = vpack.c.b16 %v1507, %v1503
    %v2324 = vpack.c.b16 %v1508, %v1504
    %v2325 = vpack.c.b16 %v1513, %v1509
    %v2326 = vpack.c.b16 %v1514, %v1510
    %v2327 = vpack.c.b16 %v1515, %v1511
    %v2328 = vpack.c.b16 %v1516, %v1512
    %v2329 = vpack.c.b16 %v1521, %v1517
    %v2330 = vpack.c.b16 %v1522, %v1518
    %v2331 = vpack.c.b16 %v1523, %v1519
    %v2332 = vpack.c.b16 %v1524, %v1520
    %v2333 = vpack.c.b16 %v1529, %v1525
    %v2334 = vpack.c.b16 %v1530, %v1526
    %v2335 = vpack.c.b16 %v1531, %v1527
    %v2336 = vpack.c.b16 %v1532, %v1528
    %v2337 = vpack.c.b16 %v1537, %v1533
    %v2338 = vpack.c.b16 %v1538, %v1534
    %v2339 = vpack.c.b16 %v1539, %v1535
    %v2340 = vpack.c.b16 %v1540, %v1536
    %v2341 = vpack.c.b16 %v1545, %v1541
    %v2342 = vpack.c.b16 %v1546, %v1542
    %v2343 = vpack.c.b16 %v1547, %v1543
    %v2344 = vpack.c.b16 %v1548, %v1544
    %v2345 = vpack.c.b16 %v1553, %v1549
    %v2346 = vpack.c.b16 %v1554, %v1550
    %v2347 = vpack.c.b16 %v1555, %v1551
    %v2348 = vpack.c.b16 %v1556, %v1552
    %v2349 = vpack.c.b16 %v1561, %v1557
    %v2350 = vpack.c.b16 %v1562, %v1558
    %v2351 = vpack.c.b16 %v1563, %v1559
    %v2352 = vpack.c.b16 %v1564, %v1560
    %v2353 = vpack.c.b16 %v1569, %v1565
    %v2354 = vpack.c.b16 %v1570, %v1566
    %v2355 = vpack.c.b16 %v1571, %v1567
    %v2356 = vpack.c.b16 %v1572, %v1568
    %v2357 = vpack.c.b16 %v1577, %v1573
    %v2358 = vpack.c.b16 %v1578, %v1574
    %v2359 = vpack.c.b16 %v1579, %v1575
    %v2360 = vpack.c.b16 %v1580, %v1576
    %v2361 = vpack.c.b16 %v1585, %v1581
    %v2362 = vpack.c.b16 %v1586, %v1582
    %v2363 = vpack.c.b16 %v1587, %v1583
    %v2364 = vpack.c.b16 %v1588, %v1584
    %v2365 = vpack.c.b16 %v1593, %v1589
    %v2366 = vpack.c.b16 %v1594, %v1590
    %v2367 = vpack.c.b16 %v1595, %v1591
    %v2368 = vpack.c.b16 %v1596, %v1592
    %v2369 = vpack.c.b16 %v1601, %v1597
    %v2370 = vpack.c.b16 %v1602, %v1598
    %v2371 = vpack.c.b16 %v1603, %v1599
    %v2372 = vpack.c.b16 %v1604, %v1600
    %v2373 = vpack.c.b16 %v1609, %v1605
    %v2374 = vpack.c.b16 %v1610, %v1606
    %v2375 = vpack.c.b16 %v1611, %v1607
    %v2376 = vpack.c.b16 %v1612, %v1608
    %v2377 = vpack.c.b16 %v1617, %v1613
    %v2378 = vpack.c.b16 %v1618, %v1614
    %v2379 = vpack.c.b16 %v1619, %v1615
    %v2380 = vpack.c.b16 %v1620, %v1616
    %v2381 = vpack.c.b16 %v1625, %v1621
    %v2382 = vpack.c.b16 %v1626, %v1622
    %v2383 = vpack.c.b16 %v1627, %v1623
    %v2384 = vpack.c.b16 %v1628, %v1624
    %v2385 = vpack.c.b16 %v1633, %v1629
    %v2386 = vpack.c.b16 %v1634, %v1630
    %v2387 = vpack.c.b16 %v1635, %v1631
    %v2388 = vpack.c.b16 %v1636, %v1632
    %v2389 = vpack.c.b16 %v1641, %v1637
    %v2390 = vpack.c.b16 %v1642, %v1638
    %v2391 = vpack.c.b16 %v1643, %v1639
    %v2392 = vpack.c.b16 %v1644, %v1640
    %v2393 = vpack.c.b16 %v1649, %v1645
    %v2394 = vpack.c.b16 %v1650, %v1646
    %v2395 = vpack.c.b16 %v1651, %v1647
    %v2396 = vpack.c.b16 %v1652, %v1648
    %v2397 = vpack.c.b16 %v1657, %v1653
    %v2398 = vpack.c.b16 %v1658, %v1654
    %v2399 = vpack.c.b16 %v1659, %v1655
    %v2400 = vpack.c.b16 %v1660, %v1656
    %v2401 = vpack.c.b16 %v1665, %v1661
    %v2402 = vpack.c.b16 %v1666, %v1662
    %v2403 = vpack.c.b16 %v1667, %v1663
    %v2404 = vpack.c.b16 %v1668, %v1664
    %v2405 = vpack.c.b16 %v1673, %v1669
    %v2406 = vpack.c.b16 %v1674, %v1670
    %v2407 = vpack.c.b16 %v1675, %v1671
    %v2408 = vpack.c.b16 %v1676, %v1672
    %v2409 = vpack.c.b16 %v1681, %v1677
    %v2410 = vpack.c.b16 %v1682, %v1678
    %v2411 = vpack.c.b16 %v1683, %v1679
    %v2412 = vpack.c.b16 %v1684, %v1680
    %v2413 = vpack.c.b16 %v1689, %v1685
    %v2414 = vpack.c.b16 %v1690, %v1686
    %v2415 = vpack.c.b16 %v1691, %v1687
    %v2416 = vpack.c.b16 %v1692, %v1688
    %v2417 = vpack.c.b16 %v1697, %v1693
    %v2418 = vpack.c.b16 %v1698, %v1694
    %v2419 = vpack.c.b16 %v1699, %v1695
    %v2420 = vpack.c.b16 %v1700, %v1696
    %v2421 = vpack.c.b16 %v1705, %v1701
    %v2422 = vpack.c.b16 %v1706, %v1702
    %v2423 = vpack.c.b16 %v1707, %v1703
    %v2424 = vpack.c.b16 %v1708, %v1704
    %v2425 = vpack.c.b16 %v1713, %v1709
    %v2426 = vpack.c.b16 %v1714, %v1710
    %v2427 = vpack.c.b16 %v1715, %v1711
    %v2428 = vpack.c.b16 %v1716, %v1712
    %v2429 = vpack.c.b16 %v1721, %v1717
    %v2430 = vpack.c.b16 %v1722, %v1718
    %v2431 = vpack.c.b16 %v1723, %v1719
    %v2432 = vpack.c.b16 %v1724, %v1720
    %v2433 = vpack.c.b16 %v1729, %v1725
    %v2434 = vpack.c.b16 %v1730, %v1726
    %v2435 = vpack.c.b16 %v1731, %v1727
    %v2436 = vpack.c.b16 %v1732, %v1728
    %v2437 = vpack.c.b16 %v1737, %v1733
    %v2438 = vpack.c.b16 %v1738, %v1734
    %v2439 = vpack.c.b16 %v1739, %v1735
    %v2440 = vpack.c.b16 %v1740, %v1736
    %v2441 = vpack.c.b16 %v1745, %v1741
    %v2442 = vpack.c.b16 %v1746, %v1742
    %v2443 = vpack.c.b16 %v1747, %v1743
    %v2444 = vpack.c.b16 %v1748, %v1744
    %v2445 = vpack.c.b16 %v1753, %v1749
    %v2446 = vpack.c.b16 %v1754, %v1750
    %v2447 = vpack.c.b16 %v1755, %v1751
    %v2448 = vpack.c.b16 %v1756, %v1752
    %v2449 = vpack.c.b16 %v1761, %v1757
    %v2450 = vpack.c.b16 %v1762, %v1758
    %v2451 = vpack.c.b16 %v1763, %v1759
    %v2452 = vpack.c.b16 %v1764, %v1760
    %v2453 = vpack.c.b16 %v1769, %v1765
    %v2454 = vpack.c.b16 %v1770, %v1766
    %v2455 = vpack.c.b16 %v1771, %v1767
    %v2456 = vpack.c.b16 %v1772, %v1768
    %v2457 = vpack.c.b16 %v1777, %v1773
    %v2458 = vpack.c.b16 %v1778, %v1774
    %v2459 = vpack.c.b16 %v1779, %v1775
    %v2460 = vpack.c.b16 %v1780, %v1776
    %v2461 = vpack.c.b16 %v1785, %v1781
    %v2462 = vpack.c.b16 %v1786, %v1782
    %v2463 = vpack.c.b16 %v1787, %v1783
    %v2464 = vpack.c.b16 %v1788, %v1784
    %v2465 = vpack.c.b16 %v1793, %v1789
    %v2466 = vpack.c.b16 %v1794, %v1790
    %v2467 = vpack.c.b16 %v1795, %v1791
    %v2468 = vpack.c.b16 %v1796, %v1792
    %v2469 = vpack.c.b16 %v1801, %v1797
    %v2470 = vpack.c.b16 %v1802, %v1798
    %v2471 = vpack.c.b16 %v1803, %v1799
    %v2472 = vpack.c.b16 %v1804, %v1800
    %v2473 = vpack.c.b16 %v1809, %v1805
    %v2474 = vpack.c.b16 %v1810, %v1806
    %v2475 = vpack.c.b16 %v1811, %v1807
    %v2476 = vpack.c.b16 %v1812, %v1808
    %v2477 = vpack.c.b16 %v1817, %v1813
    %v2478 = vpack.c.b16 %v1818, %v1814
    %v2479 = vpack.c.b16 %v1819, %v1815
    %v2480 = vpack.c.b16 %v1820, %v1816
    %v2481 = vpack.c.b16 %v1825, %v1821
    %v2482 = vpack.c.b16 %v1826, %v1822
    %v2483 = vpack.c.b16 %v1827, %v1823
    %v2484 = vpack.c.b16 %v1828, %v1824
    %v2485 = vpack.c.b16 %v1833, %v1829
    %v2486 = vpack.c.b16 %v1834, %v1830
    %v2487 = vpack.c.b16 %v1835, %v1831
    %v2488 = vpack.c.b16 %v1836, %v1832
    %v2489 = vpack.c.b16 %v1841, %v1837
    %v2490 = vpack.c.b16 %v1842, %v1838
    %v2491 = vpack.c.b16 %v1843, %v1839
    %v2492 = vpack.c.b16 %v1844, %v1840
    %v2493 = vpack.c.b16 %v1849, %v1845
    %v2494 = vpack.c.b16 %v1850, %v1846
    %v2495 = vpack.c.b16 %v1851, %v1847
    %v2496 = vpack.c.b16 %v1852, %v1848
    %v2497 = vpack.c.b16 %v1857, %v1853
    %v2498 = vpack.c.b16 %v1858, %v1854
    %v2499 = vpack.c.b16 %v1859, %v1855
    %v2500 = vpack.c.b16 %v1860, %v1856
    %v2501 = vpack.c.b16 %v1865, %v1861
    %v2502 = vpack.c.b16 %v1866, %v1862
    %v2503 = vpack.c.b16 %v1867, %v1863
    %v2504 = vpack.c.b16 %v1868, %v1864
    %v2505 = vpack.c.b16 %v1873, %v1869
    %v2506 = vpack.c.b16 %v1874, %v1870
    %v2507 = vpack.c.b16 %v1875, %v1871
    %v2508 = vpack.c.b16 %v1876, %v1872
    %v2509 = vpack.c.b16 %v1881, %v1877
    %v2510 = vpack.c.b16 %v1882, %v1878
    %v2511 = vpack.c.b16 %v1883, %v1879
    %v2512 = vpack.c.b16 %v1884, %v1880
    %v2513 = vpack.c.b16 %v1889, %v1885
    %v2514 = vpack.c.b16 %v1890, %v1886
    %v2515 = vpack.c.b16 %v1891, %v1887
    %v2516 = vpack.c.b16 %v1892, %v1888
    %v2517 = vpack.c.b16 %v1897, %v1893
    %v2518 = vpack.c.b16 %v1898, %v1894
    %v2519 = vpack.c.b16 %v1899, %v1895
    %v2520 = vpack.c.b16 %v1900, %v1896
    %v2521 = vpack.c.b16 %v1905, %v1901
    %v2522 = vpack.c.b16 %v1906, %v1902
    %v2523 = vpack.c.b16 %v1907, %v1903
    %v2524 = vpack.c.b16 %v1908, %v1904
    %v2525 = vpack.c.b16 %v1913, %v1909
    %v2526 = vpack.c.b16 %v1914, %v1910
    %v2527 = vpack.c.b16 %v1915, %v1911
    %v2528 = vpack.c.b16 %v1916, %v1912
    %v2529 = vpack.c.b16 %v1921, %v1917
    %v2530 = vpack.c.b16 %v1922, %v1918
    %v2531 = vpack.c.b16 %v1923, %v1919
    %v2532 = vpack.c.b16 %v1924, %v1920
    %v2533 = vpack.c.b16 %v1929, %v1925
    %v2534 = vpack.c.b16 %v1930, %v1926
    %v2535 = vpack.c.b16 %v1931, %v1927
    %v2536 = vpack.c.b16 %v1932, %v1928
    %v2537 = vpack.c.b16 %v1937, %v1933
    %v2538 = vpack.c.b16 %v1938, %v1934
    %v2539 = vpack.c.b16 %v1939, %v1935
    %v2540 = vpack.c.b16 %v1940, %v1936
    %v2541 = vpack.c.b16 %v1945, %v1941
    %v2542 = vpack.c.b16 %v1946, %v1942
    %v2543 = vpack.c.b16 %v1947, %v1943
    %v2544 = vpack.c.b16 %v1948, %v1944
    %v2545 = vpack.c.b16 %v1953, %v1949
    %v2546 = vpack.c.b16 %v1954, %v1950
    %v2547 = vpack.c.b16 %v1955, %v1951
    %v2548 = vpack.c.b16 %v1956, %v1952
    %v2549 = vpack.c.b16 %v1961, %v1957
    %v2550 = vpack.c.b16 %v1962, %v1958
    %v2551 = vpack.c.b16 %v1963, %v1959
    %v2552 = vpack.c.b16 %v1964, %v1960
    %v2553 = vpack.c.b16 %v1969, %v1965
    %v2554 = vpack.c.b16 %v1970, %v1966
    %v2555 = vpack.c.b16 %v1971, %v1967
    %v2556 = vpack.c.b16 %v1972, %v1968
    %v2557 = vpack.c.b16 %v1977, %v1973
    %v2558 = vpack.c.b16 %v1978, %v1974
    %v2559 = vpack.c.b16 %v1979, %v1975
    %v2560 = vpack.c.b16 %v1980, %v1976
    %v2561 = vpack.c.b16 %v1985, %v1981
    %v2562 = vpack.c.b16 %v1986, %v1982
    %v2563 = vpack.c.b16 %v1987, %v1983
    %v2564 = vpack.c.b16 %v1988, %v1984
    %v2565 = vpack.c.b16 %v1993, %v1989
    %v2566 = vpack.c.b16 %v1994, %v1990
    %v2567 = vpack.c.b16 %v1995, %v1991
    %v2568 = vpack.c.b16 %v1996, %v1992
    %v2569 = vpack.c.b16 %v2001, %v1997
    %v2570 = vpack.c.b16 %v2002, %v1998
    %v2571 = vpack.c.b16 %v2003, %v1999
    %v2572 = vpack.c.b16 %v2004, %v2000
    %v2573 = vpack.c.b16 %v2009, %v2005
    %v2574 = vpack.c.b16 %v2010, %v2006
    %v2575 = vpack.c.b16 %v2011, %v2007
    %v2576 = vpack.c.b16 %v2012, %v2008
    %v2577 = vpack.c.b16 %v2017, %v2013
    %v2578 = vpack.c.b16 %v2018, %v2014
    %v2579 = vpack.c.b16 %v2019, %v2015
    %v2580 = vpack.c.b16 %v2020, %v2016
    %v2581 = vpack.c.b16 %v2025, %v2021
    %v2582 = vpack.c.b16 %v2026, %v2022
    %v2583 = vpack.c.b16 %v2027, %v2023
    %v2584 = vpack.c.b16 %v2028, %v2024
    %v2585 = vpack.c.b16 %v2033, %v2029
    %v2586 = vpack.c.b16 %v2034, %v2030
    %v2587 = vpack.c.b16 %v2035, %v2031
    %v2588 = vpack.c.b16 %v2036, %v2032
    %v2589 = vpack.c.b16 %v2041, %v2037
    %v2590 = vpack.c.b16 %v2042, %v2038
    %v2591 = vpack.c.b16 %v2043, %v2039
    %v2592 = vpack.c.b16 %v2044, %v2040
    %v2593 = vpack.c.b16 %v2049, %v2045
    %v2594 = vpack.c.b16 %v2050, %v2046
    %v2595 = vpack.c.b16 %v2051, %v2047
    %v2596 = vpack.c.b16 %v2052, %v2048
    %v2597 = vpack.c.b16 %v2057, %v2053
    %v2598 = vpack.c.b16 %v2058, %v2054
    %v2599 = vpack.c.b16 %v2059, %v2055
    %v2600 = vpack.c.b16 %v2060, %v2056
    %v2601 = vpack.c.b16 %v2065, %v2061
    %v2602 = vpack.c.b16 %v2066, %v2062
    %v2603 = vpack.c.b16 %v2067, %v2063
    %v2604 = vpack.c.b16 %v2068, %v2064
    %v2605 = vpack.c.b16 %v2073, %v2069
    %v2606 = vpack.c.b16 %v2074, %v2070
    %v2607 = vpack.c.b16 %v2075, %v2071
    %v2608 = vpack.c.b16 %v2076, %v2072
    %v2609 = vpack.c.b16 %v2081, %v2077
    %v2610 = vpack.c.b16 %v2082, %v2078
    %v2611 = vpack.c.b16 %v2083, %v2079
    %v2612 = vpack.c.b16 %v2084, %v2080
    %v2613 = vpack.c.b16 %v2089, %v2085
    %v2614 = vpack.c.b16 %v2090, %v2086
    %v2615 = vpack.c.b16 %v2091, %v2087
    %v2616 = vpack.c.b16 %v2092, %v2088
    %v2617 = vpack.c.b16 %v2097, %v2093
    %v2618 = vpack.c.b16 %v2098, %v2094
    %v2619 = vpack.c.b16 %v2099, %v2095
    %v2620 = vpack.c.b16 %v2100, %v2096
    %v2621 = vpack.c.b16 %v2105, %v2101
    %v2622 = vpack.c.b16 %v2106, %v2102
    %v2623 = vpack.c.b16 %v2107, %v2103
    %v2624 = vpack.c.b16 %v2108, %v2104
    %v2625 = vpack.c.b16 %v2113, %v2109
    %v2626 = vpack.c.b16 %v2114, %v2110
    %v2627 = vpack.c.b16 %v2115, %v2111
    %v2628 = vpack.c.b16 %v2116, %v2112
    %3141 = vmatpush.bf16.msra.mxu0 %v2145
    %3142 = vmatpush.bf16.msra.mxu0 %v2141
    %3143 = vmatpush.bf16.msra.mxu0 %v2137
    %3144 = vmatpush.bf16.msra.mxu0 %v2133
    %3145 = vmatpush.bf16.msra.mxu0 %v2129
    %3146 = vmatpush.bf16.msra.mxu0 %v2125
    %3147 = vmatpush.bf16.msra.mxu0 %v2121
    %3148 = vmatpush.bf16.msra.mxu0 %v2117
    %3149 = vmatmul.bf16.gmra.mxu0 %v547
    %v3150 = vpop.f32.mrf.mxu0
    %v3151 = vadd.f32 %v537, %v3150
    %v3152 = vpop.f32.mrf.mxu0
    %3153 = vdwg.mxu0
    %3154 = vmatpush.bf16.msra.mxu0 %v2177
    %3155 = vmatpush.bf16.msra.mxu0 %v2173
    %3156 = vmatpush.bf16.msra.mxu0 %v2169
    %3157 = vmatpush.bf16.msra.mxu0 %v2165
    %3158 = vmatpush.bf16.msra.mxu0 %v2161
    %3159 = vmatpush.bf16.msra.mxu0 %v2157
    %3160 = vmatpush.bf16.msra.mxu0 %v2153
    %3161 = vmatpush.bf16.msra.mxu0 %v2149
    %3162 = vmatmul.bf16.gmra.mxu0 %v548
    %v3163 = vpop.f32.mrf.mxu0
    %v3164 = vadd.f32 %v3151, %v3163
    %v3165 = vpop.f32.mrf.mxu0
    %3166 = vdwg.mxu0
    %3167 = vmatpush.bf16.msra.mxu0 %v2209
    %3168 = vmatpush.bf16.msra.mxu0 %v2205
    %3169 = vmatpush.bf16.msra.mxu0 %v2201
    %3170 = vmatpush.bf16.msra.mxu0 %v2197
    %3171 = vmatpush.bf16.msra.mxu0 %v2193
    %3172 = vmatpush.bf16.msra.mxu0 %v2189
    %3173 = vmatpush.bf16.msra.mxu0 %v2185
    %3174 = vmatpush.bf16.msra.mxu0 %v2181
    %3175 = vmatmul.bf16.gmra.mxu0 %v549
    %v3176 = vpop.f32.mrf.mxu0
    %v3177 = vadd.f32 %v3164, %v3176
    %v3178 = vpop.f32.mrf.mxu0
    %3179 = vdwg.mxu0
    %3180 = vmatpush.bf16.msra.mxu0 %v2241
    %3181 = vmatpush.bf16.msra.mxu0 %v2237
    %3182 = vmatpush.bf16.msra.mxu0 %v2233
    %3183 = vmatpush.bf16.msra.mxu0 %v2229
    %3184 = vmatpush.bf16.msra.mxu0 %v2225
    %3185 = vmatpush.bf16.msra.mxu0 %v2221
    %3186 = vmatpush.bf16.msra.mxu0 %v2217
    %3187 = vmatpush.bf16.msra.mxu0 %v2213
    %3188 = vmatmul.bf16.gmra.mxu0 %v550
    %v3189 = vpop.f32.mrf.mxu0
    %v3190 = vadd.f32 %v3177, %v3189
    %v3191 = vpop.f32.mrf.mxu0
    %3192 = vdwg.mxu0
    %3193 = vmatpush.bf16.msra.mxu0 %v2273
    %3194 = vmatpush.bf16.msra.mxu0 %v2269
    %3195 = vmatpush.bf16.msra.mxu0 %v2265
    %3196 = vmatpush.bf16.msra.mxu0 %v2261
    %3197 = vmatpush.bf16.msra.mxu0 %v2257
    %3198 = vmatpush.bf16.msra.mxu0 %v2253
    %3199 = vmatpush.bf16.msra.mxu0 %v2249
    %3200 = vmatpush.bf16.msra.mxu0 %v2245
    %3201 = vmatmul.bf16.gmra.mxu0 %v551
    %v3202 = vpop.f32.mrf.mxu0
    %v3203 = vadd.f32 %v3190, %v3202
    %v3204 = vpop.f32.mrf.mxu0
    %3205 = vdwg.mxu0
    %3206 = vmatpush.bf16.msra.mxu0 %v2305
    %3207 = vmatpush.bf16.msra.mxu0 %v2301
    %3208 = vmatpush.bf16.msra.mxu0 %v2297
    %3209 = vmatpush.bf16.msra.mxu0 %v2293
    %3210 = vmatpush.bf16.msra.mxu0 %v2289
    %3211 = vmatpush.bf16.msra.mxu0 %v2285
    %3212 = vmatpush.bf16.msra.mxu0 %v2281
    %3213 = vmatpush.bf16.msra.mxu0 %v2277
    %3214 = vmatmul.bf16.gmra.mxu0 %v552
    %v3215 = vpop.f32.mrf.mxu0
    %v3216 = vadd.f32 %v3203, %v3215
    %v3217 = vpop.f32.mrf.mxu0
    %3218 = vdwg.mxu0
    %3219 = vmatpush.bf16.msra.mxu0 %v2337
    %3220 = vmatpush.bf16.msra.mxu0 %v2333
    %3221 = vmatpush.bf16.msra.mxu0 %v2329
    %3222 = vmatpush.bf16.msra.mxu0 %v2325
    %3223 = vmatpush.bf16.msra.mxu0 %v2321
    %3224 = vmatpush.bf16.msra.mxu0 %v2317
    %3225 = vmatpush.bf16.msra.mxu0 %v2313
    %3226 = vmatpush.bf16.msra.mxu0 %v2309
    %3227 = vmatmul.bf16.gmra.mxu0 %v553
    %v3228 = vpop.f32.mrf.mxu0
    %v3229 = vadd.f32 %v3216, %v3228
    %v3230 = vpop.f32.mrf.mxu0
    %3231 = vdwg.mxu0
    %3232 = vmatpush.bf16.msra.mxu0 %v2369
    %3233 = vmatpush.bf16.msra.mxu0 %v2365
    %3234 = vmatpush.bf16.msra.mxu0 %v2361
    %3235 = vmatpush.bf16.msra.mxu0 %v2357
    %3236 = vmatpush.bf16.msra.mxu0 %v2353
    %3237 = vmatpush.bf16.msra.mxu0 %v2349
    %3238 = vmatpush.bf16.msra.mxu0 %v2345
    %3239 = vmatpush.bf16.msra.mxu0 %v2341
    %3240 = vmatmul.bf16.gmra.mxu0 %v554
    %v3241 = vpop.f32.mrf.mxu0
    %v3242 = vadd.f32 %v3229, %v3241
    %v3243 = vpop.f32.mrf.mxu0
    %3244 = vdwg.mxu0
    %3245 = vmatpush.bf16.msra.mxu0 %v2401
    %3246 = vmatpush.bf16.msra.mxu0 %v2397
    %3247 = vmatpush.bf16.msra.mxu0 %v2393
    %3248 = vmatpush.bf16.msra.mxu0 %v2389
    %3249 = vmatpush.bf16.msra.mxu0 %v2385
    %3250 = vmatpush.bf16.msra.mxu0 %v2381
    %3251 = vmatpush.bf16.msra.mxu0 %v2377
    %3252 = vmatpush.bf16.msra.mxu0 %v2373
    %3253 = vmatmul.bf16.gmra.mxu0 %v557
    %v3254 = vpop.f32.mrf.mxu0
    %v3255 = vadd.f32 %v3242, %v3254
    %v3256 = vpop.f32.mrf.mxu0
    %3257 = vdwg.mxu0
    %3258 = vmatpush.bf16.msra.mxu0 %v2433
    %3259 = vmatpush.bf16.msra.mxu0 %v2429
    %3260 = vmatpush.bf16.msra.mxu0 %v2425
    %3261 = vmatpush.bf16.msra.mxu0 %v2421
    %3262 = vmatpush.bf16.msra.mxu0 %v2417
    %3263 = vmatpush.bf16.msra.mxu0 %v2413
    %3264 = vmatpush.bf16.msra.mxu0 %v2409
    %3265 = vmatpush.bf16.msra.mxu0 %v2405
    %3266 = vmatmul.bf16.gmra.mxu0 %v558
    %v3267 = vpop.f32.mrf.mxu0
    %v3268 = vadd.f32 %v3255, %v3267
    %v3269 = vpop.f32.mrf.mxu0
    %3270 = vdwg.mxu0
    %3271 = vmatpush.bf16.msra.mxu0 %v2465
    %3272 = vmatpush.bf16.msra.mxu0 %v2461
    %3273 = vmatpush.bf16.msra.mxu0 %v2457
    %3274 = vmatpush.bf16.msra.mxu0 %v2453
    %3275 = vmatpush.bf16.msra.mxu0 %v2449
    %3276 = vmatpush.bf16.msra.mxu0 %v2445
    %3277 = vmatpush.bf16.msra.mxu0 %v2441
    %3278 = vmatpush.bf16.msra.mxu0 %v2437
    %3279 = vmatmul.bf16.gmra.mxu0 %v559
    %v3280 = vpop.f32.mrf.mxu0
    %v3281 = vadd.f32 %v3268, %v3280
    %v3282 = vpop.f32.mrf.mxu0
    %3283 = vdwg.mxu0
    %3284 = vmatpush.bf16.msra.mxu0 %v2497
    %3285 = vmatpush.bf16.msra.mxu0 %v2493
    %3286 = vmatpush.bf16.msra.mxu0 %v2489
    %3287 = vmatpush.bf16.msra.mxu0 %v2485
    %3288 = vmatpush.bf16.msra.mxu0 %v2481
    %3289 = vmatpush.bf16.msra.mxu0 %v2477
    %3290 = vmatpush.bf16.msra.mxu0 %v2473
    %3291 = vmatpush.bf16.msra.mxu0 %v2469
    %3292 = vmatmul.bf16.gmra.mxu0 %v560
    %v3293 = vpop.f32.mrf.mxu0
    %v3294 = vadd.f32 %v3281, %v3293
    %v3295 = vpop.f32.mrf.mxu0
    %3296 = vdwg.mxu0
    %3297 = vmatpush.bf16.msra.mxu0 %v2529
    %3298 = vmatpush.bf16.msra.mxu0 %v2525
    %3299 = vmatpush.bf16.msra.mxu0 %v2521
    %3300 = vmatpush.bf16.msra.mxu0 %v2517
    %3301 = vmatpush.bf16.msra.mxu0 %v2513
    %3302 = vmatpush.bf16.msra.mxu0 %v2509
    %3303 = vmatpush.bf16.msra.mxu0 %v2505
    %3304 = vmatpush.bf16.msra.mxu0 %v2501
    %3305 = vmatmul.bf16.gmra.mxu0 %v561
    %v3306 = vpop.f32.mrf.mxu0
    %v3307 = vadd.f32 %v3294, %v3306
    %v3308 = vpop.f32.mrf.mxu0
    %3309 = vdwg.mxu0
    %3310 = vmatpush.bf16.msra.mxu0 %v2561
    %3311 = vmatpush.bf16.msra.mxu0 %v2557
    %3312 = vmatpush.bf16.msra.mxu0 %v2553
    %3313 = vmatpush.bf16.msra.mxu0 %v2549
    %3314 = vmatpush.bf16.msra.mxu0 %v2545
    %3315 = vmatpush.bf16.msra.mxu0 %v2541
    %3316 = vmatpush.bf16.msra.mxu0 %v2537
    %3317 = vmatpush.bf16.msra.mxu0 %v2533
    %3318 = vmatmul.bf16.gmra.mxu0 %v562
    %v3319 = vpop.f32.mrf.mxu0
    %v3320 = vadd.f32 %v3307, %v3319
    %v3321 = vpop.f32.mrf.mxu0
    %3322 = vdwg.mxu0
    %3323 = vmatpush.bf16.msra.mxu0 %v2593
    %3324 = vmatpush.bf16.msra.mxu0 %v2589
    %3325 = vmatpush.bf16.msra.mxu0 %v2585
    %3326 = vmatpush.bf16.msra.mxu0 %v2581
    %3327 = vmatpush.bf16.msra.mxu0 %v2577
    %3328 = vmatpush.bf16.msra.mxu0 %v2573
    %3329 = vmatpush.bf16.msra.mxu0 %v2569
    %3330 = vmatpush.bf16.msra.mxu0 %v2565
    %3331 = vmatmul.bf16.gmra.mxu0 %v563
    %v3332 = vpop.f32.mrf.mxu0
    %v3333 = vadd.f32 %v3320, %v3332
    %v3334 = vpop.f32.mrf.mxu0
    %3335 = vdwg.mxu0
    %3336 = vmatpush.bf16.msra.mxu0 %v2625
    %3337 = vmatpush.bf16.msra.mxu0 %v2621
    %3338 = vmatpush.bf16.msra.mxu0 %v2617
    %3339 = vmatpush.bf16.msra.mxu0 %v2613
    %3340 = vmatpush.bf16.msra.mxu0 %v2609
    %3341 = vmatpush.bf16.msra.mxu0 %v2605
    %3342 = vmatpush.bf16.msra.mxu0 %v2601
    %3343 = vmatpush.bf16.msra.mxu0 %v2597
    %3344 = vmatmul.bf16.gmra.mxu0 %v564
    %v3345 = vpop.f32.mrf.mxu0
    %v3346 = vadd.f32 %v3333, %v3345
    %v3347 = vpop.f32.mrf.mxu0
    %3348 = vdwg.mxu0
    %3349 = vmatpush.bf16.msra.mxu0 %v2146
    %3350 = vmatpush.bf16.msra.mxu0 %v2142
    %3351 = vmatpush.bf16.msra.mxu0 %v2138
    %3352 = vmatpush.bf16.msra.mxu0 %v2134
    %3353 = vmatpush.bf16.msra.mxu0 %v2130
    %3354 = vmatpush.bf16.msra.mxu0 %v2126
    %3355 = vmatpush.bf16.msra.mxu0 %v2122
    %3356 = vmatpush.bf16.msra.mxu0 %v2118
    %3357 = vmatmul.bf16.gmra.mxu0 %v547
    %v3358 = vpop.f32.mrf.mxu0
    %v3359 = vadd.f32 %v538, %v3358
    %v3360 = vpop.f32.mrf.mxu0
    %3361 = vdwg.mxu0
    %3362 = vmatpush.bf16.msra.mxu0 %v2178
    %3363 = vmatpush.bf16.msra.mxu0 %v2174
    %3364 = vmatpush.bf16.msra.mxu0 %v2170
    %3365 = vmatpush.bf16.msra.mxu0 %v2166
    %3366 = vmatpush.bf16.msra.mxu0 %v2162
    %3367 = vmatpush.bf16.msra.mxu0 %v2158
    %3368 = vmatpush.bf16.msra.mxu0 %v2154
    %3369 = vmatpush.bf16.msra.mxu0 %v2150
    %3370 = vmatmul.bf16.gmra.mxu0 %v548
    %v3371 = vpop.f32.mrf.mxu0
    %v3372 = vadd.f32 %v3359, %v3371
    %v3373 = vpop.f32.mrf.mxu0
    %3374 = vdwg.mxu0
    %3375 = vmatpush.bf16.msra.mxu0 %v2210
    %3376 = vmatpush.bf16.msra.mxu0 %v2206
    %3377 = vmatpush.bf16.msra.mxu0 %v2202
    %3378 = vmatpush.bf16.msra.mxu0 %v2198
    %3379 = vmatpush.bf16.msra.mxu0 %v2194
    %3380 = vmatpush.bf16.msra.mxu0 %v2190
    %3381 = vmatpush.bf16.msra.mxu0 %v2186
    %3382 = vmatpush.bf16.msra.mxu0 %v2182
    %3383 = vmatmul.bf16.gmra.mxu0 %v549
    %v3384 = vpop.f32.mrf.mxu0
    %v3385 = vadd.f32 %v3372, %v3384
    %v3386 = vpop.f32.mrf.mxu0
    %3387 = vdwg.mxu0
    %3388 = vmatpush.bf16.msra.mxu0 %v2242
    %3389 = vmatpush.bf16.msra.mxu0 %v2238
    %3390 = vmatpush.bf16.msra.mxu0 %v2234
    %3391 = vmatpush.bf16.msra.mxu0 %v2230
    %3392 = vmatpush.bf16.msra.mxu0 %v2226
    %3393 = vmatpush.bf16.msra.mxu0 %v2222
    %3394 = vmatpush.bf16.msra.mxu0 %v2218
    %3395 = vmatpush.bf16.msra.mxu0 %v2214
    %3396 = vmatmul.bf16.gmra.mxu0 %v550
    %v3397 = vpop.f32.mrf.mxu0
    %v3398 = vadd.f32 %v3385, %v3397
    %v3399 = vpop.f32.mrf.mxu0
    %3400 = vdwg.mxu0
    %3401 = vmatpush.bf16.msra.mxu0 %v2274
    %3402 = vmatpush.bf16.msra.mxu0 %v2270
    %3403 = vmatpush.bf16.msra.mxu0 %v2266
    %3404 = vmatpush.bf16.msra.mxu0 %v2262
    %3405 = vmatpush.bf16.msra.mxu0 %v2258
    %3406 = vmatpush.bf16.msra.mxu0 %v2254
    %3407 = vmatpush.bf16.msra.mxu0 %v2250
    %3408 = vmatpush.bf16.msra.mxu0 %v2246
    %3409 = vmatmul.bf16.gmra.mxu0 %v551
    %v3410 = vpop.f32.mrf.mxu0
    %v3411 = vadd.f32 %v3398, %v3410
    %v3412 = vpop.f32.mrf.mxu0
    %3413 = vdwg.mxu0
    %3414 = vmatpush.bf16.msra.mxu0 %v2306
    %3415 = vmatpush.bf16.msra.mxu0 %v2302
    %3416 = vmatpush.bf16.msra.mxu0 %v2298
    %3417 = vmatpush.bf16.msra.mxu0 %v2294
    %3418 = vmatpush.bf16.msra.mxu0 %v2290
    %3419 = vmatpush.bf16.msra.mxu0 %v2286
    %3420 = vmatpush.bf16.msra.mxu0 %v2282
    %3421 = vmatpush.bf16.msra.mxu0 %v2278
    %3422 = vmatmul.bf16.gmra.mxu0 %v552
    %v3423 = vpop.f32.mrf.mxu0
    %v3424 = vadd.f32 %v3411, %v3423
    %v3425 = vpop.f32.mrf.mxu0
    %3426 = vdwg.mxu0
    %3427 = vmatpush.bf16.msra.mxu0 %v2338
    %3428 = vmatpush.bf16.msra.mxu0 %v2334
    %3429 = vmatpush.bf16.msra.mxu0 %v2330
    %3430 = vmatpush.bf16.msra.mxu0 %v2326
    %3431 = vmatpush.bf16.msra.mxu0 %v2322
    %3432 = vmatpush.bf16.msra.mxu0 %v2318
    %3433 = vmatpush.bf16.msra.mxu0 %v2314
    %3434 = vmatpush.bf16.msra.mxu0 %v2310
    %3435 = vmatmul.bf16.gmra.mxu0 %v553
    %v3436 = vpop.f32.mrf.mxu0
    %v3437 = vadd.f32 %v3424, %v3436
    %v3438 = vpop.f32.mrf.mxu0
    %3439 = vdwg.mxu0
    %3440 = vmatpush.bf16.msra.mxu0 %v2370
    %3441 = vmatpush.bf16.msra.mxu0 %v2366
    %3442 = vmatpush.bf16.msra.mxu0 %v2362
    %3443 = vmatpush.bf16.msra.mxu0 %v2358
    %3444 = vmatpush.bf16.msra.mxu0 %v2354
    %3445 = vmatpush.bf16.msra.mxu0 %v2350
    %3446 = vmatpush.bf16.msra.mxu0 %v2346
    %3447 = vmatpush.bf16.msra.mxu0 %v2342
    %3448 = vmatmul.bf16.gmra.mxu0 %v554
    %v3449 = vpop.f32.mrf.mxu0
    %v3450 = vadd.f32 %v3437, %v3449
    %v3451 = vpop.f32.mrf.mxu0
    %3452 = vdwg.mxu0
    %3453 = vmatpush.bf16.msra.mxu0 %v2402
    %3454 = vmatpush.bf16.msra.mxu0 %v2398
    %3455 = vmatpush.bf16.msra.mxu0 %v2394
    %3456 = vmatpush.bf16.msra.mxu0 %v2390
    %3457 = vmatpush.bf16.msra.mxu0 %v2386
    %3458 = vmatpush.bf16.msra.mxu0 %v2382
    %3459 = vmatpush.bf16.msra.mxu0 %v2378
    %3460 = vmatpush.bf16.msra.mxu0 %v2374
    %3461 = vmatmul.bf16.gmra.mxu0 %v557
    %v3462 = vpop.f32.mrf.mxu0
    %v3463 = vadd.f32 %v3450, %v3462
    %v3464 = vpop.f32.mrf.mxu0
    %3465 = vdwg.mxu0
    %3466 = vmatpush.bf16.msra.mxu0 %v2434
    %3467 = vmatpush.bf16.msra.mxu0 %v2430
    %3468 = vmatpush.bf16.msra.mxu0 %v2426
    %3469 = vmatpush.bf16.msra.mxu0 %v2422
    %3470 = vmatpush.bf16.msra.mxu0 %v2418
    %3471 = vmatpush.bf16.msra.mxu0 %v2414
    %3472 = vmatpush.bf16.msra.mxu0 %v2410
    %3473 = vmatpush.bf16.msra.mxu0 %v2406
    %3474 = vmatmul.bf16.gmra.mxu0 %v558
    %v3475 = vpop.f32.mrf.mxu0
    %v3476 = vadd.f32 %v3463, %v3475
    %v3477 = vpop.f32.mrf.mxu0
    %3478 = vdwg.mxu0
    %3479 = vmatpush.bf16.msra.mxu0 %v2466
    %3480 = vmatpush.bf16.msra.mxu0 %v2462
    %3481 = vmatpush.bf16.msra.mxu0 %v2458
    %3482 = vmatpush.bf16.msra.mxu0 %v2454
    %3483 = vmatpush.bf16.msra.mxu0 %v2450
    %3484 = vmatpush.bf16.msra.mxu0 %v2446
    %3485 = vmatpush.bf16.msra.mxu0 %v2442
    %3486 = vmatpush.bf16.msra.mxu0 %v2438
    %3487 = vmatmul.bf16.gmra.mxu0 %v559
    %v3488 = vpop.f32.mrf.mxu0
    %v3489 = vadd.f32 %v3476, %v3488
    %v3490 = vpop.f32.mrf.mxu0
    %3491 = vdwg.mxu0
    %3492 = vmatpush.bf16.msra.mxu0 %v2498
    %3493 = vmatpush.bf16.msra.mxu0 %v2494
    %3494 = vmatpush.bf16.msra.mxu0 %v2490
    %3495 = vmatpush.bf16.msra.mxu0 %v2486
    %3496 = vmatpush.bf16.msra.mxu0 %v2482
    %3497 = vmatpush.bf16.msra.mxu0 %v2478
    %3498 = vmatpush.bf16.msra.mxu0 %v2474
    %3499 = vmatpush.bf16.msra.mxu0 %v2470
    %3500 = vmatmul.bf16.gmra.mxu0 %v560
    %v3501 = vpop.f32.mrf.mxu0
    %v3502 = vadd.f32 %v3489, %v3501
    %v3503 = vpop.f32.mrf.mxu0
    %3504 = vdwg.mxu0
    %3505 = vmatpush.bf16.msra.mxu0 %v2530
    %3506 = vmatpush.bf16.msra.mxu0 %v2526
    %3507 = vmatpush.bf16.msra.mxu0 %v2522
    %3508 = vmatpush.bf16.msra.mxu0 %v2518
    %3509 = vmatpush.bf16.msra.mxu0 %v2514
    %3510 = vmatpush.bf16.msra.mxu0 %v2510
    %3511 = vmatpush.bf16.msra.mxu0 %v2506
    %3512 = vmatpush.bf16.msra.mxu0 %v2502
    %3513 = vmatmul.bf16.gmra.mxu0 %v561
    %v3514 = vpop.f32.mrf.mxu0
    %v3515 = vadd.f32 %v3502, %v3514
    %v3516 = vpop.f32.mrf.mxu0
    %3517 = vdwg.mxu0
    %3518 = vmatpush.bf16.msra.mxu0 %v2562
    %3519 = vmatpush.bf16.msra.mxu0 %v2558
    %3520 = vmatpush.bf16.msra.mxu0 %v2554
    %3521 = vmatpush.bf16.msra.mxu0 %v2550
    %3522 = vmatpush.bf16.msra.mxu0 %v2546
    %3523 = vmatpush.bf16.msra.mxu0 %v2542
    %3524 = vmatpush.bf16.msra.mxu0 %v2538
    %3525 = vmatpush.bf16.msra.mxu0 %v2534
    %3526 = vmatmul.bf16.gmra.mxu0 %v562
    %v3527 = vpop.f32.mrf.mxu0
    %v3528 = vadd.f32 %v3515, %v3527
    %v3529 = vpop.f32.mrf.mxu0
    %3530 = vdwg.mxu0
    %3531 = vmatpush.bf16.msra.mxu0 %v2594
    %3532 = vmatpush.bf16.msra.mxu0 %v2590
    %3533 = vmatpush.bf16.msra.mxu0 %v2586
    %3534 = vmatpush.bf16.msra.mxu0 %v2582
    %3535 = vmatpush.bf16.msra.mxu0 %v2578
    %3536 = vmatpush.bf16.msra.mxu0 %v2574
    %3537 = vmatpush.bf16.msra.mxu0 %v2570
    %3538 = vmatpush.bf16.msra.mxu0 %v2566
    %3539 = vmatmul.bf16.gmra.mxu0 %v563
    %v3540 = vpop.f32.mrf.mxu0
    %v3541 = vadd.f32 %v3528, %v3540
    %v3542 = vpop.f32.mrf.mxu0
    %3543 = vdwg.mxu0
    %3544 = vmatpush.bf16.msra.mxu0 %v2626
    %3545 = vmatpush.bf16.msra.mxu0 %v2622
    %3546 = vmatpush.bf16.msra.mxu0 %v2618
    %3547 = vmatpush.bf16.msra.mxu0 %v2614
    %3548 = vmatpush.bf16.msra.mxu0 %v2610
    %3549 = vmatpush.bf16.msra.mxu0 %v2606
    %3550 = vmatpush.bf16.msra.mxu0 %v2602
    %3551 = vmatpush.bf16.msra.mxu0 %v2598
    %3552 = vmatmul.bf16.gmra.mxu0 %v564
    %v3553 = vpop.f32.mrf.mxu0
    %v3554 = vadd.f32 %v3541, %v3553
    %v3555 = vpop.f32.mrf.mxu0
    %3556 = vdwg.mxu0
    %3557 = vmatpush.bf16.msra.mxu0 %v2147
    %3558 = vmatpush.bf16.msra.mxu0 %v2143
    %3559 = vmatpush.bf16.msra.mxu0 %v2139
    %3560 = vmatpush.bf16.msra.mxu0 %v2135
    %3561 = vmatpush.bf16.msra.mxu0 %v2131
    %3562 = vmatpush.bf16.msra.mxu0 %v2127
    %3563 = vmatpush.bf16.msra.mxu0 %v2123
    %3564 = vmatpush.bf16.msra.mxu0 %v2119
    %3565 = vmatmul.bf16.gmra.mxu0 %v547
    %v3566 = vpop.f32.mrf.mxu0
    %v3567 = vadd.f32 %v539, %v3566
    %v3568 = vpop.f32.mrf.mxu0
    %3569 = vdwg.mxu0
    %3570 = vmatpush.bf16.msra.mxu0 %v2179
    %3571 = vmatpush.bf16.msra.mxu0 %v2175
    %3572 = vmatpush.bf16.msra.mxu0 %v2171
    %3573 = vmatpush.bf16.msra.mxu0 %v2167
    %3574 = vmatpush.bf16.msra.mxu0 %v2163
    %3575 = vmatpush.bf16.msra.mxu0 %v2159
    %3576 = vmatpush.bf16.msra.mxu0 %v2155
    %3577 = vmatpush.bf16.msra.mxu0 %v2151
    %3578 = vmatmul.bf16.gmra.mxu0 %v548
    %v3579 = vpop.f32.mrf.mxu0
    %v3580 = vadd.f32 %v3567, %v3579
    %v3581 = vpop.f32.mrf.mxu0
    %3582 = vdwg.mxu0
    %3583 = vmatpush.bf16.msra.mxu0 %v2211
    %3584 = vmatpush.bf16.msra.mxu0 %v2207
    %3585 = vmatpush.bf16.msra.mxu0 %v2203
    %3586 = vmatpush.bf16.msra.mxu0 %v2199
    %3587 = vmatpush.bf16.msra.mxu0 %v2195
    %3588 = vmatpush.bf16.msra.mxu0 %v2191
    %3589 = vmatpush.bf16.msra.mxu0 %v2187
    %3590 = vmatpush.bf16.msra.mxu0 %v2183
    %3591 = vmatmul.bf16.gmra.mxu0 %v549
    %v3592 = vpop.f32.mrf.mxu0
    %v3593 = vadd.f32 %v3580, %v3592
    %v3594 = vpop.f32.mrf.mxu0
    %3595 = vdwg.mxu0
    %3596 = vmatpush.bf16.msra.mxu0 %v2243
    %3597 = vmatpush.bf16.msra.mxu0 %v2239
    %3598 = vmatpush.bf16.msra.mxu0 %v2235
    %3599 = vmatpush.bf16.msra.mxu0 %v2231
    %3600 = vmatpush.bf16.msra.mxu0 %v2227
    %3601 = vmatpush.bf16.msra.mxu0 %v2223
    %3602 = vmatpush.bf16.msra.mxu0 %v2219
    %3603 = vmatpush.bf16.msra.mxu0 %v2215
    %3604 = vmatmul.bf16.gmra.mxu0 %v550
    %v3605 = vpop.f32.mrf.mxu0
    %v3606 = vadd.f32 %v3593, %v3605
    %v3607 = vpop.f32.mrf.mxu0
    %3608 = vdwg.mxu0
    %3609 = vmatpush.bf16.msra.mxu0 %v2275
    %3610 = vmatpush.bf16.msra.mxu0 %v2271
    %3611 = vmatpush.bf16.msra.mxu0 %v2267
    %3612 = vmatpush.bf16.msra.mxu0 %v2263
    %3613 = vmatpush.bf16.msra.mxu0 %v2259
    %3614 = vmatpush.bf16.msra.mxu0 %v2255
    %3615 = vmatpush.bf16.msra.mxu0 %v2251
    %3616 = vmatpush.bf16.msra.mxu0 %v2247
    %3617 = vmatmul.bf16.gmra.mxu0 %v551
    %v3618 = vpop.f32.mrf.mxu0
    %v3619 = vadd.f32 %v3606, %v3618
    %v3620 = vpop.f32.mrf.mxu0
    %3621 = vdwg.mxu0
    %3622 = vmatpush.bf16.msra.mxu0 %v2307
    %3623 = vmatpush.bf16.msra.mxu0 %v2303
    %3624 = vmatpush.bf16.msra.mxu0 %v2299
    %3625 = vmatpush.bf16.msra.mxu0 %v2295
    %3626 = vmatpush.bf16.msra.mxu0 %v2291
    %3627 = vmatpush.bf16.msra.mxu0 %v2287
    %3628 = vmatpush.bf16.msra.mxu0 %v2283
    %3629 = vmatpush.bf16.msra.mxu0 %v2279
    %3630 = vmatmul.bf16.gmra.mxu0 %v552
    %v3631 = vpop.f32.mrf.mxu0
    %v3632 = vadd.f32 %v3619, %v3631
    %v3633 = vpop.f32.mrf.mxu0
    %3634 = vdwg.mxu0
    %3635 = vmatpush.bf16.msra.mxu0 %v2339
    %3636 = vmatpush.bf16.msra.mxu0 %v2335
    %3637 = vmatpush.bf16.msra.mxu0 %v2331
    %3638 = vmatpush.bf16.msra.mxu0 %v2327
    %3639 = vmatpush.bf16.msra.mxu0 %v2323
    %3640 = vmatpush.bf16.msra.mxu0 %v2319
    %3641 = vmatpush.bf16.msra.mxu0 %v2315
    %3642 = vmatpush.bf16.msra.mxu0 %v2311
    %3643 = vmatmul.bf16.gmra.mxu0 %v553
    %v3644 = vpop.f32.mrf.mxu0
    %v3645 = vadd.f32 %v3632, %v3644
    %v3646 = vpop.f32.mrf.mxu0
    %3647 = vdwg.mxu0
    %3648 = vmatpush.bf16.msra.mxu0 %v2371
    %3649 = vmatpush.bf16.msra.mxu0 %v2367
    %3650 = vmatpush.bf16.msra.mxu0 %v2363
    %3651 = vmatpush.bf16.msra.mxu0 %v2359
    %3652 = vmatpush.bf16.msra.mxu0 %v2355
    %3653 = vmatpush.bf16.msra.mxu0 %v2351
    %3654 = vmatpush.bf16.msra.mxu0 %v2347
    %3655 = vmatpush.bf16.msra.mxu0 %v2343
    %3656 = vmatmul.bf16.gmra.mxu0 %v554
    %v3657 = vpop.f32.mrf.mxu0
    %v3658 = vadd.f32 %v3645, %v3657
    %v3659 = vpop.f32.mrf.mxu0
    %3660 = vdwg.mxu0
    %3661 = vmatpush.bf16.msra.mxu0 %v2403
    %3662 = vmatpush.bf16.msra.mxu0 %v2399
    %3663 = vmatpush.bf16.msra.mxu0 %v2395
    %3664 = vmatpush.bf16.msra.mxu0 %v2391
    %3665 = vmatpush.bf16.msra.mxu0 %v2387
    %3666 = vmatpush.bf16.msra.mxu0 %v2383
    %3667 = vmatpush.bf16.msra.mxu0 %v2379
    %3668 = vmatpush.bf16.msra.mxu0 %v2375
    %3669 = vmatmul.bf16.gmra.mxu0 %v557
    %v3670 = vpop.f32.mrf.mxu0
    %v3671 = vadd.f32 %v3658, %v3670
    %v3672 = vpop.f32.mrf.mxu0
    %3673 = vdwg.mxu0
    %3674 = vmatpush.bf16.msra.mxu0 %v2435
    %3675 = vmatpush.bf16.msra.mxu0 %v2431
    %3676 = vmatpush.bf16.msra.mxu0 %v2427
    %3677 = vmatpush.bf16.msra.mxu0 %v2423
    %3678 = vmatpush.bf16.msra.mxu0 %v2419
    %3679 = vmatpush.bf16.msra.mxu0 %v2415
    %3680 = vmatpush.bf16.msra.mxu0 %v2411
    %3681 = vmatpush.bf16.msra.mxu0 %v2407
    %3682 = vmatmul.bf16.gmra.mxu0 %v558
    %v3683 = vpop.f32.mrf.mxu0
    %v3684 = vadd.f32 %v3671, %v3683
    %v3685 = vpop.f32.mrf.mxu0
    %3686 = vdwg.mxu0
    %3687 = vmatpush.bf16.msra.mxu0 %v2467
    %3688 = vmatpush.bf16.msra.mxu0 %v2463
    %3689 = vmatpush.bf16.msra.mxu0 %v2459
    %3690 = vmatpush.bf16.msra.mxu0 %v2455
    %3691 = vmatpush.bf16.msra.mxu0 %v2451
    %3692 = vmatpush.bf16.msra.mxu0 %v2447
    %3693 = vmatpush.bf16.msra.mxu0 %v2443
    %3694 = vmatpush.bf16.msra.mxu0 %v2439
    %3695 = vmatmul.bf16.gmra.mxu0 %v559
    %v3696 = vpop.f32.mrf.mxu0
    %v3697 = vadd.f32 %v3684, %v3696
    %v3698 = vpop.f32.mrf.mxu0
    %3699 = vdwg.mxu0
    %3700 = vmatpush.bf16.msra.mxu0 %v2499
    %3701 = vmatpush.bf16.msra.mxu0 %v2495
    %3702 = vmatpush.bf16.msra.mxu0 %v2491
    %3703 = vmatpush.bf16.msra.mxu0 %v2487
    %3704 = vmatpush.bf16.msra.mxu0 %v2483
    %3705 = vmatpush.bf16.msra.mxu0 %v2479
    %3706 = vmatpush.bf16.msra.mxu0 %v2475
    %3707 = vmatpush.bf16.msra.mxu0 %v2471
    %3708 = vmatmul.bf16.gmra.mxu0 %v560
    %v3709 = vpop.f32.mrf.mxu0
    %v3710 = vadd.f32 %v3697, %v3709
    %v3711 = vpop.f32.mrf.mxu0
    %3712 = vdwg.mxu0
    %3713 = vmatpush.bf16.msra.mxu0 %v2531
    %3714 = vmatpush.bf16.msra.mxu0 %v2527
    %3715 = vmatpush.bf16.msra.mxu0 %v2523
    %3716 = vmatpush.bf16.msra.mxu0 %v2519
    %3717 = vmatpush.bf16.msra.mxu0 %v2515
    %3718 = vmatpush.bf16.msra.mxu0 %v2511
    %3719 = vmatpush.bf16.msra.mxu0 %v2507
    %3720 = vmatpush.bf16.msra.mxu0 %v2503
    %3721 = vmatmul.bf16.gmra.mxu0 %v561
    %v3722 = vpop.f32.mrf.mxu0
    %v3723 = vadd.f32 %v3710, %v3722
    %v3724 = vpop.f32.mrf.mxu0
    %3725 = vdwg.mxu0
    %3726 = vmatpush.bf16.msra.mxu0 %v2563
    %3727 = vmatpush.bf16.msra.mxu0 %v2559
    %3728 = vmatpush.bf16.msra.mxu0 %v2555
    %3729 = vmatpush.bf16.msra.mxu0 %v2551
    %3730 = vmatpush.bf16.msra.mxu0 %v2547
    %3731 = vmatpush.bf16.msra.mxu0 %v2543
    %3732 = vmatpush.bf16.msra.mxu0 %v2539
    %3733 = vmatpush.bf16.msra.mxu0 %v2535
    %3734 = vmatmul.bf16.gmra.mxu0 %v562
    %v3735 = vpop.f32.mrf.mxu0
    %v3736 = vadd.f32 %v3723, %v3735
    %v3737 = vpop.f32.mrf.mxu0
    %3738 = vdwg.mxu0
    %3739 = vmatpush.bf16.msra.mxu0 %v2595
    %3740 = vmatpush.bf16.msra.mxu0 %v2591
    %3741 = vmatpush.bf16.msra.mxu0 %v2587
    %3742 = vmatpush.bf16.msra.mxu0 %v2583
    %3743 = vmatpush.bf16.msra.mxu0 %v2579
    %3744 = vmatpush.bf16.msra.mxu0 %v2575
    %3745 = vmatpush.bf16.msra.mxu0 %v2571
    %3746 = vmatpush.bf16.msra.mxu0 %v2567
    %3747 = vmatmul.bf16.gmra.mxu0 %v563
    %v3748 = vpop.f32.mrf.mxu0
    %v3749 = vadd.f32 %v3736, %v3748
    %v3750 = vpop.f32.mrf.mxu0
    %3751 = vdwg.mxu0
    %3752 = vmatpush.bf16.msra.mxu0 %v2627
    %3753 = vmatpush.bf16.msra.mxu0 %v2623
    %3754 = vmatpush.bf16.msra.mxu0 %v2619
    %3755 = vmatpush.bf16.msra.mxu0 %v2615
    %3756 = vmatpush.bf16.msra.mxu0 %v2611
    %3757 = vmatpush.bf16.msra.mxu0 %v2607
    %3758 = vmatpush.bf16.msra.mxu0 %v2603
    %3759 = vmatpush.bf16.msra.mxu0 %v2599
    %3760 = vmatmul.bf16.gmra.mxu0 %v564
    %v3761 = vpop.f32.mrf.mxu0
    %v3762 = vadd.f32 %v3749, %v3761
    %v3763 = vpop.f32.mrf.mxu0
    %3764 = vdwg.mxu0
    %3765 = vmatpush.bf16.msra.mxu0 %v2148
    %3766 = vmatpush.bf16.msra.mxu0 %v2144
    %3767 = vmatpush.bf16.msra.mxu0 %v2140
    %3768 = vmatpush.bf16.msra.mxu0 %v2136
    %3769 = vmatpush.bf16.msra.mxu0 %v2132
    %3770 = vmatpush.bf16.msra.mxu0 %v2128
    %3771 = vmatpush.bf16.msra.mxu0 %v2124
    %3772 = vmatpush.bf16.msra.mxu0 %v2120
    %3773 = vmatmul.bf16.gmra.mxu0 %v547
    %v3774 = vpop.f32.mrf.mxu0
    %v3775 = vadd.f32 %v540, %v3774
    %v3776 = vpop.f32.mrf.mxu0
    %3777 = vdwg.mxu0
    %3778 = vmatpush.bf16.msra.mxu0 %v2180
    %3779 = vmatpush.bf16.msra.mxu0 %v2176
    %3780 = vmatpush.bf16.msra.mxu0 %v2172
    %3781 = vmatpush.bf16.msra.mxu0 %v2168
    %3782 = vmatpush.bf16.msra.mxu0 %v2164
    %3783 = vmatpush.bf16.msra.mxu0 %v2160
    %3784 = vmatpush.bf16.msra.mxu0 %v2156
    %3785 = vmatpush.bf16.msra.mxu0 %v2152
    %3786 = vmatmul.bf16.gmra.mxu0 %v548
    %v3787 = vpop.f32.mrf.mxu0
    %v3788 = vadd.f32 %v3775, %v3787
    %v3789 = vpop.f32.mrf.mxu0
    %3790 = vdwg.mxu0
    %3791 = vmatpush.bf16.msra.mxu0 %v2212
    %3792 = vmatpush.bf16.msra.mxu0 %v2208
    %3793 = vmatpush.bf16.msra.mxu0 %v2204
    %3794 = vmatpush.bf16.msra.mxu0 %v2200
    %3795 = vmatpush.bf16.msra.mxu0 %v2196
    %3796 = vmatpush.bf16.msra.mxu0 %v2192
    %3797 = vmatpush.bf16.msra.mxu0 %v2188
    %3798 = vmatpush.bf16.msra.mxu0 %v2184
    %3799 = vmatmul.bf16.gmra.mxu0 %v549
    %v3800 = vpop.f32.mrf.mxu0
    %v3801 = vadd.f32 %v3788, %v3800
    %v3802 = vpop.f32.mrf.mxu0
    %3803 = vdwg.mxu0
    %3804 = vmatpush.bf16.msra.mxu0 %v2244
    %3805 = vmatpush.bf16.msra.mxu0 %v2240
    %3806 = vmatpush.bf16.msra.mxu0 %v2236
    %3807 = vmatpush.bf16.msra.mxu0 %v2232
    %3808 = vmatpush.bf16.msra.mxu0 %v2228
    %3809 = vmatpush.bf16.msra.mxu0 %v2224
    %3810 = vmatpush.bf16.msra.mxu0 %v2220
    %3811 = vmatpush.bf16.msra.mxu0 %v2216
    %3812 = vmatmul.bf16.gmra.mxu0 %v550
    %v3813 = vpop.f32.mrf.mxu0
    %v3814 = vadd.f32 %v3801, %v3813
    %v3815 = vpop.f32.mrf.mxu0
    %3816 = vdwg.mxu0
    %3817 = vmatpush.bf16.msra.mxu0 %v2276
    %3818 = vmatpush.bf16.msra.mxu0 %v2272
    %3819 = vmatpush.bf16.msra.mxu0 %v2268
    %3820 = vmatpush.bf16.msra.mxu0 %v2264
    %3821 = vmatpush.bf16.msra.mxu0 %v2260
    %3822 = vmatpush.bf16.msra.mxu0 %v2256
    %3823 = vmatpush.bf16.msra.mxu0 %v2252
    %3824 = vmatpush.bf16.msra.mxu0 %v2248
    %3825 = vmatmul.bf16.gmra.mxu0 %v551
    %v3826 = vpop.f32.mrf.mxu0
    %v3827 = vadd.f32 %v3814, %v3826
    %v3828 = vpop.f32.mrf.mxu0
    %3829 = vdwg.mxu0
    %3830 = vmatpush.bf16.msra.mxu0 %v2308
    %3831 = vmatpush.bf16.msra.mxu0 %v2304
    %3832 = vmatpush.bf16.msra.mxu0 %v2300
    %3833 = vmatpush.bf16.msra.mxu0 %v2296
    %3834 = vmatpush.bf16.msra.mxu0 %v2292
    %3835 = vmatpush.bf16.msra.mxu0 %v2288
    %3836 = vmatpush.bf16.msra.mxu0 %v2284
    %3837 = vmatpush.bf16.msra.mxu0 %v2280
    %3838 = vmatmul.bf16.gmra.mxu0 %v552
    %v3839 = vpop.f32.mrf.mxu0
    %v3840 = vadd.f32 %v3827, %v3839
    %v3841 = vpop.f32.mrf.mxu0
    %3842 = vdwg.mxu0
    %3843 = vmatpush.bf16.msra.mxu0 %v2340
    %3844 = vmatpush.bf16.msra.mxu0 %v2336
    %3845 = vmatpush.bf16.msra.mxu0 %v2332
    %3846 = vmatpush.bf16.msra.mxu0 %v2328
    %3847 = vmatpush.bf16.msra.mxu0 %v2324
    %3848 = vmatpush.bf16.msra.mxu0 %v2320
    %3849 = vmatpush.bf16.msra.mxu0 %v2316
    %3850 = vmatpush.bf16.msra.mxu0 %v2312
    %3851 = vmatmul.bf16.gmra.mxu0 %v553
    %v3852 = vpop.f32.mrf.mxu0
    %v3853 = vadd.f32 %v3840, %v3852
    %v3854 = vpop.f32.mrf.mxu0
    %3855 = vdwg.mxu0
    %3856 = vmatpush.bf16.msra.mxu0 %v2372
    %3857 = vmatpush.bf16.msra.mxu0 %v2368
    %3858 = vmatpush.bf16.msra.mxu0 %v2364
    %3859 = vmatpush.bf16.msra.mxu0 %v2360
    %3860 = vmatpush.bf16.msra.mxu0 %v2356
    %3861 = vmatpush.bf16.msra.mxu0 %v2352
    %3862 = vmatpush.bf16.msra.mxu0 %v2348
    %3863 = vmatpush.bf16.msra.mxu0 %v2344
    %3864 = vmatmul.bf16.gmra.mxu0 %v554
    %v3865 = vpop.f32.mrf.mxu0
    %v3866 = vadd.f32 %v3853, %v3865
    %v3867 = vpop.f32.mrf.mxu0
    %3868 = vdwg.mxu0
    %3869 = vmatpush.bf16.msra.mxu0 %v2404
    %3870 = vmatpush.bf16.msra.mxu0 %v2400
    %3871 = vmatpush.bf16.msra.mxu0 %v2396
    %3872 = vmatpush.bf16.msra.mxu0 %v2392
    %3873 = vmatpush.bf16.msra.mxu0 %v2388
    %3874 = vmatpush.bf16.msra.mxu0 %v2384
    %3875 = vmatpush.bf16.msra.mxu0 %v2380
    %3876 = vmatpush.bf16.msra.mxu0 %v2376
    %3877 = vmatmul.bf16.gmra.mxu0 %v557
    %v3878 = vpop.f32.mrf.mxu0
    %v3879 = vadd.f32 %v3866, %v3878
    %v3880 = vpop.f32.mrf.mxu0
    %3881 = vdwg.mxu0
    %3882 = vmatpush.bf16.msra.mxu0 %v2436
    %3883 = vmatpush.bf16.msra.mxu0 %v2432
    %3884 = vmatpush.bf16.msra.mxu0 %v2428
    %3885 = vmatpush.bf16.msra.mxu0 %v2424
    %3886 = vmatpush.bf16.msra.mxu0 %v2420
    %3887 = vmatpush.bf16.msra.mxu0 %v2416
    %3888 = vmatpush.bf16.msra.mxu0 %v2412
    %3889 = vmatpush.bf16.msra.mxu0 %v2408
    %3890 = vmatmul.bf16.gmra.mxu0 %v558
    %v3891 = vpop.f32.mrf.mxu0
    %v3892 = vadd.f32 %v3879, %v3891
    %v3893 = vpop.f32.mrf.mxu0
    %3894 = vdwg.mxu0
    %3895 = vmatpush.bf16.msra.mxu0 %v2468
    %3896 = vmatpush.bf16.msra.mxu0 %v2464
    %3897 = vmatpush.bf16.msra.mxu0 %v2460
    %3898 = vmatpush.bf16.msra.mxu0 %v2456
    %3899 = vmatpush.bf16.msra.mxu0 %v2452
    %3900 = vmatpush.bf16.msra.mxu0 %v2448
    %3901 = vmatpush.bf16.msra.mxu0 %v2444
    %3902 = vmatpush.bf16.msra.mxu0 %v2440
    %3903 = vmatmul.bf16.gmra.mxu0 %v559
    %v3904 = vpop.f32.mrf.mxu0
    %v3905 = vadd.f32 %v3892, %v3904
    %v3906 = vpop.f32.mrf.mxu0
    %3907 = vdwg.mxu0
    %3908 = vmatpush.bf16.msra.mxu0 %v2500
    %3909 = vmatpush.bf16.msra.mxu0 %v2496
    %3910 = vmatpush.bf16.msra.mxu0 %v2492
    %3911 = vmatpush.bf16.msra.mxu0 %v2488
    %3912 = vmatpush.bf16.msra.mxu0 %v2484
    %3913 = vmatpush.bf16.msra.mxu0 %v2480
    %3914 = vmatpush.bf16.msra.mxu0 %v2476
    %3915 = vmatpush.bf16.msra.mxu0 %v2472
    %3916 = vmatmul.bf16.gmra.mxu0 %v560
    %v3917 = vpop.f32.mrf.mxu0
    %v3918 = vadd.f32 %v3905, %v3917
    %v3919 = vpop.f32.mrf.mxu0
    %3920 = vdwg.mxu0
    %3921 = vmatpush.bf16.msra.mxu0 %v2532
    %3922 = vmatpush.bf16.msra.mxu0 %v2528
    %3923 = vmatpush.bf16.msra.mxu0 %v2524
    %3924 = vmatpush.bf16.msra.mxu0 %v2520
    %3925 = vmatpush.bf16.msra.mxu0 %v2516
    %3926 = vmatpush.bf16.msra.mxu0 %v2512
    %3927 = vmatpush.bf16.msra.mxu0 %v2508
    %3928 = vmatpush.bf16.msra.mxu0 %v2504
    %3929 = vmatmul.bf16.gmra.mxu0 %v561
    %v3930 = vpop.f32.mrf.mxu0
    %v3931 = vadd.f32 %v3918, %v3930
    %v3932 = vpop.f32.mrf.mxu0
    %3933 = vdwg.mxu0
    %3934 = vmatpush.bf16.msra.mxu0 %v2564
    %3935 = vmatpush.bf16.msra.mxu0 %v2560
    %3936 = vmatpush.bf16.msra.mxu0 %v2556
    %3937 = vmatpush.bf16.msra.mxu0 %v2552
    %3938 = vmatpush.bf16.msra.mxu0 %v2548
    %3939 = vmatpush.bf16.msra.mxu0 %v2544
    %3940 = vmatpush.bf16.msra.mxu0 %v2540
    %3941 = vmatpush.bf16.msra.mxu0 %v2536
    %3942 = vmatmul.bf16.gmra.mxu0 %v562
    %v3943 = vpop.f32.mrf.mxu0
    %v3944 = vadd.f32 %v3931, %v3943
    %v3945 = vpop.f32.mrf.mxu0
    %3946 = vdwg.mxu0
    %3947 = vmatpush.bf16.msra.mxu0 %v2596
    %3948 = vmatpush.bf16.msra.mxu0 %v2592
    %3949 = vmatpush.bf16.msra.mxu0 %v2588
    %3950 = vmatpush.bf16.msra.mxu0 %v2584
    %3951 = vmatpush.bf16.msra.mxu0 %v2580
    %3952 = vmatpush.bf16.msra.mxu0 %v2576
    %3953 = vmatpush.bf16.msra.mxu0 %v2572
    %3954 = vmatpush.bf16.msra.mxu0 %v2568
    %3955 = vmatmul.bf16.gmra.mxu0 %v563
    %v3956 = vpop.f32.mrf.mxu0
    %v3957 = vadd.f32 %v3944, %v3956
    %v3958 = vpop.f32.mrf.mxu0
    %3959 = vdwg.mxu0
    %3960 = vmatpush.bf16.msra.mxu0 %v2628
    %3961 = vmatpush.bf16.msra.mxu0 %v2624
    %3962 = vmatpush.bf16.msra.mxu0 %v2620
    %3963 = vmatpush.bf16.msra.mxu0 %v2616
    %3964 = vmatpush.bf16.msra.mxu0 %v2612
    %3965 = vmatpush.bf16.msra.mxu0 %v2608
    %3966 = vmatpush.bf16.msra.mxu0 %v2604
    %3967 = vmatpush.bf16.msra.mxu0 %v2600
    %3968 = vmatmul.bf16.gmra.mxu0 %v564
    %v3969 = vpop.f32.mrf.mxu0
    %v3970 = vadd.f32 %v3957, %v3969
    %v3971 = vpop.f32.mrf.mxu0
    %3972 = vdwg.mxu0
    %v3973 = vmax.f32 %v3346, 0.0
    %v3974 = vmax.f32 %v3554, 0.0
    %v3975 = vmax.f32 %v3762, 0.0
    %v3976 = vmax.f32 %v3970, 0.0
    %v3977 = vpack.c.bf16 %v3973, %v3973
    %v3978 = vpack.c.bf16 %v3974, %v3974
    %v3979 = vpack.c.bf16 %v3975, %v3975
    %v3980 = vpack.c.bf16 %v3976, %v3976
    %v3981 = vld [vmem:[%s3] sm:$0xf]
    %v3982 = vld [vmem:[%s3 + $0x4] sm:$0xf]
    %v3983 = vld [vmem:[%s3 + $0x8] sm:$0xf]
    %v3984 = vld [vmem:[%s3 + $0xc] sm:$0xf]
    %v3985 = vld [vmem:[%s3 + $0x10] sm:$0xf]
    %v3986 = vld [vmem:[%s3 + $0x14] sm:$0xf]
    %v3987 = vld [vmem:[%s3 + $0x18] sm:$0xf]
    %v3988 = vld [vmem:[%s3 + $0x1c] sm:$0xf]
    %v3989 = vld [vmem:[%s3 + $0x20] sm:$0xf]
    %v3990 = vld [vmem:[%s3 + $0x24] sm:$0xf]
    %v3991 = vld [vmem:[%s3 + $0x28] sm:$0xf]
    %v3992 = vld [vmem:[%s3 + $0x2c] sm:$0xf]
    %v3993 = vld [vmem:[%s3 + $0x30] sm:$0xf]
    %v3994 = vld [vmem:[%s3 + $0x34] sm:$0xf]
    %v3995 = vld [vmem:[%s3 + $0x38] sm:$0xf]
    %v3996 = vld [vmem:[%s3 + $0x3c] sm:$0xf]
    %v3997 = vld [vmem:[%s3 + $0x40] sm:$0xf]
    %v3998 = vld [vmem:[%s3 + $0x44] sm:$0xf]
    %v3999 = vld [vmem:[%s3 + $0x48] sm:$0xf]
    %v4000 = vld [vmem:[%s3 + $0x4c] sm:$0xf]
    %v4001 = vld [vmem:[%s3 + $0x50] sm:$0xf]
    %v4002 = vld [vmem:[%s3 + $0x54] sm:$0xf]
    %v4003 = vld [vmem:[%s3 + $0x58] sm:$0xf]
    %v4004 = vld [vmem:[%s3 + $0x5c] sm:$0xf]
    %v4005 = vld [vmem:[%s3 + $0x60] sm:$0xf]
    %v4006 = vld [vmem:[%s3 + $0x64] sm:$0xf]
    %v4007 = vld [vmem:[%s3 + $0x68] sm:$0xf]
    %v4008 = vld [vmem:[%s3 + $0x6c] sm:$0xf]
    %v4009 = vld [vmem:[%s3 + $0x70] sm:$0xf]
    %v4010 = vld [vmem:[%s3 + $0x74] sm:$0xf]
    %v4011 = vld [vmem:[%s3 + $0x78] sm:$0xf]
    %v4012 = vld [vmem:[%s3 + $0x7c] sm:$0xf]
    %v4013 = vld [vmem:[%s3 + $0x80] sm:$0xf]
    %v4014 = vld [vmem:[%s3 + $0x84] sm:$0xf]
    %v4015 = vld [vmem:[%s3 + $0x88] sm:$0xf]
    %v4016 = vld [vmem:[%s3 + $0x8c] sm:$0xf]
    %v4017 = vld [vmem:[%s3 + $0x90] sm:$0xf]
    %v4018 = vld [vmem:[%s3 + $0x94] sm:$0xf]
    %v4019 = vld [vmem:[%s3 + $0x98] sm:$0xf]
    %v4020 = vld [vmem:[%s3 + $0x9c] sm:$0xf]
    %v4021 = vld [vmem:[%s3 + $0xa0] sm:$0xf]
    %v4022 = vld [vmem:[%s3 + $0xa4] sm:$0xf]
    %v4023 = vld [vmem:[%s3 + $0xa8] sm:$0xf]
    %v4024 = vld [vmem:[%s3 + $0xac] sm:$0xf]
    %v4025 = vld [vmem:[%s3 + $0xb0] sm:$0xf]
    %v4026 = vld [vmem:[%s3 + $0xb4] sm:$0xf]
    %v4027 = vld [vmem:[%s3 + $0xb8] sm:$0xf]
    %v4028 = vld [vmem:[%s3 + $0xbc] sm:$0xf]
    %v4029 = vld [vmem:[%s3 + $0xc0] sm:$0xf]
    %v4030 = vld [vmem:[%s3 + $0xc4] sm:$0xf]
    %v4031 = vld [vmem:[%s3 + $0xc8] sm:$0xf]
    %v4032 = vld [vmem:[%s3 + $0xcc] sm:$0xf]
    %v4033 = vld [vmem:[%s3 + $0xd0] sm:$0xf]
    %v4034 = vld [vmem:[%s3 + $0xd4] sm:$0xf]
    %v4035 = vld [vmem:[%s3 + $0xd8] sm:$0xf]
    %v4036 = vld [vmem:[%s3 + $0xdc] sm:$0xf]
    %v4037 = vld [vmem:[%s3 + $0xe0] sm:$0xf]
    %v4038 = vld [vmem:[%s3 + $0xe4] sm:$0xf]
    %v4039 = vld [vmem:[%s3 + $0xe8] sm:$0xf]
    %v4040 = vld [vmem:[%s3 + $0xec] sm:$0xf]
    %v4041 = vld [vmem:[%s3 + $0xf0] sm:$0xf]
    %v4042 = vld [vmem:[%s3 + $0xf4] sm:$0xf]
    %v4043 = vld [vmem:[%s3 + $0xf8] sm:$0xf]
    %v4044 = vld [vmem:[%s3 + $0xfc] sm:$0xf]
    %v4045 = vld [vmem:[%s4] sm:$0x1]
    %v4047 = vperm.slane %v4045, 0
    %v4113 = vunpack.c.l.b16 %v3981
    %v4114 = vunpack.c.l.b16 %v3982
    %v4115 = vunpack.c.l.b16 %v3983
    %v4116 = vunpack.c.l.b16 %v3984
    %v4117 = vunpack.c.l.b16 %v3985
    %v4118 = vunpack.c.l.b16 %v3986
    %v4119 = vunpack.c.l.b16 %v3987
    %v4120 = vunpack.c.l.b16 %v3988
    %v4121 = vunpack.c.l.b16 %v3989
    %v4122 = vunpack.c.l.b16 %v3990
    %v4123 = vunpack.c.l.b16 %v3991
    %v4124 = vunpack.c.l.b16 %v3992
    %v4125 = vunpack.c.l.b16 %v3993
    %v4126 = vunpack.c.l.b16 %v3994
    %v4127 = vunpack.c.l.b16 %v3995
    %v4128 = vunpack.c.l.b16 %v3996
    %v4129 = vunpack.c.l.b16 %v3997
    %v4130 = vunpack.c.l.b16 %v3998
    %v4131 = vunpack.c.l.b16 %v3999
    %v4132 = vunpack.c.l.b16 %v4000
    %v4133 = vunpack.c.l.b16 %v4001
    %v4134 = vunpack.c.l.b16 %v4002
    %v4135 = vunpack.c.l.b16 %v4003
    %v4136 = vunpack.c.l.b16 %v4004
    %v4137 = vunpack.c.l.b16 %v4005
    %v4138 = vunpack.c.l.b16 %v4006
    %v4139 = vunpack.c.l.b16 %v4007
    %v4140 = vunpack.c.l.b16 %v4008
    %v4141 = vunpack.c.l.b16 %v4009
    %v4142 = vunpack.c.l.b16 %v4010
    %v4143 = vunpack.c.l.b16 %v4011
    %v4144 = vunpack.c.l.b16 %v4012
    %v4145 = vunpack.c.l.b16 %v4013
    %v4146 = vunpack.c.l.b16 %v4014
    %v4147 = vunpack.c.l.b16 %v4015
    %v4148 = vunpack.c.l.b16 %v4016
    %v4149 = vunpack.c.l.b16 %v4017
    %v4150 = vunpack.c.l.b16 %v4018
    %v4151 = vunpack.c.l.b16 %v4019
    %v4152 = vunpack.c.l.b16 %v4020
    %v4153 = vunpack.c.l.b16 %v4021
    %v4154 = vunpack.c.l.b16 %v4022
    %v4155 = vunpack.c.l.b16 %v4023
    %v4156 = vunpack.c.l.b16 %v4024
    %v4157 = vunpack.c.l.b16 %v4025
    %v4158 = vunpack.c.l.b16 %v4026
    %v4159 = vunpack.c.l.b16 %v4027
    %v4160 = vunpack.c.l.b16 %v4028
    %v4161 = vunpack.c.l.b16 %v4029
    %v4162 = vunpack.c.l.b16 %v4030
    %v4163 = vunpack.c.l.b16 %v4031
    %v4164 = vunpack.c.l.b16 %v4032
    %v4165 = vunpack.c.l.b16 %v4033
    %v4166 = vunpack.c.l.b16 %v4034
    %v4167 = vunpack.c.l.b16 %v4035
    %v4168 = vunpack.c.l.b16 %v4036
    %v4169 = vunpack.c.l.b16 %v4037
    %v4170 = vunpack.c.l.b16 %v4038
    %v4171 = vunpack.c.l.b16 %v4039
    %v4172 = vunpack.c.l.b16 %v4040
    %v4173 = vunpack.c.l.b16 %v4041
    %v4174 = vunpack.c.l.b16 %v4042
    %v4175 = vunpack.c.l.b16 %v4043
    %v4176 = vunpack.c.l.b16 %v4044
    %v4177 = vpack.c.b16 %v4114, %v4113
    %v4178 = vpack.c.b16 %v4116, %v4115
    %v4179 = vpack.c.b16 %v4118, %v4117
    %v4180 = vpack.c.b16 %v4120, %v4119
    %v4181 = vpack.c.b16 %v4122, %v4121
    %v4182 = vpack.c.b16 %v4124, %v4123
    %v4183 = vpack.c.b16 %v4126, %v4125
    %v4184 = vpack.c.b16 %v4128, %v4127
    %v4185 = vpack.c.b16 %v4130, %v4129
    %v4186 = vpack.c.b16 %v4132, %v4131
    %v4187 = vpack.c.b16 %v4134, %v4133
    %v4188 = vpack.c.b16 %v4136, %v4135
    %v4189 = vpack.c.b16 %v4138, %v4137
    %v4190 = vpack.c.b16 %v4140, %v4139
    %v4191 = vpack.c.b16 %v4142, %v4141
    %v4192 = vpack.c.b16 %v4144, %v4143
    %v4193 = vpack.c.b16 %v4146, %v4145
    %v4194 = vpack.c.b16 %v4148, %v4147
    %v4195 = vpack.c.b16 %v4150, %v4149
    %v4196 = vpack.c.b16 %v4152, %v4151
    %v4197 = vpack.c.b16 %v4154, %v4153
    %v4198 = vpack.c.b16 %v4156, %v4155
    %v4199 = vpack.c.b16 %v4158, %v4157
    %v4200 = vpack.c.b16 %v4160, %v4159
    %v4201 = vpack.c.b16 %v4162, %v4161
    %v4202 = vpack.c.b16 %v4164, %v4163
    %v4203 = vpack.c.b16 %v4166, %v4165
    %v4204 = vpack.c.b16 %v4168, %v4167
    %v4205 = vpack.c.b16 %v4170, %v4169
    %v4206 = vpack.c.b16 %v4172, %v4171
    %v4207 = vpack.c.b16 %v4174, %v4173
    %v4208 = vpack.c.b16 %v4176, %v4175
    %4241 = vmatpush.bf16.msra.mxu0 %v4184
    %4242 = vmatpush.bf16.msra.mxu0 %v4183
    %4243 = vmatpush.bf16.msra.mxu0 %v4182
    %4244 = vmatpush.bf16.msra.mxu0 %v4181
    %4245 = vmatpush.bf16.msra.mxu0 %v4180
    %4246 = vmatpush.bf16.msra.mxu0 %v4179
    %4247 = vmatpush.bf16.msra.mxu0 %v4178
    %4248 = vmatpush.bf16.msra.mxu0 %v4177
    %4249 = vmatmul.bf16.gmra.mxu0 %v3977
    %v4250 = vpop.f32.mrf.mxu0
    %v4251 = vadd.f32 %v4047, %v4250
    %v4252 = vpop.f32.mrf.mxu0
    %4253 = vdwg.mxu0
    %4254 = vmatpush.bf16.msra.mxu0 %v4192
    %4255 = vmatpush.bf16.msra.mxu0 %v4191
    %4256 = vmatpush.bf16.msra.mxu0 %v4190
    %4257 = vmatpush.bf16.msra.mxu0 %v4189
    %4258 = vmatpush.bf16.msra.mxu0 %v4188
    %4259 = vmatpush.bf16.msra.mxu0 %v4187
    %4260 = vmatpush.bf16.msra.mxu0 %v4186
    %4261 = vmatpush.bf16.msra.mxu0 %v4185
    %4262 = vmatmul.bf16.gmra.mxu0 %v3978
    %v4263 = vpop.f32.mrf.mxu0
    %v4264 = vadd.f32 %v4251, %v4263
    %v4265 = vpop.f32.mrf.mxu0
    %4266 = vdwg.mxu0
    %4267 = vmatpush.bf16.msra.mxu0 %v4200
    %4268 = vmatpush.bf16.msra.mxu0 %v4199
    %4269 = vmatpush.bf16.msra.mxu0 %v4198
    %4270 = vmatpush.bf16.msra.mxu0 %v4197
    %4271 = vmatpush.bf16.msra.mxu0 %v4196
    %4272 = vmatpush.bf16.msra.mxu0 %v4195
    %4273 = vmatpush.bf16.msra.mxu0 %v4194
    %4274 = vmatpush.bf16.msra.mxu0 %v4193
    %4275 = vmatmul.bf16.gmra.mxu0 %v3979
    %v4276 = vpop.f32.mrf.mxu0
    %v4277 = vadd.f32 %v4264, %v4276
    %v4278 = vpop.f32.mrf.mxu0
    %4279 = vdwg.mxu0
    %4280 = vmatpush.bf16.msra.mxu0 %v4208
    %4281 = vmatpush.bf16.msra.mxu0 %v4207
    %4282 = vmatpush.bf16.msra.mxu0 %v4206
    %4283 = vmatpush.bf16.msra.mxu0 %v4205
    %4284 = vmatpush.bf16.msra.mxu0 %v4204
    %4285 = vmatpush.bf16.msra.mxu0 %v4203
    %4286 = vmatpush.bf16.msra.mxu0 %v4202
    %4287 = vmatpush.bf16.msra.mxu0 %v4201
    %4288 = vmatmul.bf16.gmra.mxu0 %v3980
    %v4289 = vpop.f32.mrf.mxu0
    %v4290 = vadd.f32 %v4277, %v4289
    %v4291 = vpop.f32.mrf.mxu0
    %4292 = vdwg.mxu0
    %vm4293 = vcmask 1041408
    %v4294 = vsel %vm4293, %v4290, -inf
    %4295 = vmax.xlane.f32.xlu0 %v4294
    %v4296 = vpop.xlane.xlu0 %4295
    %v4297 = vsub.f32 %v4290, %v4296
    %v4298 = vmul.f32 %v4297, 1.442695
    %v4299 = vpow.pop %v4298
    %v4300 = vsel %vm4293, %v4299, 0.0
    %4301 = vadd.xlane.f32.xlu0 %v4300
    %v4302 = vpop.xlane.xlu0 %4301
    %v4303 = vlog2.pop %v4302
    %v4304 = vmul.f32 %v4303, 0.6931472
    %v4305 = vsub.f32 %v4297, %v4304
    %4306 = vst [vmem:[#allocation2] sm:$0x3] %v4305
    // Predicated region
    $region22: #{sparsenet_forward.5} parent=1 // pred_check
      _
    $region23: #{sparsenet_forward.5} parent=1 // pred_check_branch
      %4308 = sbr.rel (0) target = $region25
    $region24: #{sparsenet_forward.5} parent=1 // pred_region
      %4310 = vsyncadd [#allocation3], 0
      %s4312 = sshll.u32 [#allocation2], 4
      %s4313 = int_to_ptr.vmem [resolvable:$true] %s4312
      %s4314 = sshll.u32 %s5, 4
      %s4315 = int_to_ptr.hbm [resolvable:$true] %s4314
      %4317 = dma.vmem_to_hbm [thread:$0]  %s4313, 32, %s4315, [#allocation3]
    $region25: #{sparsenet_forward.5} parent=1 // pred_fallthru
      _
    // Predicated region
    $region26: #{sparsenet_forward.5} parent=1 // pred_check
      _
    $region27: #{sparsenet_forward.5} parent=1 // pred_check_branch
      %4319 = sbr.rel (0) target = $region29
    $region28: #{sparsenet_forward.5} parent=1 // pred_region
      %4321 = dma.done [#allocation3], 32
    $region29: #{sparsenet_forward.5} parent=1 // pred_fallthru
      _
    %4322 = vsyncpa [#allocation3], 1

</llo_original>
